<compile_context>
chip_gen: v6e
topology: v6e:2x2x1
jax: 0.10.0
libtpu: 0.0.40
codegen_flags: <defaults>
</compile_context>

<pallas_src>
import functools

import jax
import jax.numpy as jnp
from jax import lax
from jax.experimental import pallas as pl
from jax.experimental.pallas import tpu as pltpu

BN_EPS = 1e-5
_TARGET_BLOCK_BYTES = 4 * 1024 * 1024   # combined in+out activation block target
_MAX_TN = 8192                          # lane-tile upper bound


# ----------------------------------------------------------------------------
# Kernels
# ----------------------------------------------------------------------------
def _masked(y, *, n_valid, tn, n_inner, needs_mask):
    """Zero padded point columns so BN stats / downstream layers ignore them."""
    if not needs_mask:
        return y
    start = (pl.program_id(1) * n_inner + pl.program_id(2)) * tn
    cols = start + lax.broadcasted_iota(jnp.int32, (1, tn), 1)
    return jnp.where(cols < n_valid, y, 0.0)


def _accum_stats(y, s_ref, ss_ref):
    """Per-(batch, outer-chunk) partial BN stats, resident across inner tiles."""
    @pl.when(pl.program_id(2) == 0)
    def _():
        s_ref[...] = jnp.zeros_like(s_ref)
        ss_ref[...] = jnp.zeros_like(ss_ref)

    s_ref[...] += jnp.sum(y, axis=1, keepdims=True)
    ss_ref[...] += jnp.sum(y * y, axis=1, keepdims=True)


def _first_layer_kernel(x_ref, w_ref, b_ref, y_ref, s_ref, ss_ref, *, mask_cfg):
    """y = W1 @ x + b1 (bf16 MXU, f32 acc); bf16 store; f32 stats."""
    y = jnp.dot(w_ref[...], x_ref[...].astype(jnp.bfloat16),
                preferred_element_type=jnp.float32) + b_ref[...]
    y = _masked(y, **mask_cfg)
    _accum_stats(y, s_ref, ss_ref)
    y_ref[...] = y.astype(y_ref.dtype)


def _mid_layer_kernel(x_ref, scale_ref, shift_ref, w_ref, b_ref,
                      y_ref, s_ref, ss_ref, *, mask_cfg):
    """h = relu(BN_prev(x)) on the fly (f32), then y = W @ h + b; stats."""
    h = jnp.maximum(x_ref[...].astype(jnp.float32) * scale_ref[...]
                    + shift_ref[...], 0.0)
    y = jnp.dot(w_ref[...], h.astype(jnp.bfloat16),
                preferred_element_type=jnp.float32) + b_ref[...]
    y = _masked(y, **mask_cfg)
    _accum_stats(y, s_ref, ss_ref)
    y_ref[...] = y.astype(y_ref.dtype)


def _last_layer_kernel(x_ref, scale_ref, shift_ref, w_ref, b_ref, o_ref):
    """h = relu(BN3(x)); out = tanh(W4 @ h + b4), emitted as 3 dense rows."""
    h = jnp.maximum(x_ref[...].astype(jnp.float32) * scale_ref[...]
                    + shift_ref[...], 0.0)
    y = jnp.dot(w_ref[...], h.astype(jnp.bfloat16),
                preferred_element_type=jnp.float32) + b_ref[...]
    o_ref[...] = jnp.tanh(y)


# ----------------------------------------------------------------------------
# Tiling helpers
# ----------------------------------------------------------------------------
def _pick_tn(n_pad, bytes_per_col, tn_max):
    """Per-layer point-tile: multiple of 128 dividing n_pad, ~4 MiB streamed."""
    if n_pad <= 128:               # full-dim block is always legal
        return n_pad
    tn = max(128, (_TARGET_BLOCK_BYTES // max(bytes_per_col, 1)) // 128 * 128)
    tn = min(tn, _MAX_TN, n_pad)
    if tn_max is not None:
        tn = min(tn, max(128, (tn_max // 128) * 128))
    while n_pad % tn != 0:         # n_pad is a multiple of 128 -> terminates
        tn -= 128
    return tn


def _grid_split(n_tiles):
    """Split point tiles into (outer 'parallel', inner 'arbitrary') for v7x."""
    return (2, n_tiles // 2) if (n_tiles >= 2 and n_tiles % 2 == 0) else (1, n_tiles)


def _vmem_limit(cin, cout, tn, in_bytes, out_bytes):
    """Scoped-VMEM budget derived from the actual block footprint."""
    act = 2 * tn * (cin * in_bytes + cout * out_bytes)   # double-buffered streams
    weights = 2 * cout * cin * 2                         # bf16 resident weight
    misc = 8 * (cin + cout + 8) * 4 + (2 << 20)          # vecs, stats, headroom
    need = act + weights + misc
    return int(min(max(need * 3 // 2, 24 << 20), 48 << 20))


# ----------------------------------------------------------------------------
# Layer wrappers
# ----------------------------------------------------------------------------
def _conv_layer(h, w_bf16, bias, scale, shift, *, n_valid, tn_max=None):
    """One 1x1 conv over NCW activations.

    Returns (y_bf16, sum, sumsq): raw pre-BN activations (B, Cout, N_pad) in
    bf16 plus the global per-channel f32 statistics (Cout, 1) for this
    layer's training-mode BatchNorm.
    """
    B, Cin, N_pad = h.shape
    Cout = w_bf16.shape[0]
    in_bytes = h.dtype.itemsize
    tn = _pick_tn(N_pad, Cin * in_bytes + Cout * 2, tn_max)
    n_tiles = N_pad // tn
    n_outer, n_inner = _grid_split(n_tiles)
    grid = (B, n_outer, n_inner)
    mask_cfg = dict(n_valid=n_valid, tn=tn, n_inner=n_inner,
                    needs_mask=(N_pad != n_valid))

    act_spec = pl.BlockSpec((None, Cin, tn), lambda b, o, j: (b, 0, o * n_inner + j))
    w_spec = pl.BlockSpec((Cout, Cin), lambda b, o, j: (0, 0))        # resident
    bvec_spec = pl.BlockSpec((Cout, 1), lambda b, o, j: (0, 0))       # resident
    vec_spec = pl.BlockSpec((Cin, 1), lambda b, o, j: (0, 0))         # resident
    y_spec = pl.BlockSpec((None, Cout, tn), lambda b, o, j: (b, 0, o * n_inner + j))
    stat_spec = pl.BlockSpec((None, Cout, 1), lambda b, o, j: (b * n_outer + o, 0, 0))

    if scale is None:
        kernel = functools.partial(_first_layer_kernel, mask_cfg=mask_cfg)
        in_specs = [act_spec, w_spec, bvec_spec]
        args = (h, w_bf16, bias)
    else:
        kernel = functools.partial(_mid_layer_kernel, mask_cfg=mask_cfg)
        in_specs = [act_spec, vec_spec, vec_spec, w_spec, bvec_spec]
        args = (h, scale, shift, w_bf16, bias)

    y, s, ss = pl.pallas_call(
        kernel,
        out_shape=(
            jax.ShapeDtypeStruct((B, Cout, N_pad), jnp.bfloat16),
            jax.ShapeDtypeStruct((B * n_outer, Cout, 1), jnp.float32),
            jax.ShapeDtypeStruct((B * n_outer, Cout, 1), jnp.float32),
        ),
        grid=grid,
        in_specs=in_specs,
        out_specs=(y_spec, stat_spec, stat_spec),
        compiler_params=pltpu.CompilerParams(
            dimension_semantics=("parallel", "parallel", "arbitrary"),
            vmem_limit_bytes=_vmem_limit(Cin, Cout, tn, in_bytes, 2),
        ),
    )(*args)
    # Tiny cross-(batch, outer-chunk) combine of partial stats.
    return y, jnp.sum(s, axis=0), jnp.sum(ss, axis=0)


def _final_conv(h, scale, shift, w_bf16, bias, *, tn_max=None):
    B, Cin, N_pad = h.shape
    Cout = w_bf16.shape[0]   # 3
    in_bytes = h.dtype.itemsize
    tn = _pick_tn(N_pad, Cin * in_bytes + Cout * 4, tn_max)
    n_tiles = N_pad // tn
    n_outer, n_inner = _grid_split(n_tiles)
    grid = (B, n_outer, n_inner)

    return pl.pallas_call(
        _last_layer_kernel,
        out_shape=jax.ShapeDtypeStruct((B, Cout, N_pad), jnp.float32),
        grid=grid,
        in_specs=[
            pl.BlockSpec((None, Cin, tn), lambda b, o, j: (b, 0, o * n_inner + j)),
            pl.BlockSpec((Cin, 1), lambda b, o, j: (0, 0)),
            pl.BlockSpec((Cin, 1), lambda b, o, j: (0, 0)),
            pl.BlockSpec((Cout, Cin), lambda b, o, j: (0, 0)),
            pl.BlockSpec((Cout, 1), lambda b, o, j: (0, 0)),
        ],
        out_specs=pl.BlockSpec((None, Cout, tn),
                               lambda b, o, j: (b, 0, o * n_inner + j)),
        compiler_params=pltpu.CompilerParams(
            dimension_semantics=("parallel", "parallel", "parallel"),
            vmem_limit_bytes=_vmem_limit(Cin, Cout, tn, in_bytes, 4),
        ),
    )(h, scale, shift, w_bf16, bias)


def _fold_bn(s, ss, gamma, beta, count):
    """Fold training-mode BN into a per-channel scale/shift (biased variance)."""
    mean = s / count
    var = jnp.maximum(ss / count - mean * mean, 0.0)
    scale = gamma.reshape(-1, 1) * lax.rsqrt(var + BN_EPS)
    shift = beta.reshape(-1, 1) - mean * scale
    return scale, shift


def pointgen_forward(x_ncw, params, tn_max=None):
    """x_ncw: (B, C, N) float32 with C == bottleneck_size.  Returns (B, 3, N)."""
    B, C0, N = x_ncw.shape
    N_pad = N if N <= 128 else pl.cdiv(N, 128) * 128
    x_p = x_ncw if N_pad == N else jnp.pad(x_ncw, ((0, 0), (0, 0), (0, N_pad - N)))
    count = float(B * N)   # padded columns are zeroed in-kernel -> exact stats

    w1 = params["w1"].astype(jnp.bfloat16)
    w2 = params["w2"].astype(jnp.bfloat16)
    w3 = params["w3"].astype(jnp.bfloat16)
    w4 = params["w4"].astype(jnp.bfloat16)
    b1 = params["b1"].reshape(-1, 1)
    b2 = params["b2"].reshape(-1, 1)
    b3 = params["b3"].reshape(-1, 1)
    b4 = params["b4"].reshape(-1, 1)

    y1, s1, ss1 = _conv_layer(x_p, w1, b1, None, None, n_valid=N, tn_max=tn_max)
    sc1, sh1 = _fold_bn(s1, ss1, params["g1"], params["be1"], count)
    y2, s2, ss2 = _conv_layer(y1, w2, b2, sc1, sh1, n_valid=N, tn_max=tn_max)
    sc2, sh2 = _fold_bn(s2, ss2, params["g2"], params["be2"], count)
    y3, s3, ss3 = _conv_layer(y2, w3, b3, sc2, sh2, n_valid=N, tn_max=tn_max)
    sc3, sh3 = _fold_bn(s3, ss3, params["g3"], params["be3"], count)
    out = _final_conv(y3, sc3, sh3, w4, b4, tn_max=tn_max)
    return out if N_pad == N else out[:, :, :N]


# ----------------------------------------------------------------------------
# Params + pure-JAX reference
# ----------------------------------------------------------------------------
def init_params(key, bottleneck_size):
    """Conv1d(Cin, Cout, 1): weight (Cout, Cin), bias (Cout,); BN weight=1, bias=0."""
    c0 = bottleneck_size
    c1 = bottleneck_size
    c2 = bottleneck_size // 2
    c3 = bottleneck_size // 4

    def conv_init(k, cin, cout):
        kw, kb = jax.random.split(k)
        bound = cin ** -0.5
        w = jax.random.uniform(kw, (cout, cin), jnp.float32, -bound, bound)
        b = jax.random.uniform(kb, (cout,), jnp.float32, -bound, bound)
        return w, b

    k1, k2, k3, k4 = jax.random.split(key, 4)
    w1, b1 = conv_init(k1, c0, c1)
    w2, b2 = conv_init(k2, c1, c2)
    w3, b3 = conv_init(k3, c2, c3)
    w4, b4 = conv_init(k4, c3, 3)
    return dict(
        w1=w1, b1=b1, g1=jnp.ones((c1,), jnp.float32), be1=jnp.zeros((c1,), jnp.float32),
        w2=w2, b2=b2, g2=jnp.ones((c2,), jnp.float32), be2=jnp.zeros((c2,), jnp.float32),
        w3=w3, b3=b3, g3=jnp.ones((c3,), jnp.float32), be3=jnp.zeros((c3,), jnp.float32),
        w4=w4, b4=b4,
    )


def _reference_forward(x, params):
    """Module semantics (conv bias kept, training-mode BN, biased variance),
    evaluated with the kernel's numerics: bf16 MXU operands / f32 accumulation
    and bf16 storage of the inter-layer activations (BN stats taken from the
    f32 pre-cast values, exactly like the kernel)."""
    def conv(h, w, b):
        y = jnp.einsum("oc,bcn->bon", w.astype(jnp.bfloat16),
                       h.astype(jnp.bfloat16),
                       preferred_element_type=jnp.float32)
        return y + b.reshape(1, -1, 1)

    def bn_relu(y, g, be):
        mean = jnp.mean(y, axis=(0, 2), keepdims=True)
        var = jnp.mean(y * y, axis=(0, 2), keepdims=True) - mean * mean
        y_q = y.astype(jnp.bfloat16).astype(jnp.float32)   # mirrors bf16 storage
        yhat = (y_q - mean) * lax.rsqrt(var + BN_EPS)
        return jnp.maximum(yhat * g.reshape(1, -1, 1) + be.reshape(1, -1, 1), 0.0)

    h = bn_relu(conv(x, params["w1"], params["b1"]), params["g1"], params["be1"])
    h = bn_relu(conv(h, params["w2"], params["b2"]), params["g2"], params["be2"])
    h = bn_relu(conv(h, params["w3"], params["b3"]), params["g3"], params["be3"])
    return jnp.tanh(conv(h, params["w4"], params["b4"]))


if __name__ == "__main__":
    bottleneck_size = 256
    key = jax.random.PRNGKey(0)
    kx1, kx2, kx3, kp = jax.random.split(key, 4)
    params = init_params(kp, bottleneck_size)
    fwd = jax.jit(pointgen_forward, static_argnames=("tn_max",))

    cases = [
        # (x, tn_max):
        #  1) small module-consistent shape, single full-N tile per layer
        (jax.random.normal(kx1, (2, bottleneck_size, 16), jnp.float32), None),
        #  2) forced 128-point tiles: exercises the outer 'parallel' split and
        #     stat accumulation along the 'arbitrary' inner axis
        (jax.random.normal(kx2, (2, bottleneck_size, 512), jnp.float32), 128),
        #  3) N not a multiple of 128: exercises padding + in-kernel masking
        (jax.random.normal(kx3, (1, bottleneck_size, 600), jnp.float32), 128),
    ]
    for x, tn_max in cases:
        out = jax.block_until_ready(fwd(x, params, tn_max=tn_max))
        ref = _reference_forward(x, params)
        assert out.shape == (x.shape[0], 3, x.shape[2]), out.shape
        max_diff = float(jnp.max(jnp.abs(out - ref)))
        assert jnp.allclose(out, ref, atol=1e-2, rtol=1e-2), (
            "mismatch vs reference, max|diff|=%e" % max_diff)

    print("KERNEL_OK")
</pallas_src>

<mosaic_0001>
module attributes {stable_mosaic.version = 11 : i64} {
  func.func @_first_layer_kernel(%arg0: i32, %arg1: i32, %arg2: i32, %arg3: memref<1x256x16xf32, #tpu.memory_space<vmem>>, %arg4: memref<256x256xbf16, #tpu.memory_space<vmem>>, %arg5: memref<256x1xf32, #tpu.memory_space<vmem>>, %arg6: memref<1x256x16xbf16, #tpu.memory_space<vmem>>, %arg7: memref<1x256x1xf32, #tpu.memory_space<vmem>>, %arg8: memref<1x256x1xf32, #tpu.memory_space<vmem>>) attributes {dimension_semantics = [#tpu.dimension_semantics<parallel>, #tpu.dimension_semantics<parallel>, #tpu.dimension_semantics<arbitrary>], iteration_bounds = array<i64: 2, 1, 1>, scalar_prefetch = 0 : i64, scratch_operands = 0 : i64, tpu.core_type = #tpu.core_type<tc>, window_params = [{transform_indices = @transform_0, window_bounds = array<i64: 1, 256, 16>}, {pipeline_mode = #tpu.pipeline_mode<synchronous>, transform_indices = @transform_1, window_bounds = array<i64: 256, 256>}, {pipeline_mode = #tpu.pipeline_mode<synchronous>, transform_indices = @transform_2, window_bounds = array<i64: 256, 1>}, {transform_indices = @transform_3, window_bounds = array<i64: 1, 256, 16>}, {transform_indices = @transform_4, window_bounds = array<i64: 1, 256, 1>}, {transform_indices = @transform_5, window_bounds = array<i64: 1, 256, 1>}]} {
    %c0 = arith.constant 0 : index
    %c0_0 = arith.constant 0 : index
    %0 = vector.load %arg4[%c0, %c0_0] : memref<256x256xbf16, #tpu.memory_space<vmem>>, vector<256x256xbf16>
    %c0_1 = arith.constant 0 : index
    %c0_2 = arith.constant 0 : index
    %c0_3 = arith.constant 0 : index
    %1 = vector.load %arg3[%c0_1, %c0_2, %c0_3] : memref<1x256x16xf32, #tpu.memory_space<vmem>>, vector<1x256x16xf32>
    %2 = vector.shape_cast %1 : vector<1x256x16xf32> to vector<256x16xf32>
    %3 = arith.truncf %2 : vector<256x16xf32> to vector<256x16xbf16>
    %cst = arith.constant dense<0.000000e+00> : vector<256x16xf32>
    %4 = tpu.matmul %0, %3, %cst {dimension_numbers = #tpu.dot_dimension_numbers<[1], [0], [0], [1], [0, 0, 1, 1], [], []>} : vector<256x256xbf16>, vector<256x16xbf16>, vector<256x16xf32> -> vector<256x16xf32>
    %c0_4 = arith.constant 0 : index
    %c0_5 = arith.constant 0 : index
    %5 = vector.load %arg5[%c0_4, %c0_5] : memref<256x1xf32, #tpu.memory_space<vmem>>, vector<256x1xf32>
    %6 = vector.broadcast %5 : vector<256x1xf32> to vector<256x16xf32>
    %7 = arith.addf %4, %6 : vector<256x16xf32>
    %c0_i32 = arith.constant 0 : i32
    %8 = arith.cmpi eq, %arg2, %c0_i32 : i32
    %9 = arith.extui %8 : i1 to i32
    %c0_i32_6 = arith.constant 0 : i32
    %10 = arith.cmpi ne, %9, %c0_i32_6 : i32
    scf.if %10 {
      %cst_24 = arith.constant 0.000000e+00 : f32
      %32 = vector.broadcast %cst_24 : f32 to vector<256x1xf32>
      %c0_25 = arith.constant 0 : index
      %c0_26 = arith.constant 0 : index
      %c0_27 = arith.constant 0 : index
      %33 = vector.load %arg7[%c0_25, %c0_26, %c0_27] : memref<1x256x1xf32, #tpu.memory_space<vmem>>, vector<1x256x1xf32>
      %34 = vector.shape_cast %33 : vector<1x256x1xf32> to vector<256x1xf32>
      %35 = vector.shape_cast %32 : vector<256x1xf32> to vector<1x256x1xf32>
      tpu.vector_store %arg7[%c0_25, %c0_26, %c0_27], %35 {strides = array<i32>} : memref<1x256x1xf32, #tpu.memory_space<vmem>>, vector<1x256x1xf32>,
      %cst_28 = arith.constant 0.000000e+00 : f32
      %36 = vector.broadcast %cst_28 : f32 to vector<256x1xf32>
      %c0_29 = arith.constant 0 : index
      %c0_30 = arith.constant 0 : index
      %c0_31 = arith.constant 0 : index
      %37 = vector.load %arg8[%c0_29, %c0_30, %c0_31] : memref<1x256x1xf32, #tpu.memory_space<vmem>>, vector<1x256x1xf32>
      %38 = vector.shape_cast %37 : vector<1x256x1xf32> to vector<256x1xf32>
      %39 = vector.shape_cast %36 : vector<256x1xf32> to vector<1x256x1xf32>
      tpu.vector_store %arg8[%c0_29, %c0_30, %c0_31], %39 {strides = array<i32>} : memref<1x256x1xf32, #tpu.memory_space<vmem>>, vector<1x256x1xf32>,
    } else {
    }
    %c0_7 = arith.constant 0 : index
    %c0_8 = arith.constant 0 : index
    %c0_9 = arith.constant 0 : index
    %11 = vector.load %arg7[%c0_7, %c0_8, %c0_9] : memref<1x256x1xf32, #tpu.memory_space<vmem>>, vector<1x256x1xf32>
    %12 = vector.shape_cast %11 : vector<1x256x1xf32> to vector<256x1xf32>
    %cst_10 = arith.constant dense<0.000000e+00> : vector<256xf32>
    %13 = vector.multi_reduction <add>, %7, %cst_10 [1] : vector<256x16xf32> to vector<256xf32>
    %14 = vector.shape_cast %13 : vector<256xf32> to vector<256x1xf32>
    %15 = arith.addf %12, %14 : vector<256x1xf32>
    %c0_11 = arith.constant 0 : index
    %c0_12 = arith.constant 0 : index
    %c0_13 = arith.constant 0 : index
    %16 = vector.load %arg7[%c0_11, %c0_12, %c0_13] : memref<1x256x1xf32, #tpu.memory_space<vmem>>, vector<1x256x1xf32>
    %17 = vector.shape_cast %16 : vector<1x256x1xf32> to vector<256x1xf32>
    %18 = vector.shape_cast %15 : vector<256x1xf32> to vector<1x256x1xf32>
    tpu.vector_store %arg7[%c0_11, %c0_12, %c0_13], %18 {strides = array<i32>} : memref<1x256x1xf32, #tpu.memory_space<vmem>>, vector<1x256x1xf32>,
    %c0_14 = arith.constant 0 : index
    %c0_15 = arith.constant 0 : index
    %c0_16 = arith.constant 0 : index
    %19 = vector.load %arg8[%c0_14, %c0_15, %c0_16] : memref<1x256x1xf32, #tpu.memory_space<vmem>>, vector<1x256x1xf32>
    %20 = vector.shape_cast %19 : vector<1x256x1xf32> to vector<256x1xf32>
    %21 = arith.mulf %7, %7 : vector<256x16xf32>
    %cst_17 = arith.constant dense<0.000000e+00> : vector<256xf32>
    %22 = vector.multi_reduction <add>, %21, %cst_17 [1] : vector<256x16xf32> to vector<256xf32>
    %23 = vector.shape_cast %22 : vector<256xf32> to vector<256x1xf32>
    %24 = arith.addf %20, %23 : vector<256x1xf32>
    %c0_18 = arith.constant 0 : index
    %c0_19 = arith.constant 0 : index
    %c0_20 = arith.constant 0 : index
    %25 = vector.load %arg8[%c0_18, %c0_19, %c0_20] : memref<1x256x1xf32, #tpu.memory_space<vmem>>, vector<1x256x1xf32>
    %26 = vector.shape_cast %25 : vector<1x256x1xf32> to vector<256x1xf32>
    %27 = vector.shape_cast %24 : vector<256x1xf32> to vector<1x256x1xf32>
    tpu.vector_store %arg8[%c0_18, %c0_19, %c0_20], %27 {strides = array<i32>} : memref<1x256x1xf32, #tpu.memory_space<vmem>>, vector<1x256x1xf32>,
    %28 = arith.truncf %7 : vector<256x16xf32> to vector<256x16xbf16>
    %c0_21 = arith.constant 0 : index
    %c0_22 = arith.constant 0 : index
    %c0_23 = arith.constant 0 : index
    %29 = vector.load %arg6[%c0_21, %c0_22, %c0_23] : memref<1x256x16xbf16, #tpu.memory_space<vmem>>, vector<1x256x16xbf16>
    %30 = vector.shape_cast %29 : vector<1x256x16xbf16> to vector<256x16xbf16>
    %31 = vector.shape_cast %28 : vector<256x16xbf16> to vector<1x256x16xbf16>
    tpu.vector_store %arg6[%c0_21, %c0_22, %c0_23], %31 {strides = array<i32>} : memref<1x256x16xbf16, #tpu.memory_space<vmem>>, vector<1x256x16xbf16>,
    return
  }
  func.func @transform_0(%arg0: i32, %arg1: i32, %arg2: i32) -> (i32, i32, i32) {
    %c1_i32 = arith.constant 1 : i32
    %0 = arith.muli %arg1, %c1_i32 : i32
    %1 = arith.addi %0, %arg2 : i32
    %c0_i32 = arith.constant 0 : i32
    %c0_i32_0 = arith.constant 0 : i32
    return %arg0, %c0_i32, %1 : i32, i32, i32
  }
  func.func @transform_1(%arg0: i32, %arg1: i32, %arg2: i32) -> (i32, i32) {
    %c0_i32 = arith.constant 0 : i32
    %c0_i32_0 = arith.constant 0 : i32
    %c0_i32_1 = arith.constant 0 : i32
    return %c0_i32, %c0_i32_0 : i32, i32
  }
  func.func @transform_2(%arg0: i32, %arg1: i32, %arg2: i32) -> (i32, i32) {
    %c0_i32 = arith.constant 0 : i32
    %c0_i32_0 = arith.constant 0 : i32
    %c0_i32_1 = arith.constant 0 : i32
    return %c0_i32, %c0_i32_0 : i32, i32
  }
  func.func @transform_3(%arg0: i32, %arg1: i32, %arg2: i32) -> (i32, i32, i32) {
    %c1_i32 = arith.constant 1 : i32
    %0 = arith.muli %arg1, %c1_i32 : i32
    %1 = arith.addi %0, %arg2 : i32
    %c0_i32 = arith.constant 0 : i32
    %c0_i32_0 = arith.constant 0 : i32
    return %arg0, %c0_i32, %1 : i32, i32, i32
  }
  func.func @transform_4(%arg0: i32, %arg1: i32, %arg2: i32) -> (i32, i32, i32) {
    %c1_i32 = arith.constant 1 : i32
    %0 = arith.muli %arg0, %c1_i32 : i32
    %1 = arith.addi %0, %arg1 : i32
    %c0_i32 = arith.constant 0 : i32
    %c0_i32_0 = arith.constant 0 : i32
    %c0_i32_1 = arith.constant 0 : i32
    return %1, %c0_i32, %c0_i32_0 : i32, i32, i32
  }
  func.func @transform_5(%arg0: i32, %arg1: i32, %arg2: i32) -> (i32, i32, i32) {
    %c1_i32 = arith.constant 1 : i32
    %0 = arith.muli %arg0, %c1_i32 : i32
    %1 = arith.addi %0, %arg1 : i32
    %c0_i32 = arith.constant 0 : i32
    %c0_i32_0 = arith.constant 0 : i32
    %c0_i32_1 = arith.constant 0 : i32
    return %1, %c0_i32, %c0_i32_0 : i32, i32, i32
  }
}

module attributes {stable_mosaic.version = 11 : i64} {
  func.func @_mid_layer_kernel(%arg0: i32, %arg1: i32, %arg2: i32, %arg3: memref<1x256x16xbf16, #tpu.memory_space<vmem>>, %arg4: memref<256x1xf32, #tpu.memory_space<vmem>>, %arg5: memref<256x1xf32, #tpu.memory_space<vmem>>, %arg6: memref<128x256xbf16, #tpu.memory_space<vmem>>, %arg7: memref<128x1xf32, #tpu.memory_space<vmem>>, %arg8: memref<1x128x16xbf16, #tpu.memory_space<vmem>>, %arg9: memref<1x128x1xf32, #tpu.memory_space<vmem>>, %arg10: memref<1x128x1xf32, #tpu.memory_space<vmem>>) attributes {dimension_semantics = [#tpu.dimension_semantics<parallel>, #tpu.dimension_semantics<parallel>, #tpu.dimension_semantics<arbitrary>], iteration_bounds = array<i64: 2, 1, 1>, scalar_prefetch = 0 : i64, scratch_operands = 0 : i64, tpu.core_type = #tpu.core_type<tc>, window_params = [{transform_indices = @transform_0, window_bounds = array<i64: 1, 256, 16>}, {pipeline_mode = #tpu.pipeline_mode<synchronous>, transform_indices = @transform_1, window_bounds = array<i64: 256, 1>}, {pipeline_mode = #tpu.pipeline_mode<synchronous>, transform_indices = @transform_2, window_bounds = array<i64: 256, 1>}, {pipeline_mode = #tpu.pipeline_mode<synchronous>, transform_indices = @transform_3, window_bounds = array<i64: 128, 256>}, {pipeline_mode = #tpu.pipeline_mode<synchronous>, transform_indices = @transform_4, window_bounds = array<i64: 128, 1>}, {transform_indices = @transform_5, window_bounds = array<i64: 1, 128, 16>}, {transform_indices = @transform_6, window_bounds = array<i64: 1, 128, 1>}, {transform_indices = @transform_7, window_bounds = array<i64: 1, 128, 1>}]} {
    %c0 = arith.constant 0 : index
    %c0_0 = arith.constant 0 : index
    %c0_1 = arith.constant 0 : index
    %0 = vector.load %arg3[%c0, %c0_0, %c0_1] : memref<1x256x16xbf16, #tpu.memory_space<vmem>>, vector<1x256x16xbf16>
    %1 = vector.shape_cast %0 : vector<1x256x16xbf16> to vector<256x16xbf16>
    %2 = arith.extf %1 : vector<256x16xbf16> to vector<256x16xf32>
    %c0_2 = arith.constant 0 : index
    %c0_3 = arith.constant 0 : index
    %3 = vector.load %arg4[%c0_2, %c0_3] : memref<256x1xf32, #tpu.memory_space<vmem>>, vector<256x1xf32>
    %4 = vector.broadcast %3 : vector<256x1xf32> to vector<256x16xf32>
    %5 = arith.mulf %2, %4 : vector<256x16xf32>
    %c0_4 = arith.constant 0 : index
    %c0_5 = arith.constant 0 : index
    %6 = vector.load %arg5[%c0_4, %c0_5] : memref<256x1xf32, #tpu.memory_space<vmem>>, vector<256x1xf32>
    %7 = vector.broadcast %6 : vector<256x1xf32> to vector<256x16xf32>
    %8 = arith.addf %5, %7 : vector<256x16xf32>
    %cst = arith.constant 0.000000e+00 : f32
    %9 = vector.broadcast %cst : f32 to vector<256x16xf32>
    %10 = arith.maximumf %8, %9 : vector<256x16xf32>
    %c0_6 = arith.constant 0 : index
    %c0_7 = arith.constant 0 : index
    %11 = vector.load %arg6[%c0_6, %c0_7] : memref<128x256xbf16, #tpu.memory_space<vmem>>, vector<128x256xbf16>
    %12 = arith.truncf %10 : vector<256x16xf32> to vector<256x16xbf16>
    %cst_8 = arith.constant dense<0.000000e+00> : vector<128x16xf32>
    %13 = tpu.matmul %11, %12, %cst_8 {dimension_numbers = #tpu.dot_dimension_numbers<[1], [0], [0], [1], [0, 0, 1, 1], [], []>} : vector<128x256xbf16>, vector<256x16xbf16>, vector<128x16xf32> -> vector<128x16xf32>
    %c0_9 = arith.constant 0 : index
    %c0_10 = arith.constant 0 : index
    %14 = vector.load %arg7[%c0_9, %c0_10] : memref<128x1xf32, #tpu.memory_space<vmem>>, vector<128x1xf32>
    %15 = vector.broadcast %14 : vector<128x1xf32> to vector<128x16xf32>
    %16 = arith.addf %13, %15 : vector<128x16xf32>
    %c0_i32 = arith.constant 0 : i32
    %17 = arith.cmpi eq, %arg2, %c0_i32 : i32
    %18 = arith.extui %17 : i1 to i32
    %c0_i32_11 = arith.constant 0 : i32
    %19 = arith.cmpi ne, %18, %c0_i32_11 : i32
    scf.if %19 {
      %cst_29 = arith.constant 0.000000e+00 : f32
      %41 = vector.broadcast %cst_29 : f32 to vector<128x1xf32>
      %c0_30 = arith.constant 0 : index
      %c0_31 = arith.constant 0 : index
      %c0_32 = arith.constant 0 : index
      %42 = vector.load %arg9[%c0_30, %c0_31, %c0_32] : memref<1x128x1xf32, #tpu.memory_space<vmem>>, vector<1x128x1xf32>
      %43 = vector.shape_cast %42 : vector<1x128x1xf32> to vector<128x1xf32>
      %44 = vector.shape_cast %41 : vector<128x1xf32> to vector<1x128x1xf32>
      tpu.vector_store %arg9[%c0_30, %c0_31, %c0_32], %44 {strides = array<i32>} : memref<1x128x1xf32, #tpu.memory_space<vmem>>, vector<1x128x1xf32>,
      %cst_33 = arith.constant 0.000000e+00 : f32
      %45 = vector.broadcast %cst_33 : f32 to vector<128x1xf32>
      %c0_34 = arith.constant 0 : index
      %c0_35 = arith.constant 0 : index
      %c0_36 = arith.constant 0 : index
      %46 = vector.load %arg10[%c0_34, %c0_35, %c0_36] : memref<1x128x1xf32, #tpu.memory_space<vmem>>, vector<1x128x1xf32>
      %47 = vector.shape_cast %46 : vector<1x128x1xf32> to vector<128x1xf32>
      %48 = vector.shape_cast %45 : vector<128x1xf32> to vector<1x128x1xf32>
      tpu.vector_store %arg10[%c0_34, %c0_35, %c0_36], %48 {strides = array<i32>} : memref<1x128x1xf32, #tpu.memory_space<vmem>>, vector<1x128x1xf32>,
    } else {
    }
    %c0_12 = arith.constant 0 : index
    %c0_13 = arith.constant 0 : index
    %c0_14 = arith.constant 0 : index
    %20 = vector.load %arg9[%c0_12, %c0_13, %c0_14] : memref<1x128x1xf32, #tpu.memory_space<vmem>>, vector<1x128x1xf32>
    %21 = vector.shape_cast %20 : vector<1x128x1xf32> to vector<128x1xf32>
    %cst_15 = arith.constant dense<0.000000e+00> : vector<128xf32>
    %22 = vector.multi_reduction <add>, %16, %cst_15 [1] : vector<128x16xf32> to vector<128xf32>
    %23 = vector.shape_cast %22 : vector<128xf32> to vector<128x1xf32>
    %24 = arith.addf %21, %23 : vector<128x1xf32>
    %c0_16 = arith.constant 0 : index
    %c0_17 = arith.constant 0 : index
    %c0_18 = arith.constant 0 : index
    %25 = vector.load %arg9[%c0_16, %c0_17, %c0_18] : memref<1x128x1xf32, #tpu.memory_space<vmem>>, vector<1x128x1xf32>
    %26 = vector.shape_cast %25 : vector<1x128x1xf32> to vector<128x1xf32>
    %27 = vector.shape_cast %24 : vector<128x1xf32> to vector<1x128x1xf32>
    tpu.vector_store %arg9[%c0_16, %c0_17, %c0_18], %27 {strides = array<i32>} : memref<1x128x1xf32, #tpu.memory_space<vmem>>, vector<1x128x1xf32>,
    %c0_19 = arith.constant 0 : index
    %c0_20 = arith.constant 0 : index
    %c0_21 = arith.constant 0 : index
    %28 = vector.load %arg10[%c0_19, %c0_20, %c0_21] : memref<1x128x1xf32, #tpu.memory_space<vmem>>, vector<1x128x1xf32>
    %29 = vector.shape_cast %28 : vector<1x128x1xf32> to vector<128x1xf32>
    %30 = arith.mulf %16, %16 : vector<128x16xf32>
    %cst_22 = arith.constant dense<0.000000e+00> : vector<128xf32>
    %31 = vector.multi_reduction <add>, %30, %cst_22 [1] : vector<128x16xf32> to vector<128xf32>
    %32 = vector.shape_cast %31 : vector<128xf32> to vector<128x1xf32>
    %33 = arith.addf %29, %32 : vector<128x1xf32>
    %c0_23 = arith.constant 0 : index
    %c0_24 = arith.constant 0 : index
    %c0_25 = arith.constant 0 : index
    %34 = vector.load %arg10[%c0_23, %c0_24, %c0_25] : memref<1x128x1xf32, #tpu.memory_space<vmem>>, vector<1x128x1xf32>
    %35 = vector.shape_cast %34 : vector<1x128x1xf32> to vector<128x1xf32>
    %36 = vector.shape_cast %33 : vector<128x1xf32> to vector<1x128x1xf32>
    tpu.vector_store %arg10[%c0_23, %c0_24, %c0_25], %36 {strides = array<i32>} : memref<1x128x1xf32, #tpu.memory_space<vmem>>, vector<1x128x1xf32>,
    %37 = arith.truncf %16 : vector<128x16xf32> to vector<128x16xbf16>
    %c0_26 = arith.constant 0 : index
    %c0_27 = arith.constant 0 : index
    %c0_28 = arith.constant 0 : index
    %38 = vector.load %arg8[%c0_26, %c0_27, %c0_28] : memref<1x128x16xbf16, #tpu.memory_space<vmem>>, vector<1x128x16xbf16>
    %39 = vector.shape_cast %38 : vector<1x128x16xbf16> to vector<128x16xbf16>
    %40 = vector.shape_cast %37 : vector<128x16xbf16> to vector<1x128x16xbf16>
    tpu.vector_store %arg8[%c0_26, %c0_27, %c0_28], %40 {strides = array<i32>} : memref<1x128x16xbf16, #tpu.memory_space<vmem>>, vector<1x128x16xbf16>,
    return
  }
  func.func @transform_0(%arg0: i32, %arg1: i32, %arg2: i32) -> (i32, i32, i32) {
    %c1_i32 = arith.constant 1 : i32
    %0 = arith.muli %arg1, %c1_i32 : i32
    %1 = arith.addi %0, %arg2 : i32
    %c0_i32 = arith.constant 0 : i32
    %c0_i32_0 = arith.constant 0 : i32
    return %arg0, %c0_i32, %1 : i32, i32, i32
  }
  func.func @transform_1(%arg0: i32, %arg1: i32, %arg2: i32) -> (i32, i32) {
    %c0_i32 = arith.constant 0 : i32
    %c0_i32_0 = arith.constant 0 : i32
    %c0_i32_1 = arith.constant 0 : i32
    return %c0_i32, %c0_i32_0 : i32, i32
  }
  func.func @transform_2(%arg0: i32, %arg1: i32, %arg2: i32) -> (i32, i32) {
    %c0_i32 = arith.constant 0 : i32
    %c0_i32_0 = arith.constant 0 : i32
    %c0_i32_1 = arith.constant 0 : i32
    return %c0_i32, %c0_i32_0 : i32, i32
  }
  func.func @transform_3(%arg0: i32, %arg1: i32, %arg2: i32) -> (i32, i32) {
    %c0_i32 = arith.constant 0 : i32
    %c0_i32_0 = arith.constant 0 : i32
    %c0_i32_1 = arith.constant 0 : i32
    return %c0_i32, %c0_i32_0 : i32, i32
  }
  func.func @transform_4(%arg0: i32, %arg1: i32, %arg2: i32) -> (i32, i32) {
    %c0_i32 = arith.constant 0 : i32
    %c0_i32_0 = arith.constant 0 : i32
    %c0_i32_1 = arith.constant 0 : i32
    return %c0_i32, %c0_i32_0 : i32, i32
  }
  func.func @transform_5(%arg0: i32, %arg1: i32, %arg2: i32) -> (i32, i32, i32) {
    %c1_i32 = arith.constant 1 : i32
    %0 = arith.muli %arg1, %c1_i32 : i32
    %1 = arith.addi %0, %arg2 : i32
    %c0_i32 = arith.constant 0 : i32
    %c0_i32_0 = arith.constant 0 : i32
    return %arg0, %c0_i32, %1 : i32, i32, i32
  }
  func.func @transform_6(%arg0: i32, %arg1: i32, %arg2: i32) -> (i32, i32, i32) {
    %c1_i32 = arith.constant 1 : i32
    %0 = arith.muli %arg0, %c1_i32 : i32
    %1 = arith.addi %0, %arg1 : i32
    %c0_i32 = arith.constant 0 : i32
    %c0_i32_0 = arith.constant 0 : i32
    %c0_i32_1 = arith.constant 0 : i32
    return %1, %c0_i32, %c0_i32_0 : i32, i32, i32
  }
  func.func @transform_7(%arg0: i32, %arg1: i32, %arg2: i32) -> (i32, i32, i32) {
    %c1_i32 = arith.constant 1 : i32
    %0 = arith.muli %arg0, %c1_i32 : i32
    %1 = arith.addi %0, %arg1 : i32
    %c0_i32 = arith.constant 0 : i32
    %c0_i32_0 = arith.constant 0 : i32
    %c0_i32_1 = arith.constant 0 : i32
    return %1, %c0_i32, %c0_i32_0 : i32, i32, i32
  }
}

module attributes {stable_mosaic.version = 11 : i64} {
  func.func @_mid_layer_kernel(%arg0: i32, %arg1: i32, %arg2: i32, %arg3: memref<1x128x16xbf16, #tpu.memory_space<vmem>>, %arg4: memref<128x1xf32, #tpu.memory_space<vmem>>, %arg5: memref<128x1xf32, #tpu.memory_space<vmem>>, %arg6: memref<64x128xbf16, #tpu.memory_space<vmem>>, %arg7: memref<64x1xf32, #tpu.memory_space<vmem>>, %arg8: memref<1x64x16xbf16, #tpu.memory_space<vmem>>, %arg9: memref<1x64x1xf32, #tpu.memory_space<vmem>>, %arg10: memref<1x64x1xf32, #tpu.memory_space<vmem>>) attributes {dimension_semantics = [#tpu.dimension_semantics<parallel>, #tpu.dimension_semantics<parallel>, #tpu.dimension_semantics<arbitrary>], iteration_bounds = array<i64: 2, 1, 1>, scalar_prefetch = 0 : i64, scratch_operands = 0 : i64, tpu.core_type = #tpu.core_type<tc>, window_params = [{transform_indices = @transform_0, window_bounds = array<i64: 1, 128, 16>}, {pipeline_mode = #tpu.pipeline_mode<synchronous>, transform_indices = @transform_1, window_bounds = array<i64: 128, 1>}, {pipeline_mode = #tpu.pipeline_mode<synchronous>, transform_indices = @transform_2, window_bounds = array<i64: 128, 1>}, {pipeline_mode = #tpu.pipeline_mode<synchronous>, transform_indices = @transform_3, window_bounds = array<i64: 64, 128>}, {pipeline_mode = #tpu.pipeline_mode<synchronous>, transform_indices = @transform_4, window_bounds = array<i64: 64, 1>}, {transform_indices = @transform_5, window_bounds = array<i64: 1, 64, 16>}, {transform_indices = @transform_6, window_bounds = array<i64: 1, 64, 1>}, {transform_indices = @transform_7, window_bounds = array<i64: 1, 64, 1>}]} {
    %c0 = arith.constant 0 : index
    %c0_0 = arith.constant 0 : index
    %c0_1 = arith.constant 0 : index
    %0 = vector.load %arg3[%c0, %c0_0, %c0_1] : memref<1x128x16xbf16, #tpu.memory_space<vmem>>, vector<1x128x16xbf16>
    %1 = vector.shape_cast %0 : vector<1x128x16xbf16> to vector<128x16xbf16>
    %2 = arith.extf %1 : vector<128x16xbf16> to vector<128x16xf32>
    %c0_2 = arith.constant 0 : index
    %c0_3 = arith.constant 0 : index
    %3 = vector.load %arg4[%c0_2, %c0_3] : memref<128x1xf32, #tpu.memory_space<vmem>>, vector<128x1xf32>
    %4 = vector.broadcast %3 : vector<128x1xf32> to vector<128x16xf32>
    %5 = arith.mulf %2, %4 : vector<128x16xf32>
    %c0_4 = arith.constant 0 : index
    %c0_5 = arith.constant 0 : index
    %6 = vector.load %arg5[%c0_4, %c0_5] : memref<128x1xf32, #tpu.memory_space<vmem>>, vector<128x1xf32>
    %7 = vector.broadcast %6 : vector<128x1xf32> to vector<128x16xf32>
    %8 = arith.addf %5, %7 : vector<128x16xf32>
    %cst = arith.constant 0.000000e+00 : f32
    %9 = vector.broadcast %cst : f32 to vector<128x16xf32>
    %10 = arith.maximumf %8, %9 : vector<128x16xf32>
    %c0_6 = arith.constant 0 : index
    %c0_7 = arith.constant 0 : index
    %11 = vector.load %arg6[%c0_6, %c0_7] : memref<64x128xbf16, #tpu.memory_space<vmem>>, vector<64x128xbf16>
    %12 = arith.truncf %10 : vector<128x16xf32> to vector<128x16xbf16>
    %cst_8 = arith.constant dense<0.000000e+00> : vector<64x16xf32>
    %13 = tpu.matmul %11, %12, %cst_8 {dimension_numbers = #tpu.dot_dimension_numbers<[1], [0], [0], [1], [0, 0, 1, 1], [], []>} : vector<64x128xbf16>, vector<128x16xbf16>, vector<64x16xf32> -> vector<64x16xf32>
    %c0_9 = arith.constant 0 : index
    %c0_10 = arith.constant 0 : index
    %14 = vector.load %arg7[%c0_9, %c0_10] : memref<64x1xf32, #tpu.memory_space<vmem>>, vector<64x1xf32>
    %15 = vector.broadcast %14 : vector<64x1xf32> to vector<64x16xf32>
    %16 = arith.addf %13, %15 : vector<64x16xf32>
    %c0_i32 = arith.constant 0 : i32
    %17 = arith.cmpi eq, %arg2, %c0_i32 : i32
    %18 = arith.extui %17 : i1 to i32
    %c0_i32_11 = arith.constant 0 : i32
    %19 = arith.cmpi ne, %18, %c0_i32_11 : i32
    scf.if %19 {
      %cst_29 = arith.constant 0.000000e+00 : f32
      %41 = vector.broadcast %cst_29 : f32 to vector<64x1xf32>
      %c0_30 = arith.constant 0 : index
      %c0_31 = arith.constant 0 : index
      %c0_32 = arith.constant 0 : index
      %42 = vector.load %arg9[%c0_30, %c0_31, %c0_32] : memref<1x64x1xf32, #tpu.memory_space<vmem>>, vector<1x64x1xf32>
      %43 = vector.shape_cast %42 : vector<1x64x1xf32> to vector<64x1xf32>
      %44 = vector.shape_cast %41 : vector<64x1xf32> to vector<1x64x1xf32>
      tpu.vector_store %arg9[%c0_30, %c0_31, %c0_32], %44 {strides = array<i32>} : memref<1x64x1xf32, #tpu.memory_space<vmem>>, vector<1x64x1xf32>,
      %cst_33 = arith.constant 0.000000e+00 : f32
      %45 = vector.broadcast %cst_33 : f32 to vector<64x1xf32>
      %c0_34 = arith.constant 0 : index
      %c0_35 = arith.constant 0 : index
      %c0_36 = arith.constant 0 : index
      %46 = vector.load %arg10[%c0_34, %c0_35, %c0_36] : memref<1x64x1xf32, #tpu.memory_space<vmem>>, vector<1x64x1xf32>
      %47 = vector.shape_cast %46 : vector<1x64x1xf32> to vector<64x1xf32>
      %48 = vector.shape_cast %45 : vector<64x1xf32> to vector<1x64x1xf32>
      tpu.vector_store %arg10[%c0_34, %c0_35, %c0_36], %48 {strides = array<i32>} : memref<1x64x1xf32, #tpu.memory_space<vmem>>, vector<1x64x1xf32>,
    } else {
    }
    %c0_12 = arith.constant 0 : index
    %c0_13 = arith.constant 0 : index
    %c0_14 = arith.constant 0 : index
    %20 = vector.load %arg9[%c0_12, %c0_13, %c0_14] : memref<1x64x1xf32, #tpu.memory_space<vmem>>, vector<1x64x1xf32>
    %21 = vector.shape_cast %20 : vector<1x64x1xf32> to vector<64x1xf32>
    %cst_15 = arith.constant dense<0.000000e+00> : vector<64xf32>
    %22 = vector.multi_reduction <add>, %16, %cst_15 [1] : vector<64x16xf32> to vector<64xf32>
    %23 = vector.shape_cast %22 : vector<64xf32> to vector<64x1xf32>
    %24 = arith.addf %21, %23 : vector<64x1xf32>
    %c0_16 = arith.constant 0 : index
    %c0_17 = arith.constant 0 : index
    %c0_18 = arith.constant 0 : index
    %25 = vector.load %arg9[%c0_16, %c0_17, %c0_18] : memref<1x64x1xf32, #tpu.memory_space<vmem>>, vector<1x64x1xf32>
    %26 = vector.shape_cast %25 : vector<1x64x1xf32> to vector<64x1xf32>
    %27 = vector.shape_cast %24 : vector<64x1xf32> to vector<1x64x1xf32>
    tpu.vector_store %arg9[%c0_16, %c0_17, %c0_18], %27 {strides = array<i32>} : memref<1x64x1xf32, #tpu.memory_space<vmem>>, vector<1x64x1xf32>,
    %c0_19 = arith.constant 0 : index
    %c0_20 = arith.constant 0 : index
    %c0_21 = arith.constant 0 : index
    %28 = vector.load %arg10[%c0_19, %c0_20, %c0_21] : memref<1x64x1xf32, #tpu.memory_space<vmem>>, vector<1x64x1xf32>
    %29 = vector.shape_cast %28 : vector<1x64x1xf32> to vector<64x1xf32>
    %30 = arith.mulf %16, %16 : vector<64x16xf32>
    %cst_22 = arith.constant dense<0.000000e+00> : vector<64xf32>
    %31 = vector.multi_reduction <add>, %30, %cst_22 [1] : vector<64x16xf32> to vector<64xf32>
    %32 = vector.shape_cast %31 : vector<64xf32> to vector<64x1xf32>
    %33 = arith.addf %29, %32 : vector<64x1xf32>
    %c0_23 = arith.constant 0 : index
    %c0_24 = arith.constant 0 : index
    %c0_25 = arith.constant 0 : index
    %34 = vector.load %arg10[%c0_23, %c0_24, %c0_25] : memref<1x64x1xf32, #tpu.memory_space<vmem>>, vector<1x64x1xf32>
    %35 = vector.shape_cast %34 : vector<1x64x1xf32> to vector<64x1xf32>
    %36 = vector.shape_cast %33 : vector<64x1xf32> to vector<1x64x1xf32>
    tpu.vector_store %arg10[%c0_23, %c0_24, %c0_25], %36 {strides = array<i32>} : memref<1x64x1xf32, #tpu.memory_space<vmem>>, vector<1x64x1xf32>,
    %37 = arith.truncf %16 : vector<64x16xf32> to vector<64x16xbf16>
    %c0_26 = arith.constant 0 : index
    %c0_27 = arith.constant 0 : index
    %c0_28 = arith.constant 0 : index
    %38 = vector.load %arg8[%c0_26, %c0_27, %c0_28] : memref<1x64x16xbf16, #tpu.memory_space<vmem>>, vector<1x64x16xbf16>
    %39 = vector.shape_cast %38 : vector<1x64x16xbf16> to vector<64x16xbf16>
    %40 = vector.shape_cast %37 : vector<64x16xbf16> to vector<1x64x16xbf16>
    tpu.vector_store %arg8[%c0_26, %c0_27, %c0_28], %40 {strides = array<i32>} : memref<1x64x16xbf16, #tpu.memory_space<vmem>>, vector<1x64x16xbf16>,
    return
  }
  func.func @transform_0(%arg0: i32, %arg1: i32, %arg2: i32) -> (i32, i32, i32) {
    %c1_i32 = arith.constant 1 : i32
    %0 = arith.muli %arg1, %c1_i32 : i32
    %1 = arith.addi %0, %arg2 : i32
    %c0_i32 = arith.constant 0 : i32
    %c0_i32_0 = arith.constant 0 : i32
    return %arg0, %c0_i32, %1 : i32, i32, i32
  }
  func.func @transform_1(%arg0: i32, %arg1: i32, %arg2: i32) -> (i32, i32) {
    %c0_i32 = arith.constant 0 : i32
    %c0_i32_0 = arith.constant 0 : i32
    %c0_i32_1 = arith.constant 0 : i32
    return %c0_i32, %c0_i32_0 : i32, i32
  }
  func.func @transform_2(%arg0: i32, %arg1: i32, %arg2: i32) -> (i32, i32) {
    %c0_i32 = arith.constant 0 : i32
    %c0_i32_0 = arith.constant 0 : i32
    %c0_i32_1 = arith.constant 0 : i32
    return %c0_i32, %c0_i32_0 : i32, i32
  }
  func.func @transform_3(%arg0: i32, %arg1: i32, %arg2: i32) -> (i32, i32) {
    %c0_i32 = arith.constant 0 : i32
    %c0_i32_0 = arith.constant 0 : i32
    %c0_i32_1 = arith.constant 0 : i32
    return %c0_i32, %c0_i32_0 : i32, i32
  }
  func.func @transform_4(%arg0: i32, %arg1: i32, %arg2: i32) -> (i32, i32) {
    %c0_i32 = arith.constant 0 : i32
    %c0_i32_0 = arith.constant 0 : i32
    %c0_i32_1 = arith.constant 0 : i32
    return %c0_i32, %c0_i32_0 : i32, i32
  }
  func.func @transform_5(%arg0: i32, %arg1: i32, %arg2: i32) -> (i32, i32, i32) {
    %c1_i32 = arith.constant 1 : i32
    %0 = arith.muli %arg1, %c1_i32 : i32
    %1 = arith.addi %0, %arg2 : i32
    %c0_i32 = arith.constant 0 : i32
    %c0_i32_0 = arith.constant 0 : i32
    return %arg0, %c0_i32, %1 : i32, i32, i32
  }
  func.func @transform_6(%arg0: i32, %arg1: i32, %arg2: i32) -> (i32, i32, i32) {
    %c1_i32 = arith.constant 1 : i32
    %0 = arith.muli %arg0, %c1_i32 : i32
    %1 = arith.addi %0, %arg1 : i32
    %c0_i32 = arith.constant 0 : i32
    %c0_i32_0 = arith.constant 0 : i32
    %c0_i32_1 = arith.constant 0 : i32
    return %1, %c0_i32, %c0_i32_0 : i32, i32, i32
  }
  func.func @transform_7(%arg0: i32, %arg1: i32, %arg2: i32) -> (i32, i32, i32) {
    %c1_i32 = arith.constant 1 : i32
    %0 = arith.muli %arg0, %c1_i32 : i32
    %1 = arith.addi %0, %arg1 : i32
    %c0_i32 = arith.constant 0 : i32
    %c0_i32_0 = arith.constant 0 : i32
    %c0_i32_1 = arith.constant 0 : i32
    return %1, %c0_i32, %c0_i32_0 : i32, i32, i32
  }
}

module attributes {stable_mosaic.version = 11 : i64} {
  func.func @_last_layer_kernel(%arg0: i32, %arg1: i32, %arg2: i32, %arg3: memref<1x64x16xbf16, #tpu.memory_space<vmem>>, %arg4: memref<64x1xf32, #tpu.memory_space<vmem>>, %arg5: memref<64x1xf32, #tpu.memory_space<vmem>>, %arg6: memref<3x64xbf16, #tpu.memory_space<vmem>>, %arg7: memref<3x1xf32, #tpu.memory_space<vmem>>, %arg8: memref<1x3x16xf32, #tpu.memory_space<vmem>>) attributes {dimension_semantics = [#tpu.dimension_semantics<parallel>, #tpu.dimension_semantics<parallel>, #tpu.dimension_semantics<parallel>], iteration_bounds = array<i64: 2, 1, 1>, scalar_prefetch = 0 : i64, scratch_operands = 0 : i64, tpu.core_type = #tpu.core_type<tc>, window_params = [{transform_indices = @transform_0, window_bounds = array<i64: 1, 64, 16>}, {pipeline_mode = #tpu.pipeline_mode<synchronous>, transform_indices = @transform_1, window_bounds = array<i64: 64, 1>}, {pipeline_mode = #tpu.pipeline_mode<synchronous>, transform_indices = @transform_2, window_bounds = array<i64: 64, 1>}, {pipeline_mode = #tpu.pipeline_mode<synchronous>, transform_indices = @transform_3, window_bounds = array<i64: 3, 64>}, {pipeline_mode = #tpu.pipeline_mode<synchronous>, transform_indices = @transform_4, window_bounds = array<i64: 3, 1>}, {transform_indices = @transform_5, window_bounds = array<i64: 1, 3, 16>}]} {
    %c0 = arith.constant 0 : index
    %c0_0 = arith.constant 0 : index
    %c0_1 = arith.constant 0 : index
    %0 = vector.load %arg3[%c0, %c0_0, %c0_1] : memref<1x64x16xbf16, #tpu.memory_space<vmem>>, vector<1x64x16xbf16>
    %1 = vector.shape_cast %0 : vector<1x64x16xbf16> to vector<64x16xbf16>
    %2 = arith.extf %1 : vector<64x16xbf16> to vector<64x16xf32>
    %c0_2 = arith.constant 0 : index
    %c0_3 = arith.constant 0 : index
    %3 = vector.load %arg4[%c0_2, %c0_3] : memref<64x1xf32, #tpu.memory_space<vmem>>, vector<64x1xf32>
    %4 = vector.broadcast %3 : vector<64x1xf32> to vector<64x16xf32>
    %5 = arith.mulf %2, %4 : vector<64x16xf32>
    %c0_4 = arith.constant 0 : index
    %c0_5 = arith.constant 0 : index
    %6 = vector.load %arg5[%c0_4, %c0_5] : memref<64x1xf32, #tpu.memory_space<vmem>>, vector<64x1xf32>
    %7 = vector.broadcast %6 : vector<64x1xf32> to vector<64x16xf32>
    %8 = arith.addf %5, %7 : vector<64x16xf32>
    %cst = arith.constant 0.000000e+00 : f32
    %9 = vector.broadcast %cst : f32 to vector<64x16xf32>
    %10 = arith.maximumf %8, %9 : vector<64x16xf32>
    %c0_6 = arith.constant 0 : index
    %c0_7 = arith.constant 0 : index
    %11 = vector.load %arg6[%c0_6, %c0_7] : memref<3x64xbf16, #tpu.memory_space<vmem>>, vector<3x64xbf16>
    %12 = arith.truncf %10 : vector<64x16xf32> to vector<64x16xbf16>
    %cst_8 = arith.constant dense<0.000000e+00> : vector<3x16xf32>
    %13 = tpu.matmul %11, %12, %cst_8 {dimension_numbers = #tpu.dot_dimension_numbers<[1], [0], [0], [1], [0, 0, 1, 1], [], []>} : vector<3x64xbf16>, vector<64x16xbf16>, vector<3x16xf32> -> vector<3x16xf32>
    %c0_9 = arith.constant 0 : index
    %c0_10 = arith.constant 0 : index
    %14 = vector.load %arg7[%c0_9, %c0_10] : memref<3x1xf32, #tpu.memory_space<vmem>>, vector<3x1xf32>
    %15 = vector.broadcast %14 : vector<3x1xf32> to vector<3x16xf32>
    %16 = arith.addf %13, %15 : vector<3x16xf32>
    %17 = math.tanh %16 : vector<3x16xf32>
    %c0_11 = arith.constant 0 : index
    %c0_12 = arith.constant 0 : index
    %c0_13 = arith.constant 0 : index
    %18 = vector.load %arg8[%c0_11, %c0_12, %c0_13] : memref<1x3x16xf32, #tpu.memory_space<vmem>>, vector<1x3x16xf32>
    %19 = vector.shape_cast %18 : vector<1x3x16xf32> to vector<3x16xf32>
    %20 = vector.shape_cast %17 : vector<3x16xf32> to vector<1x3x16xf32>
    tpu.vector_store %arg8[%c0_11, %c0_12, %c0_13], %20 {strides = array<i32>} : memref<1x3x16xf32, #tpu.memory_space<vmem>>, vector<1x3x16xf32>,
    return
  }
  func.func @transform_0(%arg0: i32, %arg1: i32, %arg2: i32) -> (i32, i32, i32) {
    %c1_i32 = arith.constant 1 : i32
    %0 = arith.muli %arg1, %c1_i32 : i32
    %1 = arith.addi %0, %arg2 : i32
    %c0_i32 = arith.constant 0 : i32
    %c0_i32_0 = arith.constant 0 : i32
    return %arg0, %c0_i32, %1 : i32, i32, i32
  }
  func.func @transform_1(%arg0: i32, %arg1: i32, %arg2: i32) -> (i32, i32) {
    %c0_i32 = arith.constant 0 : i32
    %c0_i32_0 = arith.constant 0 : i32
    %c0_i32_1 = arith.constant 0 : i32
    return %c0_i32, %c0_i32_0 : i32, i32
  }
  func.func @transform_2(%arg0: i32, %arg1: i32, %arg2: i32) -> (i32, i32) {
    %c0_i32 = arith.constant 0 : i32
    %c0_i32_0 = arith.constant 0 : i32
    %c0_i32_1 = arith.constant 0 : i32
    return %c0_i32, %c0_i32_0 : i32, i32
  }
  func.func @transform_3(%arg0: i32, %arg1: i32, %arg2: i32) -> (i32, i32) {
    %c0_i32 = arith.constant 0 : i32
    %c0_i32_0 = arith.constant 0 : i32
    %c0_i32_1 = arith.constant 0 : i32
    return %c0_i32, %c0_i32_0 : i32, i32
  }
  func.func @transform_4(%arg0: i32, %arg1: i32, %arg2: i32) -> (i32, i32) {
    %c0_i32 = arith.constant 0 : i32
    %c0_i32_0 = arith.constant 0 : i32
    %c0_i32_1 = arith.constant 0 : i32
    return %c0_i32, %c0_i32_0 : i32, i32
  }
  func.func @transform_5(%arg0: i32, %arg1: i32, %arg2: i32) -> (i32, i32, i32) {
    %c1_i32 = arith.constant 1 : i32
    %0 = arith.muli %arg1, %c1_i32 : i32
    %1 = arith.addi %0, %arg2 : i32
    %c0_i32 = arith.constant 0 : i32
    %c0_i32_0 = arith.constant 0 : i32
    return %arg0, %c0_i32, %1 : i32, i32, i32
  }
}

</mosaic_0001>

<llo_original>
// kernel: pointgen_forward.7
$region0: #{pointgen_forward.7}
  #allocation0 [shape = 'u32[]', space=smem, size = 0x4, offset = 0x4, fixed_abs, tag = 'smem constant byte address 0x4 - core index']
  #allocation1 [shape = 'u32[144,128]{1,0:T(1,128)}', space=vmem, size = 0x12000, scoped, tag = 'internal scratch']
  %s0 = inlined_call_operand.vmem [shape: bf16[2,64,16], index: 0, kind: input, shape index: {}]
  %s1 = inlined_call_operand.vmem [shape: f32[64,1], index: 1, kind: input, shape index: {}]
  %s2 = inlined_call_operand.vmem [shape: f32[64,1], index: 2, kind: input, shape index: {}]
  %s3 = inlined_call_operand.vmem [shape: bf16[3,64], index: 3, kind: input, shape index: {}]
  %s4 = inlined_call_operand.vmem [shape: f32[3,1], index: 4, kind: input, shape index: {}]
  %s5 = inlined_call_operand.vmem [shape: f32[2,3,16], index: 5, kind: output, shape index: {}]
  %s6 = sld [smem:[#allocation0]]
  $region53: #{pointgen_forward.7} parent=0
    _
  %s8 = ssub.s32 1, %s6
  %s9 = scalar_select 0, %s8, %s6
  loop: start=0, step=1, limit=4
  $region2: #{pointgen_forward.7} parent=0 // loop_pre_header
    _
  $region3: #{pointgen_forward.7} parent=0 // loop_header
    %s11 = sphi 0, %s15
    %p12 = scmp.ge.s32.totalorder %s11, 4
    %s18 = sphi 0, %s37
    %s19 = sphi 0, %s33
    %s20 = sphi 0, %s29
    %s21 = sphi 0, %s18
    %s22 = sphi 0, %s19
    %s23 = sphi 0, %s20
    %s24 = sphi 0, %s21
    %s25 = sphi 0, %s22
    %s26 = sphi 0, %s23
    %s44 = sphi 0, %s46
    %s47 = sphi 0, %s44
    %s48 = sphi 0, %s47
    %s64 = sphi 0, %s48
    %s68 = sphi 0, %s68
    %s70 = sphi 0, %s68
    %s71 = sphi 0, %s70
    %s85 = sphi 0, %s71
    %s89 = sphi 0, %s89
    %s91 = sphi 0, %s89
    %s92 = sphi 0, %s91
    %s106 = sphi 0, %s92
    %s110 = sphi 0, %s110
    %s112 = sphi 0, %s110
    %s113 = sphi 0, %s112
    %s127 = sphi 0, %s113
    %s131 = sphi 0, %s131
    %s133 = sphi 0, %s131
    %s134 = sphi 0, %s133
    %s148 = sphi 0, %s134
    %s158 = sphi 0, %s160
    %s161 = sphi 0, %s158
    %s162 = sphi 0, %s161
    %s178 = sphi 0, %s162
  $region4: #{pointgen_forward.7} parent=0 // loop_header_branch
    %14 = sbr.rel (%p12) target = $region8
  $region5: #{pointgen_forward.7} parent=0 // loop_body
    %s16 = ssub.s32 %s11, 1
    %s17 = ssub.s32 %s11, 2
    %s27 = sadd.s32 1, %s20
    %p28 = scmp.ge.s32.totalorder %s27, 1
    %s29 = scalar_select %p28, 0, %s27
    %s30 = sadd.s32 1, %s19
    %s31 = scalar_select %p28, %s30, %s19
    %p32 = scmp.ge.s32.totalorder %s31, 1
    %s33 = scalar_select %p32, 0, %s31
    %s34 = sadd.s32 1, %s18
    %s35 = scalar_select %p32, %s34, %s18
    %p36 = scmp.ge.s32.totalorder %s35, 2
    %s37 = scalar_select %p36, 0, %s35
    %s38 = sadd.s32 %s19, %s20
    %s39 = sadd.s32 %s33, %s29
    %s40 = ssub.s32 %s18, %s37
    %s41 = ssub.s32 %s38, %s39
    %s42 = sor.u32 %s40, %s41
    %p43 = scmp.eq.s32.totalorder %s42, 0
    %s45 = sadd.s32 %s44, 1
    %s46 = scalar_select %p43, %s44, %s45
    %p49 = pneg %p43
    %p50 = scmp.eq.s32.totalorder %s11, 1
    %p51 = por %p49, %p50
    %p52 = scmp.ne.s32.totalorder %s44, %s47
    %p53 = scmp.eq.s32.totalorder %s11, 0
    %p54 = por %p52, %p53
    %p55 = scmp.ne.s32.totalorder %s44, %s47
    %p56 = scmp.eq.s32.totalorder %s16, 1
    %p57 = por %p55, %p56
    %p58 = scmp.ne.s32.totalorder %s47, %s48
    %p59 = scmp.eq.s32.totalorder %s16, 0
    %p60 = por %p58, %p59
    %p61 = scmp.ne.s32.totalorder %s47, %s48
    %p62 = scmp.eq.s32.totalorder %s17, 1
    %p63 = por %p61, %p62
    %p65 = scmp.ne.s32.totalorder %s48, %s64
    %p66 = scmp.eq.s32.totalorder %s17, 0
    %p67 = por %p65, %p66
    %s69 = sadd.s32 %s68, 1
    %p72 = scmp.eq.s32.totalorder %s11, 1
    %p73 = scmp.ne.s32.totalorder %s68, %s70
    %p74 = scmp.eq.s32.totalorder %s11, 0
    %p75 = por %p73, %p74
    %p76 = scmp.ne.s32.totalorder %s68, %s70
    %p77 = scmp.eq.s32.totalorder %s16, 1
    %p78 = por %p76, %p77
    %p79 = scmp.ne.s32.totalorder %s70, %s71
    %p80 = scmp.eq.s32.totalorder %s16, 0
    %p81 = por %p79, %p80
    %p82 = scmp.ne.s32.totalorder %s70, %s71
    %p83 = scmp.eq.s32.totalorder %s17, 1
    %p84 = por %p82, %p83
    %p86 = scmp.ne.s32.totalorder %s71, %s85
    %p87 = scmp.eq.s32.totalorder %s17, 0
    %p88 = por %p86, %p87
    %s90 = sadd.s32 %s89, 1
    %p93 = scmp.eq.s32.totalorder %s11, 1
    %p94 = scmp.ne.s32.totalorder %s89, %s91
    %p95 = scmp.eq.s32.totalorder %s11, 0
    %p96 = por %p94, %p95
    %p97 = scmp.ne.s32.totalorder %s89, %s91
    %p98 = scmp.eq.s32.totalorder %s16, 1
    %p99 = por %p97, %p98
    %p100 = scmp.ne.s32.totalorder %s91, %s92
    %p101 = scmp.eq.s32.totalorder %s16, 0
    %p102 = por %p100, %p101
    %p103 = scmp.ne.s32.totalorder %s91, %s92
    %p104 = scmp.eq.s32.totalorder %s17, 1
    %p105 = por %p103, %p104
    %p107 = scmp.ne.s32.totalorder %s92, %s106
    %p108 = scmp.eq.s32.totalorder %s17, 0
    %p109 = por %p107, %p108
    %s111 = sadd.s32 %s110, 1
    %p114 = scmp.eq.s32.totalorder %s11, 1
    %p115 = scmp.ne.s32.totalorder %s110, %s112
    %p116 = scmp.eq.s32.totalorder %s11, 0
    %p117 = por %p115, %p116
    %p118 = scmp.ne.s32.totalorder %s110, %s112
    %p119 = scmp.eq.s32.totalorder %s16, 1
    %p120 = por %p118, %p119
    %p121 = scmp.ne.s32.totalorder %s112, %s113
    %p122 = scmp.eq.s32.totalorder %s16, 0
    %p123 = por %p121, %p122
    %p124 = scmp.ne.s32.totalorder %s112, %s113
    %p125 = scmp.eq.s32.totalorder %s17, 1
    %p126 = por %p124, %p125
    %p128 = scmp.ne.s32.totalorder %s113, %s127
    %p129 = scmp.eq.s32.totalorder %s17, 0
    %p130 = por %p128, %p129
    %s132 = sadd.s32 %s131, 1
    %p135 = scmp.eq.s32.totalorder %s11, 1
    %p136 = scmp.ne.s32.totalorder %s131, %s133
    %p137 = scmp.eq.s32.totalorder %s11, 0
    %p138 = por %p136, %p137
    %p139 = scmp.ne.s32.totalorder %s131, %s133
    %p140 = scmp.eq.s32.totalorder %s16, 1
    %p141 = por %p139, %p140
    %p142 = scmp.ne.s32.totalorder %s133, %s134
    %p143 = scmp.eq.s32.totalorder %s16, 0
    %p144 = por %p142, %p143
    %p145 = scmp.ne.s32.totalorder %s133, %s134
    %p146 = scmp.eq.s32.totalorder %s17, 1
    %p147 = por %p145, %p146
    %p149 = scmp.ne.s32.totalorder %s134, %s148
    %p150 = scmp.eq.s32.totalorder %s17, 0
    %p151 = por %p149, %p150
    %s152 = sadd.s32 %s19, %s20
    %s153 = sadd.s32 %s33, %s29
    %s154 = ssub.s32 %s18, %s37
    %s155 = ssub.s32 %s152, %s153
    %s156 = sor.u32 %s154, %s155
    %p157 = scmp.eq.s32.totalorder %s156, 0
    %s159 = sadd.s32 %s158, 1
    %s160 = scalar_select %p157, %s158, %s159
    %p163 = pneg %p157
    %p164 = scmp.eq.s32.totalorder %s11, 1
    %p165 = por %p163, %p164
    %p166 = scmp.ne.s32.totalorder %s158, %s161
    %p167 = scmp.eq.s32.totalorder %s11, 0
    %p168 = por %p166, %p167
    %p169 = scmp.ne.s32.totalorder %s158, %s161
    %p170 = scmp.eq.s32.totalorder %s16, 1
    %p171 = por %p169, %p170
    %p172 = scmp.ne.s32.totalorder %s161, %s162
    %p173 = scmp.eq.s32.totalorder %s16, 0
    %p174 = por %p172, %p173
    %p175 = scmp.ne.s32.totalorder %s161, %s162
    %p176 = scmp.eq.s32.totalorder %s17, 1
    %p177 = por %p175, %p176
    %p179 = scmp.ne.s32.totalorder %s162, %s178
    %p180 = scmp.eq.s32.totalorder %s17, 0
    %p181 = por %p179, %p180
    %p182 = scmp.le.s32.totalorder 1, %s11
    %p183 = scmp.lt.s32.totalorder %s11, 3
    %p184 = pnand %p182, %p183
    %p185 = pneg %p184
    // Predicated region
    $region9: #{pointgen_forward.7} parent=5 // pred_check
      _
    $region10: #{pointgen_forward.7} parent=5 // pred_check_branch
      %187 = sbr.rel (%p184) target = $region12
    $region11: #{pointgen_forward.7} parent=5 // pred_region
      %s188 = ssub.s32 %s11, 1
      // Predicated region
      $region13: #{pointgen_forward.7} parent=11 // pred_check
        %p189 = pneg %p81
      $region14: #{pointgen_forward.7} parent=11 // pred_check_branch
        %191 = sbr.rel (%p189) target = $region16
      $region15: #{pointgen_forward.7} parent=11 // pred_region
        _
      $region16: #{pointgen_forward.7} parent=11 // pred_fallthru
        _
      // Predicated region
      $region17: #{pointgen_forward.7} parent=11 // pred_check
        %p192 = pneg %p102
      $region18: #{pointgen_forward.7} parent=11 // pred_check_branch
        %194 = sbr.rel (%p192) target = $region20
      $region19: #{pointgen_forward.7} parent=11 // pred_region
        _
      $region20: #{pointgen_forward.7} parent=11 // pred_fallthru
        _
      // Predicated region
      $region21: #{pointgen_forward.7} parent=11 // pred_check
        %p195 = pneg %p123
      $region22: #{pointgen_forward.7} parent=11 // pred_check_branch
        %197 = sbr.rel (%p195) target = $region24
      $region23: #{pointgen_forward.7} parent=11 // pred_region
        _
      $region24: #{pointgen_forward.7} parent=11 // pred_fallthru
        _
      // Predicated region
      $region25: #{pointgen_forward.7} parent=11 // pred_check
        %p198 = pneg %p144
      $region26: #{pointgen_forward.7} parent=11 // pred_check_branch
        %200 = sbr.rel (%p198) target = $region28
      $region27: #{pointgen_forward.7} parent=11 // pred_region
        _
      $region28: #{pointgen_forward.7} parent=11 // pred_fallthru
        _
    $region12: #{pointgen_forward.7} parent=5 // pred_fallthru
      _
    %p201 = scmp.lt.s32.totalorder %s11, 2
    // Predicated region
    $region29: #{pointgen_forward.7} parent=5 // pred_check
      %p202 = pneg %p201
    $region30: #{pointgen_forward.7} parent=5 // pred_check_branch
      %204 = sbr.rel (%p202) target = $region32
    $region31: #{pointgen_forward.7} parent=5 // pred_region
      // Predicated region
      $region33: #{pointgen_forward.7} parent=31 // pred_check
        %p205 = pneg %p54
      $region34: #{pointgen_forward.7} parent=31 // pred_check_branch
        %207 = sbr.rel (%p205) target = $region36
      $region35: #{pointgen_forward.7} parent=31 // pred_region
        %s208 = sadd.s32 %s19, %s20
        %p209 = scmp.lt.s32.totalorder %s18, 1
        %s210 = scalar_select %p209, %s18, 1
        %p211 = scmp.lt.s32.totalorder %s208, 0
        %s212 = scalar_select %p211, %s208, 0
        %s213 = smul.addr %s210, 8
        %s214 = sadd.s32 %s212, %s213
        %s215 = smul.addr %s214, 4
        %s216 = scalar_lea.vmem %s0, %s215
        %s217 = sadd.s32 %s19, %s20
      $region36: #{pointgen_forward.7} parent=31 // pred_fallthru
        _
    $region32: #{pointgen_forward.7} parent=5 // pred_fallthru
      _
    %p218 = scmp.le.s32.totalorder 1, %s11
    %p219 = scmp.lt.s32.totalorder %s11, 3
    %p220 = pnand %p218, %p219
    %p221 = pneg %p220
    // Predicated region
    $region37: #{pointgen_forward.7} parent=5 // pred_check
      _
    $region38: #{pointgen_forward.7} parent=5 // pred_check_branch
      %223 = sbr.rel (%p220) target = $region40
    $region39: #{pointgen_forward.7} parent=5 // pred_region
      %s224 = ssub.s32 %s11, 1
      %s225 = sadd.s32 %s22, %s23
      %p226 = scmp.lt.s32.totalorder %s21, 1
      %s227 = scalar_select %p226, %s21, 1
      %p228 = scmp.lt.s32.totalorder %s225, 0
      %s229 = scalar_select %p228, %s225, 0
      %s230 = smul.addr %s227, 8
      %s231 = sadd.s32 %s229, %s230
      %s232 = smul.addr %s231, 4
      %s233 = scalar_lea.vmem %s0, %s232
      %p234 = pneg %p60
      %p235 = pneg %p57
      %p236 = pneg %p81
      %p237 = pneg %p78
      %p238 = pneg %p102
      %p239 = pneg %p99
      %p240 = pneg %p123
      %p241 = pneg %p120
      %p242 = pneg %p144
      %p243 = pneg %p141
      %p244 = pneg %p174
      %p245 = pneg %p171
      %s246 = sadd.s32 %s22, %s23
      %p247 = scmp.lt.s32.totalorder %s21, 1
      %s248 = scalar_select %p247, %s21, 1
      %p249 = scmp.lt.s32.totalorder %s246, 0
      %s250 = scalar_select %p249, %s246, 0
      %s251 = sadd.s32 %s250, %s248
      %s252 = smul.addr %s251, 4
      %s253 = scalar_lea.vmem %s5, %s252
      %s254 = sadd.s32 %s22, %s23
      %p255 = scmp.lt.s32.totalorder %s21, 1
      %s256 = scalar_select %p255, %s21, 1
      %p257 = scmp.lt.s32.totalorder %s254, 0
      %s258 = scalar_select %p257, %s254, 0
      %s259 = smul.addr %s256, 8
      %s260 = sadd.s32 %s258, %s259
      %s261 = smul.addr %s260, 4
      %s262 = scalar_lea.vmem %s0, %s261
      %s263 = sadd.s32 %s22, %s23
      %s264 = sadd.s32 %s22, %s23
      %p265 = scmp.lt.s32.totalorder %s21, 1
      %s266 = scalar_select %p265, %s21, 1
      %p267 = scmp.lt.s32.totalorder %s264, 0
      %s268 = scalar_select %p267, %s264, 0
      %s269 = sadd.s32 %s268, %s266
      %s270 = smul.addr %s269, 4
      %s271 = scalar_lea.vmem %s5, %s270
      %s272 = sadd.s32 %s22, %s23
      %v274 = vld [vmem:[%s262] sm:$0xf]
      %v275 = vld [vmem:[%s262 + $0x4] sm:$0xf]
      %v276 = vld [vmem:[%s262 + $0x8] sm:$0xf]
      %v277 = vld [vmem:[%s262 + $0xc] sm:$0xf]
      %v278 = vld [vmem:[%s262 + $0x10] sm:$0xf]
      %v279 = vld [vmem:[%s262 + $0x14] sm:$0xf]
      %v280 = vld [vmem:[%s262 + $0x18] sm:$0xf]
      %v281 = vld [vmem:[%s262 + $0x1c] sm:$0xf]
      %v282 = vunpack.c.l.bf16 %v274
      %v283 = vunpack.c.l.bf16 %v275
      %v284 = vunpack.c.l.bf16 %v276
      %v285 = vunpack.c.l.bf16 %v277
      %v286 = vunpack.c.l.bf16 %v278
      %v287 = vunpack.c.l.bf16 %v279
      %v288 = vunpack.c.l.bf16 %v280
      %v289 = vunpack.c.l.bf16 %v281
      %v290 = vld [vmem:[%s1] sm:$0xff]
      %v291 = vld [vmem:[%s1 + $0x8] sm:$0xff]
      %v292 = vld [vmem:[%s1 + $0x10] sm:$0xff]
      %v293 = vld [vmem:[%s1 + $0x18] sm:$0xff]
      %v294 = vld [vmem:[%s1 + $0x20] sm:$0xff]
      %v295 = vld [vmem:[%s1 + $0x28] sm:$0xff]
      %v296 = vld [vmem:[%s1 + $0x30] sm:$0xff]
      %v297 = vld [vmem:[%s1 + $0x38] sm:$0xff]
      %299 = vset.pattern.permute.xlu0 0
      %300 = vperm.xlu0 %299, %v290
      %v301 = vpop.permute.xlu0 %300
      %304 = vset.pattern.permute.xlu0 0
      %305 = vperm.xlu0 %304, %v291
      %v306 = vpop.permute.xlu0 %305
      %309 = vset.pattern.permute.xlu0 0
      %310 = vperm.xlu0 %309, %v292
      %v311 = vpop.permute.xlu0 %310
      %314 = vset.pattern.permute.xlu0 0
      %315 = vperm.xlu0 %314, %v293
      %v316 = vpop.permute.xlu0 %315
      %319 = vset.pattern.permute.xlu0 0
      %320 = vperm.xlu0 %319, %v294
      %v321 = vpop.permute.xlu0 %320
      %324 = vset.pattern.permute.xlu0 0
      %325 = vperm.xlu0 %324, %v295
      %v326 = vpop.permute.xlu0 %325
      %329 = vset.pattern.permute.xlu0 0
      %330 = vperm.xlu0 %329, %v296
      %v331 = vpop.permute.xlu0 %330
      %334 = vset.pattern.permute.xlu0 0
      %335 = vperm.xlu0 %334, %v297
      %v336 = vpop.permute.xlu0 %335
      %v338 = vmul.f32 %v282, %v301
      %v339 = vmul.f32 %v283, %v306
      %v340 = vmul.f32 %v284, %v311
      %v341 = vmul.f32 %v285, %v316
      %v342 = vmul.f32 %v286, %v321
      %v343 = vmul.f32 %v287, %v326
      %v344 = vmul.f32 %v288, %v331
      %v345 = vmul.f32 %v289, %v336
      %v346 = vld [vmem:[%s2] sm:$0xff]
      %v347 = vld [vmem:[%s2 + $0x8] sm:$0xff]
      %v348 = vld [vmem:[%s2 + $0x10] sm:$0xff]
      %v349 = vld [vmem:[%s2 + $0x18] sm:$0xff]
      %v350 = vld [vmem:[%s2 + $0x20] sm:$0xff]
      %v351 = vld [vmem:[%s2 + $0x28] sm:$0xff]
      %v352 = vld [vmem:[%s2 + $0x30] sm:$0xff]
      %v353 = vld [vmem:[%s2 + $0x38] sm:$0xff]
      %355 = vset.pattern.permute.xlu0 0
      %356 = vperm.xlu0 %355, %v346
      %v357 = vpop.permute.xlu0 %356
      %360 = vset.pattern.permute.xlu0 0
      %361 = vperm.xlu0 %360, %v347
      %v362 = vpop.permute.xlu0 %361
      %365 = vset.pattern.permute.xlu0 0
      %366 = vperm.xlu0 %365, %v348
      %v367 = vpop.permute.xlu0 %366
      %370 = vset.pattern.permute.xlu0 0
      %371 = vperm.xlu0 %370, %v349
      %v372 = vpop.permute.xlu0 %371
      %375 = vset.pattern.permute.xlu0 0
      %376 = vperm.xlu0 %375, %v350
      %v377 = vpop.permute.xlu0 %376
      %380 = vset.pattern.permute.xlu0 0
      %381 = vperm.xlu0 %380, %v351
      %v382 = vpop.permute.xlu0 %381
      %385 = vset.pattern.permute.xlu0 0
      %386 = vperm.xlu0 %385, %v352
      %v387 = vpop.permute.xlu0 %386
      %390 = vset.pattern.permute.xlu0 0
      %391 = vperm.xlu0 %390, %v353
      %v392 = vpop.permute.xlu0 %391
      %v394 = vadd.f32 %v338, %v357
      %v395 = vadd.f32 %v339, %v362
      %v396 = vadd.f32 %v340, %v367
      %v397 = vadd.f32 %v341, %v372
      %v398 = vadd.f32 %v342, %v377
      %v399 = vadd.f32 %v343, %v382
      %v400 = vadd.f32 %v344, %v387
      %v401 = vadd.f32 %v345, %v392
      %v402 = vmax.f32 %v394, 0.0
      %v403 = vmax.f32 %v395, 0.0
      %v404 = vmax.f32 %v396, 0.0
      %v405 = vmax.f32 %v397, 0.0
      %v406 = vmax.f32 %v398, 0.0
      %v407 = vmax.f32 %v399, 0.0
      %v408 = vmax.f32 %v400, 0.0
      %v409 = vmax.f32 %v401, 0.0
      %v410 = vld [vmem:[%s3] sm:$0x3]
      %v411 = vpack.c.bf16 %v403, %v402
      %v412 = vpack.c.bf16 %v405, %v404
      %v413 = vpack.c.bf16 %v407, %v406
      %v414 = vpack.c.bf16 %v409, %v408
      %v415 = vld [vmem:[%s4] sm:$0x7]
      %417 = vset.pattern.permute.xlu0 0
      %418 = vperm.xlu0 %417, %v415
      %v419 = vpop.permute.xlu0 %418
      %vm421 = vcmask 523264
      %v423 = vsel %vm421, %v410, 0
      %425 = vmatprep.subr.bf16.mxu0 0
      %426 = vmatpush1.bf16.msra.mxu0 0
      %427 = vmatprep.subr.bf16.mxu0 0
      %428 = vmatpush1.bf16.msra.mxu0 0
      %429 = vmatprep.subr.bf16.mxu0 0
      %430 = vmatpush1.bf16.msra.mxu0 0
      %431 = vmatprep.subr.bf16.mxu0 0
      %432 = vmatpush1.bf16.msra.mxu0 0
      %433 = vmatprep.subr.bf16.mxu0 0
      %434 = vmatpush1.bf16.msra.mxu0 %v414
      %435 = vmatprep.subr.bf16.mxu0 0
      %436 = vmatpush1.bf16.msra.mxu0 %v413
      %437 = vmatprep.subr.bf16.mxu0 0
      %438 = vmatpush1.bf16.msra.mxu0 %v412
      %439 = vmatprep.subr.bf16.mxu0 0
      %440 = vmatpush1.bf16.msra.mxu0 %v411
      %441 = vmatprep.subr.bf16.mxu0 0
      %442 = vmatpush2.bf16.msra.mxu0 0
      %443 = vmatprep.subr.bf16.mxu0 0
      %444 = vmatpush2.bf16.msra.mxu0 0
      %445 = vmatprep.subr.bf16.mxu0 0
      %446 = vmatpush2.bf16.msra.mxu0 0
      %447 = vmatprep.subr.bf16.mxu0 0
      %448 = vmatpush2.bf16.msra.mxu0 0
      %449 = vmatprep.subr.bf16.mxu0 0
      %450 = vmatpush2.bf16.msra.mxu0 0
      %451 = vmatprep.subr.bf16.mxu0 0
      %452 = vmatpush2.bf16.msra.mxu0 0
      %453 = vmatprep.subr.bf16.mxu0 0
      %454 = vmatpush2.bf16.msra.mxu0 0
      %455 = vmatprep.subr.bf16.mxu0 0
      %456 = vmatpush2.bf16.msra.mxu0 0
      %457 = vmatprep.mubr.bf16.mxu0 0
      %458 = vmatmul.mubr.bf16.gmra.mxu0 %v423
      %v459 = vpop.f32.mrf.mxu0
      %v460 = vadd.f32 %v419, %v459
      %v461 = vpop.f32.mrf.mxu0
      %v462 = vpop.f32.mrf.mxu0
      %v463 = vpop.f32.mrf.mxu0
      %464 = vdwg.mxu0
      %v465 = vtanh.pop %v460
      %vm466 = vcmask 124928
      %467 = vst.msk [vmem:[%s271] sm:$0x7] %vm466, %v465
      %s468 = sadd.s32 %s22, %s23
      %p469 = scmp.lt.s32.totalorder %s21, 1
      %s470 = scalar_select %p469, %s21, 1
      %p471 = scmp.lt.s32.totalorder %s468, 0
      %s472 = scalar_select %p471, %s468, 0
      %s473 = sadd.s32 %s472, %s470
      %s474 = smul.addr %s473, 4
      %s475 = scalar_lea.vmem %s5, %s474
      // Predicated region
      $region41: #{pointgen_forward.7} parent=39 // pred_check
        %p476 = pneg %p171
      $region42: #{pointgen_forward.7} parent=39 // pred_check_branch
        %478 = sbr.rel (%p476) target = $region44
      $region43: #{pointgen_forward.7} parent=39 // pred_region
        %s479 = sadd.s32 %s22, %s23
      $region44: #{pointgen_forward.7} parent=39 // pred_fallthru
        _
    $region40: #{pointgen_forward.7} parent=5 // pred_fallthru
      _
    %p480 = scmp.le.s32.totalorder 2, %s11
    // Predicated region
    $region45: #{pointgen_forward.7} parent=5 // pred_check
      %p481 = pneg %p480
    $region46: #{pointgen_forward.7} parent=5 // pred_check_branch
      %483 = sbr.rel (%p481) target = $region48
    $region47: #{pointgen_forward.7} parent=5 // pred_region
      %s484 = ssub.s32 %s11, 2
      // Predicated region
      $region49: #{pointgen_forward.7} parent=47 // pred_check
        %p485 = pneg %p177
      $region50: #{pointgen_forward.7} parent=47 // pred_check_branch
        %487 = sbr.rel (%p485) target = $region52
      $region51: #{pointgen_forward.7} parent=47 // pred_region
        %s488 = sadd.s32 %s25, %s26
        %p489 = scmp.lt.s32.totalorder %s24, 1
        %s490 = scalar_select %p489, %s24, 1
        %p491 = scmp.lt.s32.totalorder %s488, 0
        %s492 = scalar_select %p491, %s488, 0
        %s493 = sadd.s32 %s492, %s490
        %s494 = smul.addr %s493, 4
        %s495 = scalar_lea.vmem %s5, %s494
      $region52: #{pointgen_forward.7} parent=47 // pred_fallthru
        _
    $region48: #{pointgen_forward.7} parent=5 // pred_fallthru
      _
  $region6: #{pointgen_forward.7} parent=0 // loop_footer
    %s15 = sadd.s32 1, %s11
  $region7: #{pointgen_forward.7} parent=0 // loop_footer_branch
    %10 = sbr.rel target = $region3
  $region8: #{pointgen_forward.7} parent=0 // loop_exit
    _

// kernel: pointgen_forward.4
$region0: #{pointgen_forward.4}
  #allocation0 [shape = 'u32[]', space=smem, size = 0x4, offset = 0x4, fixed_abs, tag = 'smem constant byte address 0x4 - core index']
  #allocation1 [shape = 'u32[144,128]{1,0:T(1,128)}', space=vmem, size = 0x12000, scoped, tag = 'internal scratch']
  %s0 = inlined_call_operand.vmem [shape: f32[2,256,16], index: 0, kind: input, shape index: {}]
  %s1 = inlined_call_operand.vmem [shape: bf16[256,256], index: 1, kind: input, shape index: {}]
  %s2 = inlined_call_operand.vmem [shape: f32[256,1], index: 2, kind: input, shape index: {}]
  %s3 = inlined_call_operand.vmem [shape: bf16[2,256,16], index: 3, kind: output, shape index: {0}]
  %s4 = inlined_call_operand.vmem [shape: f32[2,256,1], index: 4, kind: output, shape index: {1}]
  %s5 = inlined_call_operand.vmem [shape: f32[2,256,1], index: 5, kind: output, shape index: {2}]
  %6 = xla_tuple %s3, %s4, %s5
  %s7 = sld [smem:[#allocation0]]
  $region65: #{pointgen_forward.4} parent=0
    _
  %s9 = ssub.s32 1, %s7
  %s10 = scalar_select 0, %s9, %s7
  loop: start=0, step=1, limit=4
  $region2: #{pointgen_forward.4} parent=0 // loop_pre_header
    _
  $region3: #{pointgen_forward.4} parent=0 // loop_header
    %s12 = sphi 0, %s16
    %p13 = scmp.ge.s32.totalorder %s12, 4
    %s19 = sphi 0, %s38
    %s20 = sphi 0, %s34
    %s21 = sphi 0, %s30
    %s22 = sphi 0, %s19
    %s23 = sphi 0, %s20
    %s24 = sphi 0, %s21
    %s25 = sphi 0, %s22
    %s26 = sphi 0, %s23
    %s27 = sphi 0, %s24
    %s45 = sphi 0, %s47
    %s48 = sphi 0, %s45
    %s49 = sphi 0, %s48
    %s65 = sphi 0, %s49
    %s69 = sphi 0, %s69
    %s71 = sphi 0, %s69
    %s72 = sphi 0, %s71
    %s86 = sphi 0, %s72
    %s90 = sphi 0, %s90
    %s92 = sphi 0, %s90
    %s93 = sphi 0, %s92
    %s107 = sphi 0, %s93
    %s117 = sphi 0, %s119
    %s120 = sphi 0, %s117
    %s121 = sphi 0, %s120
    %s137 = sphi 0, %s121
    %s145 = sphi 0, %s147
    %s148 = sphi 0, %s145
    %s149 = sphi 0, %s148
    %s165 = sphi 0, %s149
    %s173 = sphi 0, %s175
    %s176 = sphi 0, %s173
    %s177 = sphi 0, %s176
    %s193 = sphi 0, %s177
  $region4: #{pointgen_forward.4} parent=0 // loop_header_branch
    %15 = sbr.rel (%p13) target = $region8
  $region5: #{pointgen_forward.4} parent=0 // loop_body
    %s17 = ssub.s32 %s12, 1
    %s18 = ssub.s32 %s12, 2
    %s28 = sadd.s32 1, %s21
    %p29 = scmp.ge.s32.totalorder %s28, 1
    %s30 = scalar_select %p29, 0, %s28
    %s31 = sadd.s32 1, %s20
    %s32 = scalar_select %p29, %s31, %s20
    %p33 = scmp.ge.s32.totalorder %s32, 1
    %s34 = scalar_select %p33, 0, %s32
    %s35 = sadd.s32 1, %s19
    %s36 = scalar_select %p33, %s35, %s19
    %p37 = scmp.ge.s32.totalorder %s36, 2
    %s38 = scalar_select %p37, 0, %s36
    %s39 = sadd.s32 %s20, %s21
    %s40 = sadd.s32 %s34, %s30
    %s41 = ssub.s32 %s19, %s38
    %s42 = ssub.s32 %s39, %s40
    %s43 = sor.u32 %s41, %s42
    %p44 = scmp.eq.s32.totalorder %s43, 0
    %s46 = sadd.s32 %s45, 1
    %s47 = scalar_select %p44, %s45, %s46
    %p50 = pneg %p44
    %p51 = scmp.eq.s32.totalorder %s12, 1
    %p52 = por %p50, %p51
    %p53 = scmp.ne.s32.totalorder %s45, %s48
    %p54 = scmp.eq.s32.totalorder %s12, 0
    %p55 = por %p53, %p54
    %p56 = scmp.ne.s32.totalorder %s45, %s48
    %p57 = scmp.eq.s32.totalorder %s17, 1
    %p58 = por %p56, %p57
    %p59 = scmp.ne.s32.totalorder %s48, %s49
    %p60 = scmp.eq.s32.totalorder %s17, 0
    %p61 = por %p59, %p60
    %p62 = scmp.ne.s32.totalorder %s48, %s49
    %p63 = scmp.eq.s32.totalorder %s18, 1
    %p64 = por %p62, %p63
    %p66 = scmp.ne.s32.totalorder %s49, %s65
    %p67 = scmp.eq.s32.totalorder %s18, 0
    %p68 = por %p66, %p67
    %s70 = sadd.s32 %s69, 1
    %p73 = scmp.eq.s32.totalorder %s12, 1
    %p74 = scmp.ne.s32.totalorder %s69, %s71
    %p75 = scmp.eq.s32.totalorder %s12, 0
    %p76 = por %p74, %p75
    %p77 = scmp.ne.s32.totalorder %s69, %s71
    %p78 = scmp.eq.s32.totalorder %s17, 1
    %p79 = por %p77, %p78
    %p80 = scmp.ne.s32.totalorder %s71, %s72
    %p81 = scmp.eq.s32.totalorder %s17, 0
    %p82 = por %p80, %p81
    %p83 = scmp.ne.s32.totalorder %s71, %s72
    %p84 = scmp.eq.s32.totalorder %s18, 1
    %p85 = por %p83, %p84
    %p87 = scmp.ne.s32.totalorder %s72, %s86
    %p88 = scmp.eq.s32.totalorder %s18, 0
    %p89 = por %p87, %p88
    %s91 = sadd.s32 %s90, 1
    %p94 = scmp.eq.s32.totalorder %s12, 1
    %p95 = scmp.ne.s32.totalorder %s90, %s92
    %p96 = scmp.eq.s32.totalorder %s12, 0
    %p97 = por %p95, %p96
    %p98 = scmp.ne.s32.totalorder %s90, %s92
    %p99 = scmp.eq.s32.totalorder %s17, 1
    %p100 = por %p98, %p99
    %p101 = scmp.ne.s32.totalorder %s92, %s93
    %p102 = scmp.eq.s32.totalorder %s17, 0
    %p103 = por %p101, %p102
    %p104 = scmp.ne.s32.totalorder %s92, %s93
    %p105 = scmp.eq.s32.totalorder %s18, 1
    %p106 = por %p104, %p105
    %p108 = scmp.ne.s32.totalorder %s93, %s107
    %p109 = scmp.eq.s32.totalorder %s18, 0
    %p110 = por %p108, %p109
    %s111 = sadd.s32 %s20, %s21
    %s112 = sadd.s32 %s34, %s30
    %s113 = ssub.s32 %s19, %s38
    %s114 = ssub.s32 %s111, %s112
    %s115 = sor.u32 %s113, %s114
    %p116 = scmp.eq.s32.totalorder %s115, 0
    %s118 = sadd.s32 %s117, 1
    %s119 = scalar_select %p116, %s117, %s118
    %p122 = pneg %p116
    %p123 = scmp.eq.s32.totalorder %s12, 1
    %p124 = por %p122, %p123
    %p125 = scmp.ne.s32.totalorder %s117, %s120
    %p126 = scmp.eq.s32.totalorder %s12, 0
    %p127 = por %p125, %p126
    %p128 = scmp.ne.s32.totalorder %s117, %s120
    %p129 = scmp.eq.s32.totalorder %s17, 1
    %p130 = por %p128, %p129
    %p131 = scmp.ne.s32.totalorder %s120, %s121
    %p132 = scmp.eq.s32.totalorder %s17, 0
    %p133 = por %p131, %p132
    %p134 = scmp.ne.s32.totalorder %s120, %s121
    %p135 = scmp.eq.s32.totalorder %s18, 1
    %p136 = por %p134, %p135
    %p138 = scmp.ne.s32.totalorder %s121, %s137
    %p139 = scmp.eq.s32.totalorder %s18, 0
    %p140 = por %p138, %p139
    %s141 = sadd.s32 %s19, %s20
    %s142 = sadd.s32 %s38, %s34
    %s143 = ssub.s32 %s141, %s142
    %p144 = scmp.eq.s32.totalorder %s143, 0
    %s146 = sadd.s32 %s145, 1
    %s147 = scalar_select %p144, %s145, %s146
    %p150 = pneg %p144
    %p151 = scmp.eq.s32.totalorder %s12, 1
    %p152 = por %p150, %p151
    %p153 = scmp.ne.s32.totalorder %s145, %s148
    %p154 = scmp.eq.s32.totalorder %s12, 0
    %p155 = por %p153, %p154
    %p156 = scmp.ne.s32.totalorder %s145, %s148
    %p157 = scmp.eq.s32.totalorder %s17, 1
    %p158 = por %p156, %p157
    %p159 = scmp.ne.s32.totalorder %s148, %s149
    %p160 = scmp.eq.s32.totalorder %s17, 0
    %p161 = por %p159, %p160
    %p162 = scmp.ne.s32.totalorder %s148, %s149
    %p163 = scmp.eq.s32.totalorder %s18, 1
    %p164 = por %p162, %p163
    %p166 = scmp.ne.s32.totalorder %s149, %s165
    %p167 = scmp.eq.s32.totalorder %s18, 0
    %p168 = por %p166, %p167
    %s169 = sadd.s32 %s19, %s20
    %s170 = sadd.s32 %s38, %s34
    %s171 = ssub.s32 %s169, %s170
    %p172 = scmp.eq.s32.totalorder %s171, 0
    %s174 = sadd.s32 %s173, 1
    %s175 = scalar_select %p172, %s173, %s174
    %p178 = pneg %p172
    %p179 = scmp.eq.s32.totalorder %s12, 1
    %p180 = por %p178, %p179
    %p181 = scmp.ne.s32.totalorder %s173, %s176
    %p182 = scmp.eq.s32.totalorder %s12, 0
    %p183 = por %p181, %p182
    %p184 = scmp.ne.s32.totalorder %s173, %s176
    %p185 = scmp.eq.s32.totalorder %s17, 1
    %p186 = por %p184, %p185
    %p187 = scmp.ne.s32.totalorder %s176, %s177
    %p188 = scmp.eq.s32.totalorder %s17, 0
    %p189 = por %p187, %p188
    %p190 = scmp.ne.s32.totalorder %s176, %s177
    %p191 = scmp.eq.s32.totalorder %s18, 1
    %p192 = por %p190, %p191
    %p194 = scmp.ne.s32.totalorder %s177, %s193
    %p195 = scmp.eq.s32.totalorder %s18, 0
    %p196 = por %p194, %p195
    %p197 = scmp.le.s32.totalorder 1, %s12
    %p198 = scmp.lt.s32.totalorder %s12, 3
    %p199 = pnand %p197, %p198
    %p200 = pneg %p199
    // Predicated region
    $region9: #{pointgen_forward.4} parent=5 // pred_check
      _
    $region10: #{pointgen_forward.4} parent=5 // pred_check_branch
      %202 = sbr.rel (%p199) target = $region12
    $region11: #{pointgen_forward.4} parent=5 // pred_region
      %s203 = ssub.s32 %s12, 1
      // Predicated region
      $region13: #{pointgen_forward.4} parent=11 // pred_check
        %p204 = pneg %p82
      $region14: #{pointgen_forward.4} parent=11 // pred_check_branch
        %206 = sbr.rel (%p204) target = $region16
      $region15: #{pointgen_forward.4} parent=11 // pred_region
        _
      $region16: #{pointgen_forward.4} parent=11 // pred_fallthru
        _
      // Predicated region
      $region17: #{pointgen_forward.4} parent=11 // pred_check
        %p207 = pneg %p103
      $region18: #{pointgen_forward.4} parent=11 // pred_check_branch
        %209 = sbr.rel (%p207) target = $region20
      $region19: #{pointgen_forward.4} parent=11 // pred_region
        _
      $region20: #{pointgen_forward.4} parent=11 // pred_fallthru
        _
    $region12: #{pointgen_forward.4} parent=5 // pred_fallthru
      _
    %p210 = scmp.lt.s32.totalorder %s12, 2
    // Predicated region
    $region21: #{pointgen_forward.4} parent=5 // pred_check
      %p211 = pneg %p210
    $region22: #{pointgen_forward.4} parent=5 // pred_check_branch
      %213 = sbr.rel (%p211) target = $region24
    $region23: #{pointgen_forward.4} parent=5 // pred_region
      // Predicated region
      $region25: #{pointgen_forward.4} parent=23 // pred_check
        %p214 = pneg %p55
      $region26: #{pointgen_forward.4} parent=23 // pred_check_branch
        %216 = sbr.rel (%p214) target = $region28
      $region27: #{pointgen_forward.4} parent=23 // pred_region
        %s217 = sadd.s32 %s20, %s21
        %p218 = scmp.lt.s32.totalorder %s19, 1
        %s219 = scalar_select %p218, %s19, 1
        %p220 = scmp.lt.s32.totalorder %s217, 0
        %s221 = scalar_select %p220, %s217, 0
        %s222 = smul.addr %s219, 32
        %s223 = sadd.s32 %s221, %s222
        %s224 = smul.addr %s223, 8
        %s225 = scalar_lea.vmem %s0, %s224
        %s226 = sadd.s32 %s20, %s21
      $region28: #{pointgen_forward.4} parent=23 // pred_fallthru
        _
    $region24: #{pointgen_forward.4} parent=5 // pred_fallthru
      _
    %p227 = scmp.le.s32.totalorder 1, %s12
    %p228 = scmp.lt.s32.totalorder %s12, 3
    %p229 = pnand %p227, %p228
    %p230 = pneg %p229
    // Predicated region
    $region29: #{pointgen_forward.4} parent=5 // pred_check
      _
    $region30: #{pointgen_forward.4} parent=5 // pred_check_branch
      %232 = sbr.rel (%p229) target = $region32
    $region31: #{pointgen_forward.4} parent=5 // pred_region
      %s233 = ssub.s32 %s12, 1
      %s234 = sadd.s32 %s23, %s24
      %p235 = scmp.lt.s32.totalorder %s22, 1
      %s236 = scalar_select %p235, %s22, 1
      %p237 = scmp.lt.s32.totalorder %s234, 0
      %s238 = scalar_select %p237, %s234, 0
      %s239 = smul.addr %s236, 32
      %s240 = sadd.s32 %s238, %s239
      %s241 = smul.addr %s240, 8
      %s242 = scalar_lea.vmem %s0, %s241
      %p243 = pneg %p61
      %p244 = pneg %p58
      %p245 = pneg %p82
      %p246 = pneg %p79
      %p247 = pneg %p103
      %p248 = pneg %p100
      %p249 = pneg %p133
      %p250 = pneg %p130
      %s251 = sadd.s32 %s23, %s24
      %p252 = scmp.lt.s32.totalorder %s22, 1
      %s253 = scalar_select %p252, %s22, 1
      %p254 = scmp.lt.s32.totalorder %s251, 0
      %s255 = scalar_select %p254, %s251, 0
      %s256 = smul.addr %s253, 32
      %s257 = sadd.s32 %s255, %s256
      %s258 = smul.addr %s257, 4
      %s259 = scalar_lea.vmem %s3, %s258
      %p260 = pneg %p161
      %p261 = pneg %p158
      %s262 = sadd.s32 %s22, %s23
      %p263 = scmp.lt.s32.totalorder %s262, 1
      %s264 = scalar_select %p263, %s262, 1
      %s265 = smul.addr %s264, 32
      %s266 = smul.addr %s265, 8
      %s267 = scalar_lea.vmem %s4, %s266
      %p268 = pneg %p189
      %p269 = pneg %p186
      %s270 = sadd.s32 %s22, %s23
      %p271 = scmp.lt.s32.totalorder %s270, 1
      %s272 = scalar_select %p271, %s270, 1
      %s273 = smul.addr %s272, 32
      %s274 = smul.addr %s273, 8
      %s275 = scalar_lea.vmem %s5, %s274
      %s276 = sadd.s32 %s23, %s24
      %p277 = scmp.lt.s32.totalorder %s22, 1
      %s278 = scalar_select %p277, %s22, 1
      %p279 = scmp.lt.s32.totalorder %s276, 0
      %s280 = scalar_select %p279, %s276, 0
      %s281 = smul.addr %s278, 32
      %s282 = sadd.s32 %s280, %s281
      %s283 = smul.addr %s282, 8
      %s284 = scalar_lea.vmem %s0, %s283
      %s285 = sadd.s32 %s23, %s24
      %s286 = sadd.s32 %s23, %s24
      %p287 = scmp.lt.s32.totalorder %s22, 1
      %s288 = scalar_select %p287, %s22, 1
      %p289 = scmp.lt.s32.totalorder %s286, 0
      %s290 = scalar_select %p289, %s286, 0
      %s291 = smul.addr %s288, 32
      %s292 = sadd.s32 %s290, %s291
      %s293 = smul.addr %s292, 4
      %s294 = scalar_lea.vmem %s3, %s293
      %s295 = sadd.s32 %s23, %s24
      %s296 = sadd.s32 %s22, %s23
      %p297 = scmp.lt.s32.totalorder %s296, 1
      %s298 = scalar_select %p297, %s296, 1
      %s299 = smul.addr %s298, 32
      %s300 = smul.addr %s299, 8
      %s301 = scalar_lea.vmem %s4, %s300
      %s302 = sadd.s32 %s22, %s23
      %s303 = sadd.s32 %s22, %s23
      %p304 = scmp.lt.s32.totalorder %s303, 1
      %s305 = scalar_select %p304, %s303, 1
      %s306 = smul.addr %s305, 32
      %s307 = smul.addr %s306, 8
      %s308 = scalar_lea.vmem %s5, %s307
      %s309 = sadd.s32 %s22, %s23
      %v311 = vld [vmem:[%s1] sm:$0xff]
      %v312 = vld [vmem:[%s1 + $0x8] sm:$0xff]
      %v313 = vld [vmem:[%s1 + $0x10] sm:$0xff]
      %v314 = vld [vmem:[%s1 + $0x18] sm:$0xff]
      %v315 = vld [vmem:[%s1 + $0x20] sm:$0xff]
      %v316 = vld [vmem:[%s1 + $0x28] sm:$0xff]
      %v317 = vld [vmem:[%s1 + $0x30] sm:$0xff]
      %v318 = vld [vmem:[%s1 + $0x38] sm:$0xff]
      %v319 = vld [vmem:[%s1 + $0x40] sm:$0xff]
      %v320 = vld [vmem:[%s1 + $0x48] sm:$0xff]
      %v321 = vld [vmem:[%s1 + $0x50] sm:$0xff]
      %v322 = vld [vmem:[%s1 + $0x58] sm:$0xff]
      %v323 = vld [vmem:[%s1 + $0x60] sm:$0xff]
      %v324 = vld [vmem:[%s1 + $0x68] sm:$0xff]
      %v325 = vld [vmem:[%s1 + $0x70] sm:$0xff]
      %v326 = vld [vmem:[%s1 + $0x78] sm:$0xff]
      %v327 = vld [vmem:[%s1 + $0x80] sm:$0xff]
      %v328 = vld [vmem:[%s1 + $0x88] sm:$0xff]
      %v329 = vld [vmem:[%s1 + $0x90] sm:$0xff]
      %v330 = vld [vmem:[%s1 + $0x98] sm:$0xff]
      %v331 = vld [vmem:[%s1 + $0xa0] sm:$0xff]
      %v332 = vld [vmem:[%s1 + $0xa8] sm:$0xff]
      %v333 = vld [vmem:[%s1 + $0xb0] sm:$0xff]
      %v334 = vld [vmem:[%s1 + $0xb8] sm:$0xff]
      %v335 = vld [vmem:[%s1 + $0xc0] sm:$0xff]
      %v336 = vld [vmem:[%s1 + $0xc8] sm:$0xff]
      %v337 = vld [vmem:[%s1 + $0xd0] sm:$0xff]
      %v338 = vld [vmem:[%s1 + $0xd8] sm:$0xff]
      %v339 = vld [vmem:[%s1 + $0xe0] sm:$0xff]
      %v340 = vld [vmem:[%s1 + $0xe8] sm:$0xff]
      %v341 = vld [vmem:[%s1 + $0xf0] sm:$0xff]
      %v342 = vld [vmem:[%s1 + $0xf8] sm:$0xff]
      %v343 = vld [vmem:[%s284] sm:$0xff]
      %v344 = vld [vmem:[%s284 + $0x8] sm:$0xff]
      %v345 = vld [vmem:[%s284 + $0x10] sm:$0xff]
      %v346 = vld [vmem:[%s284 + $0x18] sm:$0xff]
      %v347 = vld [vmem:[%s284 + $0x20] sm:$0xff]
      %v348 = vld [vmem:[%s284 + $0x28] sm:$0xff]
      %v349 = vld [vmem:[%s284 + $0x30] sm:$0xff]
      %v350 = vld [vmem:[%s284 + $0x38] sm:$0xff]
      %v351 = vld [vmem:[%s284 + $0x40] sm:$0xff]
      %v352 = vld [vmem:[%s284 + $0x48] sm:$0xff]
      %v353 = vld [vmem:[%s284 + $0x50] sm:$0xff]
      %v354 = vld [vmem:[%s284 + $0x58] sm:$0xff]
      %v355 = vld [vmem:[%s284 + $0x60] sm:$0xff]
      %v356 = vld [vmem:[%s284 + $0x68] sm:$0xff]
      %v357 = vld [vmem:[%s284 + $0x70] sm:$0xff]
      %v358 = vld [vmem:[%s284 + $0x78] sm:$0xff]
      %v359 = vld [vmem:[%s284 + $0x80] sm:$0xff]
      %v360 = vld [vmem:[%s284 + $0x88] sm:$0xff]
      %v361 = vld [vmem:[%s284 + $0x90] sm:$0xff]
      %v362 = vld [vmem:[%s284 + $0x98] sm:$0xff]
      %v363 = vld [vmem:[%s284 + $0xa0] sm:$0xff]
      %v364 = vld [vmem:[%s284 + $0xa8] sm:$0xff]
      %v365 = vld [vmem:[%s284 + $0xb0] sm:$0xff]
      %v366 = vld [vmem:[%s284 + $0xb8] sm:$0xff]
      %v367 = vld [vmem:[%s284 + $0xc0] sm:$0xff]
      %v368 = vld [vmem:[%s284 + $0xc8] sm:$0xff]
      %v369 = vld [vmem:[%s284 + $0xd0] sm:$0xff]
      %v370 = vld [vmem:[%s284 + $0xd8] sm:$0xff]
      %v371 = vld [vmem:[%s284 + $0xe0] sm:$0xff]
      %v372 = vld [vmem:[%s284 + $0xe8] sm:$0xff]
      %v373 = vld [vmem:[%s284 + $0xf0] sm:$0xff]
      %v374 = vld [vmem:[%s284 + $0xf8] sm:$0xff]
      %v375 = vpack.c.bf16 %v344, %v343
      %v376 = vpack.c.bf16 %v346, %v345
      %v377 = vpack.c.bf16 %v348, %v347
      %v378 = vpack.c.bf16 %v350, %v349
      %v379 = vpack.c.bf16 %v352, %v351
      %v380 = vpack.c.bf16 %v354, %v353
      %v381 = vpack.c.bf16 %v356, %v355
      %v382 = vpack.c.bf16 %v358, %v357
      %v383 = vpack.c.bf16 %v360, %v359
      %v384 = vpack.c.bf16 %v362, %v361
      %v385 = vpack.c.bf16 %v364, %v363
      %v386 = vpack.c.bf16 %v366, %v365
      %v387 = vpack.c.bf16 %v368, %v367
      %v388 = vpack.c.bf16 %v370, %v369
      %v389 = vpack.c.bf16 %v372, %v371
      %v390 = vpack.c.bf16 %v374, %v373
      %v391 = vld [vmem:[%s2] sm:$0xff]
      %v392 = vld [vmem:[%s2 + $0x8] sm:$0xff]
      %v393 = vld [vmem:[%s2 + $0x10] sm:$0xff]
      %v394 = vld [vmem:[%s2 + $0x18] sm:$0xff]
      %v395 = vld [vmem:[%s2 + $0x20] sm:$0xff]
      %v396 = vld [vmem:[%s2 + $0x28] sm:$0xff]
      %v397 = vld [vmem:[%s2 + $0x30] sm:$0xff]
      %v398 = vld [vmem:[%s2 + $0x38] sm:$0xff]
      %v399 = vld [vmem:[%s2 + $0x40] sm:$0xff]
      %v400 = vld [vmem:[%s2 + $0x48] sm:$0xff]
      %v401 = vld [vmem:[%s2 + $0x50] sm:$0xff]
      %v402 = vld [vmem:[%s2 + $0x58] sm:$0xff]
      %v403 = vld [vmem:[%s2 + $0x60] sm:$0xff]
      %v404 = vld [vmem:[%s2 + $0x68] sm:$0xff]
      %v405 = vld [vmem:[%s2 + $0x70] sm:$0xff]
      %v406 = vld [vmem:[%s2 + $0x78] sm:$0xff]
      %v407 = vld [vmem:[%s2 + $0x80] sm:$0xff]
      %v408 = vld [vmem:[%s2 + $0x88] sm:$0xff]
      %v409 = vld [vmem:[%s2 + $0x90] sm:$0xff]
      %v410 = vld [vmem:[%s2 + $0x98] sm:$0xff]
      %v411 = vld [vmem:[%s2 + $0xa0] sm:$0xff]
      %v412 = vld [vmem:[%s2 + $0xa8] sm:$0xff]
      %v413 = vld [vmem:[%s2 + $0xb0] sm:$0xff]
      %v414 = vld [vmem:[%s2 + $0xb8] sm:$0xff]
      %v415 = vld [vmem:[%s2 + $0xc0] sm:$0xff]
      %v416 = vld [vmem:[%s2 + $0xc8] sm:$0xff]
      %v417 = vld [vmem:[%s2 + $0xd0] sm:$0xff]
      %v418 = vld [vmem:[%s2 + $0xd8] sm:$0xff]
      %v419 = vld [vmem:[%s2 + $0xe0] sm:$0xff]
      %v420 = vld [vmem:[%s2 + $0xe8] sm:$0xff]
      %v421 = vld [vmem:[%s2 + $0xf0] sm:$0xff]
      %v422 = vld [vmem:[%s2 + $0xf8] sm:$0xff]
      %424 = vset.pattern.permute.xlu0 0
      %425 = vperm.xlu0 %424, %v391
      %v426 = vpop.permute.xlu0 %425
      %429 = vset.pattern.permute.xlu0 0
      %430 = vperm.xlu0 %429, %v392
      %v431 = vpop.permute.xlu0 %430
      %434 = vset.pattern.permute.xlu0 0
      %435 = vperm.xlu0 %434, %v393
      %v436 = vpop.permute.xlu0 %435
      %439 = vset.pattern.permute.xlu0 0
      %440 = vperm.xlu0 %439, %v394
      %v441 = vpop.permute.xlu0 %440
      %444 = vset.pattern.permute.xlu0 0
      %445 = vperm.xlu0 %444, %v395
      %v446 = vpop.permute.xlu0 %445
      %449 = vset.pattern.permute.xlu0 0
      %450 = vperm.xlu0 %449, %v396
      %v451 = vpop.permute.xlu0 %450
      %454 = vset.pattern.permute.xlu0 0
      %455 = vperm.xlu0 %454, %v397
      %v456 = vpop.permute.xlu0 %455
      %459 = vset.pattern.permute.xlu0 0
      %460 = vperm.xlu0 %459, %v398
      %v461 = vpop.permute.xlu0 %460
      %464 = vset.pattern.permute.xlu0 0
      %465 = vperm.xlu0 %464, %v399
      %v466 = vpop.permute.xlu0 %465
      %469 = vset.pattern.permute.xlu0 0
      %470 = vperm.xlu0 %469, %v400
      %v471 = vpop.permute.xlu0 %470
      %474 = vset.pattern.permute.xlu0 0
      %475 = vperm.xlu0 %474, %v401
      %v476 = vpop.permute.xlu0 %475
      %479 = vset.pattern.permute.xlu0 0
      %480 = vperm.xlu0 %479, %v402
      %v481 = vpop.permute.xlu0 %480
      %484 = vset.pattern.permute.xlu0 0
      %485 = vperm.xlu0 %484, %v403
      %v486 = vpop.permute.xlu0 %485
      %489 = vset.pattern.permute.xlu0 0
      %490 = vperm.xlu0 %489, %v404
      %v491 = vpop.permute.xlu0 %490
      %494 = vset.pattern.permute.xlu0 0
      %495 = vperm.xlu0 %494, %v405
      %v496 = vpop.permute.xlu0 %495
      %499 = vset.pattern.permute.xlu0 0
      %500 = vperm.xlu0 %499, %v406
      %v501 = vpop.permute.xlu0 %500
      %504 = vset.pattern.permute.xlu0 0
      %505 = vperm.xlu0 %504, %v407
      %v506 = vpop.permute.xlu0 %505
      %509 = vset.pattern.permute.xlu0 0
      %510 = vperm.xlu0 %509, %v408
      %v511 = vpop.permute.xlu0 %510
      %514 = vset.pattern.permute.xlu0 0
      %515 = vperm.xlu0 %514, %v409
      %v516 = vpop.permute.xlu0 %515
      %519 = vset.pattern.permute.xlu0 0
      %520 = vperm.xlu0 %519, %v410
      %v521 = vpop.permute.xlu0 %520
      %524 = vset.pattern.permute.xlu0 0
      %525 = vperm.xlu0 %524, %v411
      %v526 = vpop.permute.xlu0 %525
      %529 = vset.pattern.permute.xlu0 0
      %530 = vperm.xlu0 %529, %v412
      %v531 = vpop.permute.xlu0 %530
      %534 = vset.pattern.permute.xlu0 0
      %535 = vperm.xlu0 %534, %v413
      %v536 = vpop.permute.xlu0 %535
      %539 = vset.pattern.permute.xlu0 0
      %540 = vperm.xlu0 %539, %v414
      %v541 = vpop.permute.xlu0 %540
      %544 = vset.pattern.permute.xlu0 0
      %545 = vperm.xlu0 %544, %v415
      %v546 = vpop.permute.xlu0 %545
      %549 = vset.pattern.permute.xlu0 0
      %550 = vperm.xlu0 %549, %v416
      %v551 = vpop.permute.xlu0 %550
      %554 = vset.pattern.permute.xlu0 0
      %555 = vperm.xlu0 %554, %v417
      %v556 = vpop.permute.xlu0 %555
      %559 = vset.pattern.permute.xlu0 0
      %560 = vperm.xlu0 %559, %v418
      %v561 = vpop.permute.xlu0 %560
      %564 = vset.pattern.permute.xlu0 0
      %565 = vperm.xlu0 %564, %v419
      %v566 = vpop.permute.xlu0 %565
      %569 = vset.pattern.permute.xlu0 0
      %570 = vperm.xlu0 %569, %v420
      %v571 = vpop.permute.xlu0 %570
      %574 = vset.pattern.permute.xlu0 0
      %575 = vperm.xlu0 %574, %v421
      %v576 = vpop.permute.xlu0 %575
      %579 = vset.pattern.permute.xlu0 0
      %580 = vperm.xlu0 %579, %v422
      %v581 = vpop.permute.xlu0 %580
      %v615 = vunpack.c.l.b16 %v311
      %v616 = vunpack.c.h.b16 %v311
      %v617 = vunpack.c.l.b16 %v312
      %v618 = vunpack.c.h.b16 %v312
      %v619 = vunpack.c.l.b16 %v313
      %v620 = vunpack.c.h.b16 %v313
      %v621 = vunpack.c.l.b16 %v314
      %v622 = vunpack.c.h.b16 %v314
      %v623 = vunpack.c.l.b16 %v315
      %v624 = vunpack.c.h.b16 %v315
      %v625 = vunpack.c.l.b16 %v316
      %v626 = vunpack.c.h.b16 %v316
      %v627 = vunpack.c.l.b16 %v317
      %v628 = vunpack.c.h.b16 %v317
      %v629 = vunpack.c.l.b16 %v318
      %v630 = vunpack.c.h.b16 %v318
      %v631 = vunpack.c.l.b16 %v319
      %v632 = vunpack.c.h.b16 %v319
      %v633 = vunpack.c.l.b16 %v320
      %v634 = vunpack.c.h.b16 %v320
      %v635 = vunpack.c.l.b16 %v321
      %v636 = vunpack.c.h.b16 %v321
      %v637 = vunpack.c.l.b16 %v322
      %v638 = vunpack.c.h.b16 %v322
      %v639 = vunpack.c.l.b16 %v323
      %v640 = vunpack.c.h.b16 %v323
      %v641 = vunpack.c.l.b16 %v324
      %v642 = vunpack.c.h.b16 %v324
      %v643 = vunpack.c.l.b16 %v325
      %v644 = vunpack.c.h.b16 %v325
      %v645 = vunpack.c.l.b16 %v326
      %v646 = vunpack.c.h.b16 %v326
      %v647 = vunpack.c.l.b16 %v327
      %v648 = vunpack.c.h.b16 %v327
      %v649 = vunpack.c.l.b16 %v328
      %v650 = vunpack.c.h.b16 %v328
      %v651 = vunpack.c.l.b16 %v329
      %v652 = vunpack.c.h.b16 %v329
      %v653 = vunpack.c.l.b16 %v330
      %v654 = vunpack.c.h.b16 %v330
      %v655 = vunpack.c.l.b16 %v331
      %v656 = vunpack.c.h.b16 %v331
      %v657 = vunpack.c.l.b16 %v332
      %v658 = vunpack.c.h.b16 %v332
      %v659 = vunpack.c.l.b16 %v333
      %v660 = vunpack.c.h.b16 %v333
      %v661 = vunpack.c.l.b16 %v334
      %v662 = vunpack.c.h.b16 %v334
      %v663 = vunpack.c.l.b16 %v335
      %v664 = vunpack.c.h.b16 %v335
      %v665 = vunpack.c.l.b16 %v336
      %v666 = vunpack.c.h.b16 %v336
      %v667 = vunpack.c.l.b16 %v337
      %v668 = vunpack.c.h.b16 %v337
      %v669 = vunpack.c.l.b16 %v338
      %v670 = vunpack.c.h.b16 %v338
      %v671 = vunpack.c.l.b16 %v339
      %v672 = vunpack.c.h.b16 %v339
      %v673 = vunpack.c.l.b16 %v340
      %v674 = vunpack.c.h.b16 %v340
      %v675 = vunpack.c.l.b16 %v341
      %v676 = vunpack.c.h.b16 %v341
      %v677 = vunpack.c.l.b16 %v342
      %v678 = vunpack.c.h.b16 %v342
      %v679 = vpack.c.b16 %v617, %v615
      %v680 = vpack.c.b16 %v618, %v616
      %v681 = vpack.c.b16 %v621, %v619
      %v682 = vpack.c.b16 %v622, %v620
      %v683 = vpack.c.b16 %v625, %v623
      %v684 = vpack.c.b16 %v626, %v624
      %v685 = vpack.c.b16 %v629, %v627
      %v686 = vpack.c.b16 %v630, %v628
      %v687 = vpack.c.b16 %v633, %v631
      %v688 = vpack.c.b16 %v634, %v632
      %v689 = vpack.c.b16 %v637, %v635
      %v690 = vpack.c.b16 %v638, %v636
      %v691 = vpack.c.b16 %v641, %v639
      %v692 = vpack.c.b16 %v642, %v640
      %v693 = vpack.c.b16 %v645, %v643
      %v694 = vpack.c.b16 %v646, %v644
      %v695 = vpack.c.b16 %v649, %v647
      %v696 = vpack.c.b16 %v650, %v648
      %v697 = vpack.c.b16 %v653, %v651
      %v698 = vpack.c.b16 %v654, %v652
      %v699 = vpack.c.b16 %v657, %v655
      %v700 = vpack.c.b16 %v658, %v656
      %v701 = vpack.c.b16 %v661, %v659
      %v702 = vpack.c.b16 %v662, %v660
      %v703 = vpack.c.b16 %v665, %v663
      %v704 = vpack.c.b16 %v666, %v664
      %v705 = vpack.c.b16 %v669, %v667
      %v706 = vpack.c.b16 %v670, %v668
      %v707 = vpack.c.b16 %v673, %v671
      %v708 = vpack.c.b16 %v674, %v672
      %v709 = vpack.c.b16 %v677, %v675
      %v710 = vpack.c.b16 %v678, %v676
      %743 = vmatprep.subr.bf16.mxu0 0
      %744 = vmatpush1.bf16.msra.mxu0 %v382
      %745 = vmatprep.subr.bf16.mxu0 0
      %746 = vmatpush1.bf16.msra.mxu0 %v381
      %747 = vmatprep.subr.bf16.mxu0 0
      %748 = vmatpush1.bf16.msra.mxu0 %v380
      %749 = vmatprep.subr.bf16.mxu0 0
      %750 = vmatpush1.bf16.msra.mxu0 %v379
      %751 = vmatprep.subr.bf16.mxu0 0
      %752 = vmatpush1.bf16.msra.mxu0 %v378
      %753 = vmatprep.subr.bf16.mxu0 0
      %754 = vmatpush1.bf16.msra.mxu0 %v377
      %755 = vmatprep.subr.bf16.mxu0 0
      %756 = vmatpush1.bf16.msra.mxu0 %v376
      %757 = vmatprep.subr.bf16.mxu0 0
      %758 = vmatpush1.bf16.msra.mxu0 %v375
      %759 = vmatprep.subr.bf16.mxu0 0
      %760 = vmatpush2.bf16.msra.mxu0 %v390
      %761 = vmatprep.subr.bf16.mxu0 0
      %762 = vmatpush2.bf16.msra.mxu0 %v389
      %763 = vmatprep.subr.bf16.mxu0 0
      %764 = vmatpush2.bf16.msra.mxu0 %v388
      %765 = vmatprep.subr.bf16.mxu0 0
      %766 = vmatpush2.bf16.msra.mxu0 %v387
      %767 = vmatprep.subr.bf16.mxu0 0
      %768 = vmatpush2.bf16.msra.mxu0 %v386
      %769 = vmatprep.subr.bf16.mxu0 0
      %770 = vmatpush2.bf16.msra.mxu0 %v385
      %771 = vmatprep.subr.bf16.mxu0 0
      %772 = vmatpush2.bf16.msra.mxu0 %v384
      %773 = vmatprep.subr.bf16.mxu0 0
      %774 = vmatpush2.bf16.msra.mxu0 %v383
      %775 = vmatprep.mubr.bf16.mxu0 %v680
      %776 = vmatmul.mubr.bf16.gmra.mxu0 %v679
      %v777 = vpop.f32.mrf.mxu0
      %v778 = vadd.f32 %v426, %v777
      %v779 = vpop.f32.mrf.mxu0
      %v780 = vpop.f32.mrf.mxu0
      %v781 = vadd.f32 %v431, %v780
      %v782 = vpop.f32.mrf.mxu0
      %783 = vmatprep.mubr.bf16.mxu0 %v682
      %784 = vmatmul.mubr.bf16.gmra.mxu0 %v681
      %v785 = vpop.f32.mrf.mxu0
      %v786 = vadd.f32 %v436, %v785
      %v787 = vpop.f32.mrf.mxu0
      %v788 = vpop.f32.mrf.mxu0
      %v789 = vadd.f32 %v441, %v788
      %v790 = vpop.f32.mrf.mxu0
      %791 = vmatprep.mubr.bf16.mxu0 %v684
      %792 = vmatmul.mubr.bf16.gmra.mxu0 %v683
      %v793 = vpop.f32.mrf.mxu0
      %v794 = vadd.f32 %v446, %v793
      %v795 = vpop.f32.mrf.mxu0
      %v796 = vpop.f32.mrf.mxu0
      %v797 = vadd.f32 %v451, %v796
      %v798 = vpop.f32.mrf.mxu0
      %799 = vmatprep.mubr.bf16.mxu0 %v686
      %800 = vmatmul.mubr.bf16.gmra.mxu0 %v685
      %v801 = vpop.f32.mrf.mxu0
      %v802 = vadd.f32 %v456, %v801
      %v803 = vpop.f32.mrf.mxu0
      %v804 = vpop.f32.mrf.mxu0
      %v805 = vadd.f32 %v461, %v804
      %v806 = vpop.f32.mrf.mxu0
      %807 = vmatprep.mubr.bf16.mxu0 %v688
      %808 = vmatmul.mubr.bf16.gmra.mxu0 %v687
      %v809 = vpop.f32.mrf.mxu0
      %v810 = vadd.f32 %v466, %v809
      %v811 = vpop.f32.mrf.mxu0
      %v812 = vpop.f32.mrf.mxu0
      %v813 = vadd.f32 %v471, %v812
      %v814 = vpop.f32.mrf.mxu0
      %815 = vmatprep.mubr.bf16.mxu0 %v690
      %816 = vmatmul.mubr.bf16.gmra.mxu0 %v689
      %v817 = vpop.f32.mrf.mxu0
      %v818 = vadd.f32 %v476, %v817
      %v819 = vpop.f32.mrf.mxu0
      %v820 = vpop.f32.mrf.mxu0
      %v821 = vadd.f32 %v481, %v820
      %v822 = vpop.f32.mrf.mxu0
      %823 = vmatprep.mubr.bf16.mxu0 %v692
      %824 = vmatmul.mubr.bf16.gmra.mxu0 %v691
      %v825 = vpop.f32.mrf.mxu0
      %v826 = vadd.f32 %v486, %v825
      %v827 = vpop.f32.mrf.mxu0
      %v828 = vpop.f32.mrf.mxu0
      %v829 = vadd.f32 %v491, %v828
      %v830 = vpop.f32.mrf.mxu0
      %831 = vmatprep.mubr.bf16.mxu0 %v694
      %832 = vmatmul.mubr.bf16.gmra.mxu0 %v693
      %v833 = vpop.f32.mrf.mxu0
      %v834 = vadd.f32 %v496, %v833
      %v835 = vpop.f32.mrf.mxu0
      %v836 = vpop.f32.mrf.mxu0
      %v837 = vadd.f32 %v501, %v836
      %v838 = vpop.f32.mrf.mxu0
      %839 = vmatprep.mubr.bf16.mxu0 %v696
      %840 = vmatmul.mubr.bf16.gmra.mxu0 %v695
      %v841 = vpop.f32.mrf.mxu0
      %v842 = vadd.f32 %v506, %v841
      %v843 = vpop.f32.mrf.mxu0
      %v844 = vpop.f32.mrf.mxu0
      %v845 = vadd.f32 %v511, %v844
      %v846 = vpop.f32.mrf.mxu0
      %847 = vmatprep.mubr.bf16.mxu0 %v698
      %848 = vmatmul.mubr.bf16.gmra.mxu0 %v697
      %v849 = vpop.f32.mrf.mxu0
      %v850 = vadd.f32 %v516, %v849
      %v851 = vpop.f32.mrf.mxu0
      %v852 = vpop.f32.mrf.mxu0
      %v853 = vadd.f32 %v521, %v852
      %v854 = vpop.f32.mrf.mxu0
      %855 = vmatprep.mubr.bf16.mxu0 %v700
      %856 = vmatmul.mubr.bf16.gmra.mxu0 %v699
      %v857 = vpop.f32.mrf.mxu0
      %v858 = vadd.f32 %v526, %v857
      %v859 = vpop.f32.mrf.mxu0
      %v860 = vpop.f32.mrf.mxu0
      %v861 = vadd.f32 %v531, %v860
      %v862 = vpop.f32.mrf.mxu0
      %863 = vmatprep.mubr.bf16.mxu0 %v702
      %864 = vmatmul.mubr.bf16.gmra.mxu0 %v701
      %v865 = vpop.f32.mrf.mxu0
      %v866 = vadd.f32 %v536, %v865
      %v867 = vpop.f32.mrf.mxu0
      %v868 = vpop.f32.mrf.mxu0
      %v869 = vadd.f32 %v541, %v868
      %v870 = vpop.f32.mrf.mxu0
      %871 = vmatprep.mubr.bf16.mxu0 %v704
      %872 = vmatmul.mubr.bf16.gmra.mxu0 %v703
      %v873 = vpop.f32.mrf.mxu0
      %v874 = vadd.f32 %v546, %v873
      %v875 = vpop.f32.mrf.mxu0
      %v876 = vpop.f32.mrf.mxu0
      %v877 = vadd.f32 %v551, %v876
      %v878 = vpop.f32.mrf.mxu0
      %879 = vmatprep.mubr.bf16.mxu0 %v706
      %880 = vmatmul.mubr.bf16.gmra.mxu0 %v705
      %v881 = vpop.f32.mrf.mxu0
      %v882 = vadd.f32 %v556, %v881
      %v883 = vpop.f32.mrf.mxu0
      %v884 = vpop.f32.mrf.mxu0
      %v885 = vadd.f32 %v561, %v884
      %v886 = vpop.f32.mrf.mxu0
      %887 = vmatprep.mubr.bf16.mxu0 %v708
      %888 = vmatmul.mubr.bf16.gmra.mxu0 %v707
      %v889 = vpop.f32.mrf.mxu0
      %v890 = vadd.f32 %v566, %v889
      %v891 = vpop.f32.mrf.mxu0
      %v892 = vpop.f32.mrf.mxu0
      %v893 = vadd.f32 %v571, %v892
      %v894 = vpop.f32.mrf.mxu0
      %895 = vmatprep.mubr.bf16.mxu0 %v710
      %896 = vmatmul.mubr.bf16.gmra.mxu0 %v709
      %v897 = vpop.f32.mrf.mxu0
      %v898 = vadd.f32 %v576, %v897
      %v899 = vpop.f32.mrf.mxu0
      %v900 = vpop.f32.mrf.mxu0
      %v901 = vadd.f32 %v581, %v900
      %v902 = vpop.f32.mrf.mxu0
      %903 = vdwg.mxu0
      %p904 = scmp.eq.s32.totalorder %s24, 0
      // Predicated region
      $region33: #{pointgen_forward.4} parent=31 // pred_check
        %p905 = pneg %p904
      $region34: #{pointgen_forward.4} parent=31 // pred_check_branch
        %907 = sbr.rel (%p905) target = $region36
      $region35: #{pointgen_forward.4} parent=31 // pred_region
        %vm908 = vcmask 7168
        %909 = vst.msk [vmem:[%s301] sm:$0xff] %vm908, 0.0
        %910 = vst.msk [vmem:[%s301 + $0x8] sm:$0xff] %vm908, 0.0
        %911 = vst.msk [vmem:[%s301 + $0x10] sm:$0xff] %vm908, 0.0
        %912 = vst.msk [vmem:[%s301 + $0x18] sm:$0xff] %vm908, 0.0
        %913 = vst.msk [vmem:[%s301 + $0x20] sm:$0xff] %vm908, 0.0
        %914 = vst.msk [vmem:[%s301 + $0x28] sm:$0xff] %vm908, 0.0
        %915 = vst.msk [vmem:[%s301 + $0x30] sm:$0xff] %vm908, 0.0
        %916 = vst.msk [vmem:[%s301 + $0x38] sm:$0xff] %vm908, 0.0
        %917 = vst.msk [vmem:[%s301 + $0x40] sm:$0xff] %vm908, 0.0
        %918 = vst.msk [vmem:[%s301 + $0x48] sm:$0xff] %vm908, 0.0
        %919 = vst.msk [vmem:[%s301 + $0x50] sm:$0xff] %vm908, 0.0
        %920 = vst.msk [vmem:[%s301 + $0x58] sm:$0xff] %vm908, 0.0
        %921 = vst.msk [vmem:[%s301 + $0x60] sm:$0xff] %vm908, 0.0
        %922 = vst.msk [vmem:[%s301 + $0x68] sm:$0xff] %vm908, 0.0
        %923 = vst.msk [vmem:[%s301 + $0x70] sm:$0xff] %vm908, 0.0
        %924 = vst.msk [vmem:[%s301 + $0x78] sm:$0xff] %vm908, 0.0
        %925 = vst.msk [vmem:[%s301 + $0x80] sm:$0xff] %vm908, 0.0
        %926 = vst.msk [vmem:[%s301 + $0x88] sm:$0xff] %vm908, 0.0
        %927 = vst.msk [vmem:[%s301 + $0x90] sm:$0xff] %vm908, 0.0
        %928 = vst.msk [vmem:[%s301 + $0x98] sm:$0xff] %vm908, 0.0
        %929 = vst.msk [vmem:[%s301 + $0xa0] sm:$0xff] %vm908, 0.0
        %930 = vst.msk [vmem:[%s301 + $0xa8] sm:$0xff] %vm908, 0.0
        %931 = vst.msk [vmem:[%s301 + $0xb0] sm:$0xff] %vm908, 0.0
        %932 = vst.msk [vmem:[%s301 + $0xb8] sm:$0xff] %vm908, 0.0
        %933 = vst.msk [vmem:[%s301 + $0xc0] sm:$0xff] %vm908, 0.0
        %934 = vst.msk [vmem:[%s301 + $0xc8] sm:$0xff] %vm908, 0.0
        %935 = vst.msk [vmem:[%s301 + $0xd0] sm:$0xff] %vm908, 0.0
        %936 = vst.msk [vmem:[%s301 + $0xd8] sm:$0xff] %vm908, 0.0
        %937 = vst.msk [vmem:[%s301 + $0xe0] sm:$0xff] %vm908, 0.0
        %938 = vst.msk [vmem:[%s301 + $0xe8] sm:$0xff] %vm908, 0.0
        %939 = vst.msk [vmem:[%s301 + $0xf0] sm:$0xff] %vm908, 0.0
        %940 = vst.msk [vmem:[%s301 + $0xf8] sm:$0xff] %vm908, 0.0
        %941 = vst.msk [vmem:[%s308] sm:$0xff] %vm908, 0.0
        %942 = vst.msk [vmem:[%s308 + $0x8] sm:$0xff] %vm908, 0.0
        %943 = vst.msk [vmem:[%s308 + $0x10] sm:$0xff] %vm908, 0.0
        %944 = vst.msk [vmem:[%s308 + $0x18] sm:$0xff] %vm908, 0.0
        %945 = vst.msk [vmem:[%s308 + $0x20] sm:$0xff] %vm908, 0.0
        %946 = vst.msk [vmem:[%s308 + $0x28] sm:$0xff] %vm908, 0.0
        %947 = vst.msk [vmem:[%s308 + $0x30] sm:$0xff] %vm908, 0.0
        %948 = vst.msk [vmem:[%s308 + $0x38] sm:$0xff] %vm908, 0.0
        %949 = vst.msk [vmem:[%s308 + $0x40] sm:$0xff] %vm908, 0.0
        %950 = vst.msk [vmem:[%s308 + $0x48] sm:$0xff] %vm908, 0.0
        %951 = vst.msk [vmem:[%s308 + $0x50] sm:$0xff] %vm908, 0.0
        %952 = vst.msk [vmem:[%s308 + $0x58] sm:$0xff] %vm908, 0.0
        %953 = vst.msk [vmem:[%s308 + $0x60] sm:$0xff] %vm908, 0.0
        %954 = vst.msk [vmem:[%s308 + $0x68] sm:$0xff] %vm908, 0.0
        %955 = vst.msk [vmem:[%s308 + $0x70] sm:$0xff] %vm908, 0.0
        %956 = vst.msk [vmem:[%s308 + $0x78] sm:$0xff] %vm908, 0.0
        %957 = vst.msk [vmem:[%s308 + $0x80] sm:$0xff] %vm908, 0.0
        %958 = vst.msk [vmem:[%s308 + $0x88] sm:$0xff] %vm908, 0.0
        %959 = vst.msk [vmem:[%s308 + $0x90] sm:$0xff] %vm908, 0.0
        %960 = vst.msk [vmem:[%s308 + $0x98] sm:$0xff] %vm908, 0.0
        %961 = vst.msk [vmem:[%s308 + $0xa0] sm:$0xff] %vm908, 0.0
        %962 = vst.msk [vmem:[%s308 + $0xa8] sm:$0xff] %vm908, 0.0
        %963 = vst.msk [vmem:[%s308 + $0xb0] sm:$0xff] %vm908, 0.0
        %964 = vst.msk [vmem:[%s308 + $0xb8] sm:$0xff] %vm908, 0.0
        %965 = vst.msk [vmem:[%s308 + $0xc0] sm:$0xff] %vm908, 0.0
        %966 = vst.msk [vmem:[%s308 + $0xc8] sm:$0xff] %vm908, 0.0
        %967 = vst.msk [vmem:[%s308 + $0xd0] sm:$0xff] %vm908, 0.0
        %968 = vst.msk [vmem:[%s308 + $0xd8] sm:$0xff] %vm908, 0.0
        %969 = vst.msk [vmem:[%s308 + $0xe0] sm:$0xff] %vm908, 0.0
        %970 = vst.msk [vmem:[%s308 + $0xe8] sm:$0xff] %vm908, 0.0
        %971 = vst.msk [vmem:[%s308 + $0xf0] sm:$0xff] %vm908, 0.0
        %972 = vst.msk [vmem:[%s308 + $0xf8] sm:$0xff] %vm908, 0.0
      $region36: #{pointgen_forward.4} parent=31 // pred_fallthru
        _
      %v973 = vld [vmem:[%s301] sm:$0xff]
      %v974 = vld [vmem:[%s301 + $0x8] sm:$0xff]
      %v975 = vld [vmem:[%s301 + $0x10] sm:$0xff]
      %v976 = vld [vmem:[%s301 + $0x18] sm:$0xff]
      %v977 = vld [vmem:[%s301 + $0x20] sm:$0xff]
      %v978 = vld [vmem:[%s301 + $0x28] sm:$0xff]
      %v979 = vld [vmem:[%s301 + $0x30] sm:$0xff]
      %v980 = vld [vmem:[%s301 + $0x38] sm:$0xff]
      %v981 = vld [vmem:[%s301 + $0x40] sm:$0xff]
      %v982 = vld [vmem:[%s301 + $0x48] sm:$0xff]
      %v983 = vld [vmem:[%s301 + $0x50] sm:$0xff]
      %v984 = vld [vmem:[%s301 + $0x58] sm:$0xff]
      %v985 = vld [vmem:[%s301 + $0x60] sm:$0xff]
      %v986 = vld [vmem:[%s301 + $0x68] sm:$0xff]
      %v987 = vld [vmem:[%s301 + $0x70] sm:$0xff]
      %v988 = vld [vmem:[%s301 + $0x78] sm:$0xff]
      %v989 = vld [vmem:[%s301 + $0x80] sm:$0xff]
      %v990 = vld [vmem:[%s301 + $0x88] sm:$0xff]
      %v991 = vld [vmem:[%s301 + $0x90] sm:$0xff]
      %v992 = vld [vmem:[%s301 + $0x98] sm:$0xff]
      %v993 = vld [vmem:[%s301 + $0xa0] sm:$0xff]
      %v994 = vld [vmem:[%s301 + $0xa8] sm:$0xff]
      %v995 = vld [vmem:[%s301 + $0xb0] sm:$0xff]
      %v996 = vld [vmem:[%s301 + $0xb8] sm:$0xff]
      %v997 = vld [vmem:[%s301 + $0xc0] sm:$0xff]
      %v998 = vld [vmem:[%s301 + $0xc8] sm:$0xff]
      %v999 = vld [vmem:[%s301 + $0xd0] sm:$0xff]
      %v1000 = vld [vmem:[%s301 + $0xd8] sm:$0xff]
      %v1001 = vld [vmem:[%s301 + $0xe0] sm:$0xff]
      %v1002 = vld [vmem:[%s301 + $0xe8] sm:$0xff]
      %v1003 = vld [vmem:[%s301 + $0xf0] sm:$0xff]
      %v1004 = vld [vmem:[%s301 + $0xf8] sm:$0xff]
      %vm1005 = vcmask 130048
      %v1006 = vsel %vm1005, %v778, 0.0
      %1007 = vadd.xlane.f32.xlu0 %v1006
      %v1008 = vpop.xlane.xlu0 %1007
      %v1009 = vsel %vm1005, %v781, 0.0
      %1010 = vadd.xlane.f32.xlu0 %v1009
      %v1011 = vpop.xlane.xlu0 %1010
      %v1012 = vsel %vm1005, %v786, 0.0
      %1013 = vadd.xlane.f32.xlu0 %v1012
      %v1014 = vpop.xlane.xlu0 %1013
      %v1015 = vsel %vm1005, %v789, 0.0
      %1016 = vadd.xlane.f32.xlu0 %v1015
      %v1017 = vpop.xlane.xlu0 %1016
      %v1018 = vsel %vm1005, %v794, 0.0
      %1019 = vadd.xlane.f32.xlu0 %v1018
      %v1020 = vpop.xlane.xlu0 %1019
      %v1021 = vsel %vm1005, %v797, 0.0
      %1022 = vadd.xlane.f32.xlu0 %v1021
      %v1023 = vpop.xlane.xlu0 %1022
      %v1024 = vsel %vm1005, %v802, 0.0
      %1025 = vadd.xlane.f32.xlu0 %v1024
      %v1026 = vpop.xlane.xlu0 %1025
      %v1027 = vsel %vm1005, %v805, 0.0
      %1028 = vadd.xlane.f32.xlu0 %v1027
      %v1029 = vpop.xlane.xlu0 %1028
      %v1030 = vsel %vm1005, %v810, 0.0
      %1031 = vadd.xlane.f32.xlu0 %v1030
      %v1032 = vpop.xlane.xlu0 %1031
      %v1033 = vsel %vm1005, %v813, 0.0
      %1034 = vadd.xlane.f32.xlu0 %v1033
      %v1035 = vpop.xlane.xlu0 %1034
      %v1036 = vsel %vm1005, %v818, 0.0
      %1037 = vadd.xlane.f32.xlu0 %v1036
      %v1038 = vpop.xlane.xlu0 %1037
      %v1039 = vsel %vm1005, %v821, 0.0
      %1040 = vadd.xlane.f32.xlu0 %v1039
      %v1041 = vpop.xlane.xlu0 %1040
      %v1042 = vsel %vm1005, %v826, 0.0
      %1043 = vadd.xlane.f32.xlu0 %v1042
      %v1044 = vpop.xlane.xlu0 %1043
      %v1045 = vsel %vm1005, %v829, 0.0
      %1046 = vadd.xlane.f32.xlu0 %v1045
      %v1047 = vpop.xlane.xlu0 %1046
      %v1048 = vsel %vm1005, %v834, 0.0
      %1049 = vadd.xlane.f32.xlu0 %v1048
      %v1050 = vpop.xlane.xlu0 %1049
      %v1051 = vsel %vm1005, %v837, 0.0
      %1052 = vadd.xlane.f32.xlu0 %v1051
      %v1053 = vpop.xlane.xlu0 %1052
      %v1054 = vsel %vm1005, %v842, 0.0
      %1055 = vadd.xlane.f32.xlu0 %v1054
      %v1056 = vpop.xlane.xlu0 %1055
      %v1057 = vsel %vm1005, %v845, 0.0
      %1058 = vadd.xlane.f32.xlu0 %v1057
      %v1059 = vpop.xlane.xlu0 %1058
      %v1060 = vsel %vm1005, %v850, 0.0
      %1061 = vadd.xlane.f32.xlu0 %v1060
      %v1062 = vpop.xlane.xlu0 %1061
      %v1063 = vsel %vm1005, %v853, 0.0
      %1064 = vadd.xlane.f32.xlu0 %v1063
      %v1065 = vpop.xlane.xlu0 %1064
      %v1066 = vsel %vm1005, %v858, 0.0
      %1067 = vadd.xlane.f32.xlu0 %v1066
      %v1068 = vpop.xlane.xlu0 %1067
      %v1069 = vsel %vm1005, %v861, 0.0
      %1070 = vadd.xlane.f32.xlu0 %v1069
      %v1071 = vpop.xlane.xlu0 %1070
      %v1072 = vsel %vm1005, %v866, 0.0
      %1073 = vadd.xlane.f32.xlu0 %v1072
      %v1074 = vpop.xlane.xlu0 %1073
      %v1075 = vsel %vm1005, %v869, 0.0
      %1076 = vadd.xlane.f32.xlu0 %v1075
      %v1077 = vpop.xlane.xlu0 %1076
      %v1078 = vsel %vm1005, %v874, 0.0
      %1079 = vadd.xlane.f32.xlu0 %v1078
      %v1080 = vpop.xlane.xlu0 %1079
      %v1081 = vsel %vm1005, %v877, 0.0
      %1082 = vadd.xlane.f32.xlu0 %v1081
      %v1083 = vpop.xlane.xlu0 %1082
      %v1084 = vsel %vm1005, %v882, 0.0
      %1085 = vadd.xlane.f32.xlu0 %v1084
      %v1086 = vpop.xlane.xlu0 %1085
      %v1087 = vsel %vm1005, %v885, 0.0
      %1088 = vadd.xlane.f32.xlu0 %v1087
      %v1089 = vpop.xlane.xlu0 %1088
      %v1090 = vsel %vm1005, %v890, 0.0
      %1091 = vadd.xlane.f32.xlu0 %v1090
      %v1092 = vpop.xlane.xlu0 %1091
      %v1093 = vsel %vm1005, %v893, 0.0
      %1094 = vadd.xlane.f32.xlu0 %v1093
      %v1095 = vpop.xlane.xlu0 %1094
      %v1096 = vsel %vm1005, %v898, 0.0
      %1097 = vadd.xlane.f32.xlu0 %v1096
      %v1098 = vpop.xlane.xlu0 %1097
      %v1099 = vsel %vm1005, %v901, 0.0
      %1100 = vadd.xlane.f32.xlu0 %v1099
      %v1101 = vpop.xlane.xlu0 %1100
      %v1102 = vadd.f32 %v973, %v1008
      %v1103 = vadd.f32 %v974, %v1011
      %v1104 = vadd.f32 %v975, %v1014
      %v1105 = vadd.f32 %v976, %v1017
      %v1106 = vadd.f32 %v977, %v1020
      %v1107 = vadd.f32 %v978, %v1023
      %v1108 = vadd.f32 %v979, %v1026
      %v1109 = vadd.f32 %v980, %v1029
      %v1110 = vadd.f32 %v981, %v1032
      %v1111 = vadd.f32 %v982, %v1035
      %v1112 = vadd.f32 %v983, %v1038
      %v1113 = vadd.f32 %v984, %v1041
      %v1114 = vadd.f32 %v985, %v1044
      %v1115 = vadd.f32 %v986, %v1047
      %v1116 = vadd.f32 %v987, %v1050
      %v1117 = vadd.f32 %v988, %v1053
      %v1118 = vadd.f32 %v989, %v1056
      %v1119 = vadd.f32 %v990, %v1059
      %v1120 = vadd.f32 %v991, %v1062
      %v1121 = vadd.f32 %v992, %v1065
      %v1122 = vadd.f32 %v993, %v1068
      %v1123 = vadd.f32 %v994, %v1071
      %v1124 = vadd.f32 %v995, %v1074
      %v1125 = vadd.f32 %v996, %v1077
      %v1126 = vadd.f32 %v997, %v1080
      %v1127 = vadd.f32 %v998, %v1083
      %v1128 = vadd.f32 %v999, %v1086
      %v1129 = vadd.f32 %v1000, %v1089
      %v1130 = vadd.f32 %v1001, %v1092
      %v1131 = vadd.f32 %v1002, %v1095
      %v1132 = vadd.f32 %v1003, %v1098
      %v1133 = vadd.f32 %v1004, %v1101
      %vm1134 = vcmask 7168
      %1135 = vst.msk [vmem:[%s301] sm:$0xff] %vm1134, %v1102
      %1136 = vst.msk [vmem:[%s301 + $0x8] sm:$0xff] %vm1134, %v1103
      %1137 = vst.msk [vmem:[%s301 + $0x10] sm:$0xff] %vm1134, %v1104
      %1138 = vst.msk [vmem:[%s301 + $0x18] sm:$0xff] %vm1134, %v1105
      %1139 = vst.msk [vmem:[%s301 + $0x20] sm:$0xff] %vm1134, %v1106
      %1140 = vst.msk [vmem:[%s301 + $0x28] sm:$0xff] %vm1134, %v1107
      %1141 = vst.msk [vmem:[%s301 + $0x30] sm:$0xff] %vm1134, %v1108
      %1142 = vst.msk [vmem:[%s301 + $0x38] sm:$0xff] %vm1134, %v1109
      %1143 = vst.msk [vmem:[%s301 + $0x40] sm:$0xff] %vm1134, %v1110
      %1144 = vst.msk [vmem:[%s301 + $0x48] sm:$0xff] %vm1134, %v1111
      %1145 = vst.msk [vmem:[%s301 + $0x50] sm:$0xff] %vm1134, %v1112
      %1146 = vst.msk [vmem:[%s301 + $0x58] sm:$0xff] %vm1134, %v1113
      %1147 = vst.msk [vmem:[%s301 + $0x60] sm:$0xff] %vm1134, %v1114
      %1148 = vst.msk [vmem:[%s301 + $0x68] sm:$0xff] %vm1134, %v1115
      %1149 = vst.msk [vmem:[%s301 + $0x70] sm:$0xff] %vm1134, %v1116
      %1150 = vst.msk [vmem:[%s301 + $0x78] sm:$0xff] %vm1134, %v1117
      %1151 = vst.msk [vmem:[%s301 + $0x80] sm:$0xff] %vm1134, %v1118
      %1152 = vst.msk [vmem:[%s301 + $0x88] sm:$0xff] %vm1134, %v1119
      %1153 = vst.msk [vmem:[%s301 + $0x90] sm:$0xff] %vm1134, %v1120
      %1154 = vst.msk [vmem:[%s301 + $0x98] sm:$0xff] %vm1134, %v1121
      %1155 = vst.msk [vmem:[%s301 + $0xa0] sm:$0xff] %vm1134, %v1122
      %1156 = vst.msk [vmem:[%s301 + $0xa8] sm:$0xff] %vm1134, %v1123
      %1157 = vst.msk [vmem:[%s301 + $0xb0] sm:$0xff] %vm1134, %v1124
      %1158 = vst.msk [vmem:[%s301 + $0xb8] sm:$0xff] %vm1134, %v1125
      %1159 = vst.msk [vmem:[%s301 + $0xc0] sm:$0xff] %vm1134, %v1126
      %1160 = vst.msk [vmem:[%s301 + $0xc8] sm:$0xff] %vm1134, %v1127
      %1161 = vst.msk [vmem:[%s301 + $0xd0] sm:$0xff] %vm1134, %v1128
      %1162 = vst.msk [vmem:[%s301 + $0xd8] sm:$0xff] %vm1134, %v1129
      %1163 = vst.msk [vmem:[%s301 + $0xe0] sm:$0xff] %vm1134, %v1130
      %1164 = vst.msk [vmem:[%s301 + $0xe8] sm:$0xff] %vm1134, %v1131
      %1165 = vst.msk [vmem:[%s301 + $0xf0] sm:$0xff] %vm1134, %v1132
      %1166 = vst.msk [vmem:[%s301 + $0xf8] sm:$0xff] %vm1134, %v1133
      %v1167 = vld [vmem:[%s308] sm:$0xff]
      %v1168 = vld [vmem:[%s308 + $0x8] sm:$0xff]
      %v1169 = vld [vmem:[%s308 + $0x10] sm:$0xff]
      %v1170 = vld [vmem:[%s308 + $0x18] sm:$0xff]
      %v1171 = vld [vmem:[%s308 + $0x20] sm:$0xff]
      %v1172 = vld [vmem:[%s308 + $0x28] sm:$0xff]
      %v1173 = vld [vmem:[%s308 + $0x30] sm:$0xff]
      %v1174 = vld [vmem:[%s308 + $0x38] sm:$0xff]
      %v1175 = vld [vmem:[%s308 + $0x40] sm:$0xff]
      %v1176 = vld [vmem:[%s308 + $0x48] sm:$0xff]
      %v1177 = vld [vmem:[%s308 + $0x50] sm:$0xff]
      %v1178 = vld [vmem:[%s308 + $0x58] sm:$0xff]
      %v1179 = vld [vmem:[%s308 + $0x60] sm:$0xff]
      %v1180 = vld [vmem:[%s308 + $0x68] sm:$0xff]
      %v1181 = vld [vmem:[%s308 + $0x70] sm:$0xff]
      %v1182 = vld [vmem:[%s308 + $0x78] sm:$0xff]
      %v1183 = vld [vmem:[%s308 + $0x80] sm:$0xff]
      %v1184 = vld [vmem:[%s308 + $0x88] sm:$0xff]
      %v1185 = vld [vmem:[%s308 + $0x90] sm:$0xff]
      %v1186 = vld [vmem:[%s308 + $0x98] sm:$0xff]
      %v1187 = vld [vmem:[%s308 + $0xa0] sm:$0xff]
      %v1188 = vld [vmem:[%s308 + $0xa8] sm:$0xff]
      %v1189 = vld [vmem:[%s308 + $0xb0] sm:$0xff]
      %v1190 = vld [vmem:[%s308 + $0xb8] sm:$0xff]
      %v1191 = vld [vmem:[%s308 + $0xc0] sm:$0xff]
      %v1192 = vld [vmem:[%s308 + $0xc8] sm:$0xff]
      %v1193 = vld [vmem:[%s308 + $0xd0] sm:$0xff]
      %v1194 = vld [vmem:[%s308 + $0xd8] sm:$0xff]
      %v1195 = vld [vmem:[%s308 + $0xe0] sm:$0xff]
      %v1196 = vld [vmem:[%s308 + $0xe8] sm:$0xff]
      %v1197 = vld [vmem:[%s308 + $0xf0] sm:$0xff]
      %v1198 = vld [vmem:[%s308 + $0xf8] sm:$0xff]
      %v1199 = vmul.f32 %v778, %v778
      %v1200 = vmul.f32 %v781, %v781
      %v1201 = vmul.f32 %v786, %v786
      %v1202 = vmul.f32 %v789, %v789
      %v1203 = vmul.f32 %v794, %v794
      %v1204 = vmul.f32 %v797, %v797
      %v1205 = vmul.f32 %v802, %v802
      %v1206 = vmul.f32 %v805, %v805
      %v1207 = vmul.f32 %v810, %v810
      %v1208 = vmul.f32 %v813, %v813
      %v1209 = vmul.f32 %v818, %v818
      %v1210 = vmul.f32 %v821, %v821
      %v1211 = vmul.f32 %v826, %v826
      %v1212 = vmul.f32 %v829, %v829
      %v1213 = vmul.f32 %v834, %v834
      %v1214 = vmul.f32 %v837, %v837
      %v1215 = vmul.f32 %v842, %v842
      %v1216 = vmul.f32 %v845, %v845
      %v1217 = vmul.f32 %v850, %v850
      %v1218 = vmul.f32 %v853, %v853
      %v1219 = vmul.f32 %v858, %v858
      %v1220 = vmul.f32 %v861, %v861
      %v1221 = vmul.f32 %v866, %v866
      %v1222 = vmul.f32 %v869, %v869
      %v1223 = vmul.f32 %v874, %v874
      %v1224 = vmul.f32 %v877, %v877
      %v1225 = vmul.f32 %v882, %v882
      %v1226 = vmul.f32 %v885, %v885
      %v1227 = vmul.f32 %v890, %v890
      %v1228 = vmul.f32 %v893, %v893
      %v1229 = vmul.f32 %v898, %v898
      %v1230 = vmul.f32 %v901, %v901
      %v1231 = vsel %vm1005, %v1199, 0.0
      %1232 = vadd.xlane.f32.xlu0 %v1231
      %v1233 = vpop.xlane.xlu0 %1232
      %v1234 = vsel %vm1005, %v1200, 0.0
      %1235 = vadd.xlane.f32.xlu0 %v1234
      %v1236 = vpop.xlane.xlu0 %1235
      %v1237 = vsel %vm1005, %v1201, 0.0
      %1238 = vadd.xlane.f32.xlu0 %v1237
      %v1239 = vpop.xlane.xlu0 %1238
      %v1240 = vsel %vm1005, %v1202, 0.0
      %1241 = vadd.xlane.f32.xlu0 %v1240
      %v1242 = vpop.xlane.xlu0 %1241
      %v1243 = vsel %vm1005, %v1203, 0.0
      %1244 = vadd.xlane.f32.xlu0 %v1243
      %v1245 = vpop.xlane.xlu0 %1244
      %v1246 = vsel %vm1005, %v1204, 0.0
      %1247 = vadd.xlane.f32.xlu0 %v1246
      %v1248 = vpop.xlane.xlu0 %1247
      %v1249 = vsel %vm1005, %v1205, 0.0
      %1250 = vadd.xlane.f32.xlu0 %v1249
      %v1251 = vpop.xlane.xlu0 %1250
      %v1252 = vsel %vm1005, %v1206, 0.0
      %1253 = vadd.xlane.f32.xlu0 %v1252
      %v1254 = vpop.xlane.xlu0 %1253
      %v1255 = vsel %vm1005, %v1207, 0.0
      %1256 = vadd.xlane.f32.xlu0 %v1255
      %v1257 = vpop.xlane.xlu0 %1256
      %v1258 = vsel %vm1005, %v1208, 0.0
      %1259 = vadd.xlane.f32.xlu0 %v1258
      %v1260 = vpop.xlane.xlu0 %1259
      %v1261 = vsel %vm1005, %v1209, 0.0
      %1262 = vadd.xlane.f32.xlu0 %v1261
      %v1263 = vpop.xlane.xlu0 %1262
      %v1264 = vsel %vm1005, %v1210, 0.0
      %1265 = vadd.xlane.f32.xlu0 %v1264
      %v1266 = vpop.xlane.xlu0 %1265
      %v1267 = vsel %vm1005, %v1211, 0.0
      %1268 = vadd.xlane.f32.xlu0 %v1267
      %v1269 = vpop.xlane.xlu0 %1268
      %v1270 = vsel %vm1005, %v1212, 0.0
      %1271 = vadd.xlane.f32.xlu0 %v1270
      %v1272 = vpop.xlane.xlu0 %1271
      %v1273 = vsel %vm1005, %v1213, 0.0
      %1274 = vadd.xlane.f32.xlu0 %v1273
      %v1275 = vpop.xlane.xlu0 %1274
      %v1276 = vsel %vm1005, %v1214, 0.0
      %1277 = vadd.xlane.f32.xlu0 %v1276
      %v1278 = vpop.xlane.xlu0 %1277
      %v1279 = vsel %vm1005, %v1215, 0.0
      %1280 = vadd.xlane.f32.xlu0 %v1279
      %v1281 = vpop.xlane.xlu0 %1280
      %v1282 = vsel %vm1005, %v1216, 0.0
      %1283 = vadd.xlane.f32.xlu0 %v1282
      %v1284 = vpop.xlane.xlu0 %1283
      %v1285 = vsel %vm1005, %v1217, 0.0
      %1286 = vadd.xlane.f32.xlu0 %v1285
      %v1287 = vpop.xlane.xlu0 %1286
      %v1288 = vsel %vm1005, %v1218, 0.0
      %1289 = vadd.xlane.f32.xlu0 %v1288
      %v1290 = vpop.xlane.xlu0 %1289
      %v1291 = vsel %vm1005, %v1219, 0.0
      %1292 = vadd.xlane.f32.xlu0 %v1291
      %v1293 = vpop.xlane.xlu0 %1292
      %v1294 = vsel %vm1005, %v1220, 0.0
      %1295 = vadd.xlane.f32.xlu0 %v1294
      %v1296 = vpop.xlane.xlu0 %1295
      %v1297 = vsel %vm1005, %v1221, 0.0
      %1298 = vadd.xlane.f32.xlu0 %v1297
      %v1299 = vpop.xlane.xlu0 %1298
      %v1300 = vsel %vm1005, %v1222, 0.0
      %1301 = vadd.xlane.f32.xlu0 %v1300
      %v1302 = vpop.xlane.xlu0 %1301
      %v1303 = vsel %vm1005, %v1223, 0.0
      %1304 = vadd.xlane.f32.xlu0 %v1303
      %v1305 = vpop.xlane.xlu0 %1304
      %v1306 = vsel %vm1005, %v1224, 0.0
      %1307 = vadd.xlane.f32.xlu0 %v1306
      %v1308 = vpop.xlane.xlu0 %1307
      %v1309 = vsel %vm1005, %v1225, 0.0
      %1310 = vadd.xlane.f32.xlu0 %v1309
      %v1311 = vpop.xlane.xlu0 %1310
      %v1312 = vsel %vm1005, %v1226, 0.0
      %1313 = vadd.xlane.f32.xlu0 %v1312
      %v1314 = vpop.xlane.xlu0 %1313
      %v1315 = vsel %vm1005, %v1227, 0.0
      %1316 = vadd.xlane.f32.xlu0 %v1315
      %v1317 = vpop.xlane.xlu0 %1316
      %v1318 = vsel %vm1005, %v1228, 0.0
      %1319 = vadd.xlane.f32.xlu0 %v1318
      %v1320 = vpop.xlane.xlu0 %1319
      %v1321 = vsel %vm1005, %v1229, 0.0
      %1322 = vadd.xlane.f32.xlu0 %v1321
      %v1323 = vpop.xlane.xlu0 %1322
      %v1324 = vsel %vm1005, %v1230, 0.0
      %1325 = vadd.xlane.f32.xlu0 %v1324
      %v1326 = vpop.xlane.xlu0 %1325
      %v1327 = vadd.f32 %v1167, %v1233
      %v1328 = vadd.f32 %v1168, %v1236
      %v1329 = vadd.f32 %v1169, %v1239
      %v1330 = vadd.f32 %v1170, %v1242
      %v1331 = vadd.f32 %v1171, %v1245
      %v1332 = vadd.f32 %v1172, %v1248
      %v1333 = vadd.f32 %v1173, %v1251
      %v1334 = vadd.f32 %v1174, %v1254
      %v1335 = vadd.f32 %v1175, %v1257
      %v1336 = vadd.f32 %v1176, %v1260
      %v1337 = vadd.f32 %v1177, %v1263
      %v1338 = vadd.f32 %v1178, %v1266
      %v1339 = vadd.f32 %v1179, %v1269
      %v1340 = vadd.f32 %v1180, %v1272
      %v1341 = vadd.f32 %v1181, %v1275
      %v1342 = vadd.f32 %v1182, %v1278
      %v1343 = vadd.f32 %v1183, %v1281
      %v1344 = vadd.f32 %v1184, %v1284
      %v1345 = vadd.f32 %v1185, %v1287
      %v1346 = vadd.f32 %v1186, %v1290
      %v1347 = vadd.f32 %v1187, %v1293
      %v1348 = vadd.f32 %v1188, %v1296
      %v1349 = vadd.f32 %v1189, %v1299
      %v1350 = vadd.f32 %v1190, %v1302
      %v1351 = vadd.f32 %v1191, %v1305
      %v1352 = vadd.f32 %v1192, %v1308
      %v1353 = vadd.f32 %v1193, %v1311
      %v1354 = vadd.f32 %v1194, %v1314
      %v1355 = vadd.f32 %v1195, %v1317
      %v1356 = vadd.f32 %v1196, %v1320
      %v1357 = vadd.f32 %v1197, %v1323
      %v1358 = vadd.f32 %v1198, %v1326
      %1359 = vst.msk [vmem:[%s308] sm:$0xff] %vm1134, %v1327
      %1360 = vst.msk [vmem:[%s308 + $0x8] sm:$0xff] %vm1134, %v1328
      %1361 = vst.msk [vmem:[%s308 + $0x10] sm:$0xff] %vm1134, %v1329
      %1362 = vst.msk [vmem:[%s308 + $0x18] sm:$0xff] %vm1134, %v1330
      %1363 = vst.msk [vmem:[%s308 + $0x20] sm:$0xff] %vm1134, %v1331
      %1364 = vst.msk [vmem:[%s308 + $0x28] sm:$0xff] %vm1134, %v1332
      %1365 = vst.msk [vmem:[%s308 + $0x30] sm:$0xff] %vm1134, %v1333
      %1366 = vst.msk [vmem:[%s308 + $0x38] sm:$0xff] %vm1134, %v1334
      %1367 = vst.msk [vmem:[%s308 + $0x40] sm:$0xff] %vm1134, %v1335
      %1368 = vst.msk [vmem:[%s308 + $0x48] sm:$0xff] %vm1134, %v1336
      %1369 = vst.msk [vmem:[%s308 + $0x50] sm:$0xff] %vm1134, %v1337
      %1370 = vst.msk [vmem:[%s308 + $0x58] sm:$0xff] %vm1134, %v1338
      %1371 = vst.msk [vmem:[%s308 + $0x60] sm:$0xff] %vm1134, %v1339
      %1372 = vst.msk [vmem:[%s308 + $0x68] sm:$0xff] %vm1134, %v1340
      %1373 = vst.msk [vmem:[%s308 + $0x70] sm:$0xff] %vm1134, %v1341
      %1374 = vst.msk [vmem:[%s308 + $0x78] sm:$0xff] %vm1134, %v1342
      %1375 = vst.msk [vmem:[%s308 + $0x80] sm:$0xff] %vm1134, %v1343
      %1376 = vst.msk [vmem:[%s308 + $0x88] sm:$0xff] %vm1134, %v1344
      %1377 = vst.msk [vmem:[%s308 + $0x90] sm:$0xff] %vm1134, %v1345
      %1378 = vst.msk [vmem:[%s308 + $0x98] sm:$0xff] %vm1134, %v1346
      %1379 = vst.msk [vmem:[%s308 + $0xa0] sm:$0xff] %vm1134, %v1347
      %1380 = vst.msk [vmem:[%s308 + $0xa8] sm:$0xff] %vm1134, %v1348
      %1381 = vst.msk [vmem:[%s308 + $0xb0] sm:$0xff] %vm1134, %v1349
      %1382 = vst.msk [vmem:[%s308 + $0xb8] sm:$0xff] %vm1134, %v1350
      %1383 = vst.msk [vmem:[%s308 + $0xc0] sm:$0xff] %vm1134, %v1351
      %1384 = vst.msk [vmem:[%s308 + $0xc8] sm:$0xff] %vm1134, %v1352
      %1385 = vst.msk [vmem:[%s308 + $0xd0] sm:$0xff] %vm1134, %v1353
      %1386 = vst.msk [vmem:[%s308 + $0xd8] sm:$0xff] %vm1134, %v1354
      %1387 = vst.msk [vmem:[%s308 + $0xe0] sm:$0xff] %vm1134, %v1355
      %1388 = vst.msk [vmem:[%s308 + $0xe8] sm:$0xff] %vm1134, %v1356
      %1389 = vst.msk [vmem:[%s308 + $0xf0] sm:$0xff] %vm1134, %v1357
      %1390 = vst.msk [vmem:[%s308 + $0xf8] sm:$0xff] %vm1134, %v1358
      %v1391 = vpack.c.bf16 %v781, %v778
      %v1392 = vpack.c.bf16 %v789, %v786
      %v1393 = vpack.c.bf16 %v797, %v794
      %v1394 = vpack.c.bf16 %v805, %v802
      %v1395 = vpack.c.bf16 %v813, %v810
      %v1396 = vpack.c.bf16 %v821, %v818
      %v1397 = vpack.c.bf16 %v829, %v826
      %v1398 = vpack.c.bf16 %v837, %v834
      %v1399 = vpack.c.bf16 %v845, %v842
      %v1400 = vpack.c.bf16 %v853, %v850
      %v1401 = vpack.c.bf16 %v861, %v858
      %v1402 = vpack.c.bf16 %v869, %v866
      %v1403 = vpack.c.bf16 %v877, %v874
      %v1404 = vpack.c.bf16 %v885, %v882
      %v1405 = vpack.c.bf16 %v893, %v890
      %v1406 = vpack.c.bf16 %v901, %v898
      %v1423 = vunpack.c.l.b16 %v1391
      %v1424 = vunpack.c.h.b16 %v1391
      %v1425 = vunpack.c.l.b16 %v1392
      %v1426 = vunpack.c.h.b16 %v1392
      %v1427 = vunpack.c.l.b16 %v1393
      %v1428 = vunpack.c.h.b16 %v1393
      %v1429 = vunpack.c.l.b16 %v1394
      %v1430 = vunpack.c.h.b16 %v1394
      %v1431 = vunpack.c.l.b16 %v1395
      %v1432 = vunpack.c.h.b16 %v1395
      %v1433 = vunpack.c.l.b16 %v1396
      %v1434 = vunpack.c.h.b16 %v1396
      %v1435 = vunpack.c.l.b16 %v1397
      %v1436 = vunpack.c.h.b16 %v1397
      %v1437 = vunpack.c.l.b16 %v1398
      %v1438 = vunpack.c.h.b16 %v1398
      %v1439 = vunpack.c.l.b16 %v1399
      %v1440 = vunpack.c.h.b16 %v1399
      %v1441 = vunpack.c.l.b16 %v1400
      %v1442 = vunpack.c.h.b16 %v1400
      %v1443 = vunpack.c.l.b16 %v1401
      %v1444 = vunpack.c.h.b16 %v1401
      %v1445 = vunpack.c.l.b16 %v1402
      %v1446 = vunpack.c.h.b16 %v1402
      %v1447 = vunpack.c.l.b16 %v1403
      %v1448 = vunpack.c.h.b16 %v1403
      %v1449 = vunpack.c.l.b16 %v1404
      %v1450 = vunpack.c.h.b16 %v1404
      %v1451 = vunpack.c.l.b16 %v1405
      %v1452 = vunpack.c.h.b16 %v1405
      %v1453 = vunpack.c.l.b16 %v1406
      %v1454 = vunpack.c.h.b16 %v1406
      %v1455 = vpack.c.b16 %v1423, %v1423
      %v1456 = vpack.c.b16 %v1424, %v1424
      %v1457 = vpack.c.b16 %v1425, %v1425
      %v1458 = vpack.c.b16 %v1426, %v1426
      %v1459 = vpack.c.b16 %v1427, %v1427
      %v1460 = vpack.c.b16 %v1428, %v1428
      %v1461 = vpack.c.b16 %v1429, %v1429
      %v1462 = vpack.c.b16 %v1430, %v1430
      %v1463 = vpack.c.b16 %v1431, %v1431
      %v1464 = vpack.c.b16 %v1432, %v1432
      %v1465 = vpack.c.b16 %v1433, %v1433
      %v1466 = vpack.c.b16 %v1434, %v1434
      %v1467 = vpack.c.b16 %v1435, %v1435
      %v1468 = vpack.c.b16 %v1436, %v1436
      %v1469 = vpack.c.b16 %v1437, %v1437
      %v1470 = vpack.c.b16 %v1438, %v1438
      %v1471 = vpack.c.b16 %v1439, %v1439
      %v1472 = vpack.c.b16 %v1440, %v1440
      %v1473 = vpack.c.b16 %v1441, %v1441
      %v1474 = vpack.c.b16 %v1442, %v1442
      %v1475 = vpack.c.b16 %v1443, %v1443
      %v1476 = vpack.c.b16 %v1444, %v1444
      %v1477 = vpack.c.b16 %v1445, %v1445
      %v1478 = vpack.c.b16 %v1446, %v1446
      %v1479 = vpack.c.b16 %v1447, %v1447
      %v1480 = vpack.c.b16 %v1448, %v1448
      %v1481 = vpack.c.b16 %v1449, %v1449
      %v1482 = vpack.c.b16 %v1450, %v1450
      %v1483 = vpack.c.b16 %v1451, %v1451
      %v1484 = vpack.c.b16 %v1452, %v1452
      %v1485 = vpack.c.b16 %v1453, %v1453
      %v1486 = vpack.c.b16 %v1454, %v1454
      %vm1519 = vcmask 125952
      %1520 = vst.msk [vmem:[%s294] sm:$0xf] %vm1519, %v1455
      %1521 = vst.msk [vmem:[%s294 + $0x4] sm:$0xf] %vm1519, %v1456
      %1522 = vst.msk [vmem:[%s294 + $0x8] sm:$0xf] %vm1519, %v1457
      %1523 = vst.msk [vmem:[%s294 + $0xc] sm:$0xf] %vm1519, %v1458
      %1524 = vst.msk [vmem:[%s294 + $0x10] sm:$0xf] %vm1519, %v1459
      %1525 = vst.msk [vmem:[%s294 + $0x14] sm:$0xf] %vm1519, %v1460
      %1526 = vst.msk [vmem:[%s294 + $0x18] sm:$0xf] %vm1519, %v1461
      %1527 = vst.msk [vmem:[%s294 + $0x1c] sm:$0xf] %vm1519, %v1462
      %1528 = vst.msk [vmem:[%s294 + $0x20] sm:$0xf] %vm1519, %v1463
      %1529 = vst.msk [vmem:[%s294 + $0x24] sm:$0xf] %vm1519, %v1464
      %1530 = vst.msk [vmem:[%s294 + $0x28] sm:$0xf] %vm1519, %v1465
      %1531 = vst.msk [vmem:[%s294 + $0x2c] sm:$0xf] %vm1519, %v1466
      %1532 = vst.msk [vmem:[%s294 + $0x30] sm:$0xf] %vm1519, %v1467
      %1533 = vst.msk [vmem:[%s294 + $0x34] sm:$0xf] %vm1519, %v1468
      %1534 = vst.msk [vmem:[%s294 + $0x38] sm:$0xf] %vm1519, %v1469
      %1535 = vst.msk [vmem:[%s294 + $0x3c] sm:$0xf] %vm1519, %v1470
      %1536 = vst.msk [vmem:[%s294 + $0x40] sm:$0xf] %vm1519, %v1471
      %1537 = vst.msk [vmem:[%s294 + $0x44] sm:$0xf] %vm1519, %v1472
      %1538 = vst.msk [vmem:[%s294 + $0x48] sm:$0xf] %vm1519, %v1473
      %1539 = vst.msk [vmem:[%s294 + $0x4c] sm:$0xf] %vm1519, %v1474
      %1540 = vst.msk [vmem:[%s294 + $0x50] sm:$0xf] %vm1519, %v1475
      %1541 = vst.msk [vmem:[%s294 + $0x54] sm:$0xf] %vm1519, %v1476
      %1542 = vst.msk [vmem:[%s294 + $0x58] sm:$0xf] %vm1519, %v1477
      %1543 = vst.msk [vmem:[%s294 + $0x5c] sm:$0xf] %vm1519, %v1478
      %1544 = vst.msk [vmem:[%s294 + $0x60] sm:$0xf] %vm1519, %v1479
      %1545 = vst.msk [vmem:[%s294 + $0x64] sm:$0xf] %vm1519, %v1480
      %1546 = vst.msk [vmem:[%s294 + $0x68] sm:$0xf] %vm1519, %v1481
      %1547 = vst.msk [vmem:[%s294 + $0x6c] sm:$0xf] %vm1519, %v1482
      %1548 = vst.msk [vmem:[%s294 + $0x70] sm:$0xf] %vm1519, %v1483
      %1549 = vst.msk [vmem:[%s294 + $0x74] sm:$0xf] %vm1519, %v1484
      %1550 = vst.msk [vmem:[%s294 + $0x78] sm:$0xf] %vm1519, %v1485
      %1551 = vst.msk [vmem:[%s294 + $0x7c] sm:$0xf] %vm1519, %v1486
      %s1552 = sadd.s32 %s23, %s24
      %p1553 = scmp.lt.s32.totalorder %s22, 1
      %s1554 = scalar_select %p1553, %s22, 1
      %p1555 = scmp.lt.s32.totalorder %s1552, 0
      %s1556 = scalar_select %p1555, %s1552, 0
      %s1557 = smul.addr %s1554, 32
      %s1558 = sadd.s32 %s1556, %s1557
      %s1559 = smul.addr %s1558, 4
      %s1560 = scalar_lea.vmem %s3, %s1559
      %s1561 = sadd.s32 %s22, %s23
      %p1562 = scmp.lt.s32.totalorder %s1561, 1
      %s1563 = scalar_select %p1562, %s1561, 1
      %s1564 = smul.addr %s1563, 32
      %s1565 = smul.addr %s1564, 8
      %s1566 = scalar_lea.vmem %s4, %s1565
      %s1567 = sadd.s32 %s22, %s23
      %p1568 = scmp.lt.s32.totalorder %s1567, 1
      %s1569 = scalar_select %p1568, %s1567, 1
      %s1570 = smul.addr %s1569, 32
      %s1571 = smul.addr %s1570, 8
      %s1572 = scalar_lea.vmem %s5, %s1571
      // Predicated region
      $region37: #{pointgen_forward.4} parent=31 // pred_check
        %p1573 = pneg %p130
      $region38: #{pointgen_forward.4} parent=31 // pred_check_branch
        %1575 = sbr.rel (%p1573) target = $region40
      $region39: #{pointgen_forward.4} parent=31 // pred_region
        %s1576 = sadd.s32 %s23, %s24
      $region40: #{pointgen_forward.4} parent=31 // pred_fallthru
        _
      // Predicated region
      $region41: #{pointgen_forward.4} parent=31 // pred_check
        %p1577 = pneg %p158
      $region42: #{pointgen_forward.4} parent=31 // pred_check_branch
        %1579 = sbr.rel (%p1577) target = $region44
      $region43: #{pointgen_forward.4} parent=31 // pred_region
        %s1580 = sadd.s32 %s22, %s23
      $region44: #{pointgen_forward.4} parent=31 // pred_fallthru
        _
      // Predicated region
      $region45: #{pointgen_forward.4} parent=31 // pred_check
        %p1581 = pneg %p186
      $region46: #{pointgen_forward.4} parent=31 // pred_check_branch
        %1583 = sbr.rel (%p1581) target = $region48
      $region47: #{pointgen_forward.4} parent=31 // pred_region
        %s1584 = sadd.s32 %s22, %s23
      $region48: #{pointgen_forward.4} parent=31 // pred_fallthru
        _
    $region32: #{pointgen_forward.4} parent=5 // pred_fallthru
      _
    %p1585 = scmp.le.s32.totalorder 2, %s12
    // Predicated region
    $region49: #{pointgen_forward.4} parent=5 // pred_check
      %p1586 = pneg %p1585
    $region50: #{pointgen_forward.4} parent=5 // pred_check_branch
      %1588 = sbr.rel (%p1586) target = $region52
    $region51: #{pointgen_forward.4} parent=5 // pred_region
      %s1589 = ssub.s32 %s12, 2
      // Predicated region
      $region53: #{pointgen_forward.4} parent=51 // pred_check
        %p1590 = pneg %p136
      $region54: #{pointgen_forward.4} parent=51 // pred_check_branch
        %1592 = sbr.rel (%p1590) target = $region56
      $region55: #{pointgen_forward.4} parent=51 // pred_region
        %s1593 = sadd.s32 %s26, %s27
        %p1594 = scmp.lt.s32.totalorder %s25, 1
        %s1595 = scalar_select %p1594, %s25, 1
        %p1596 = scmp.lt.s32.totalorder %s1593, 0
        %s1597 = scalar_select %p1596, %s1593, 0
        %s1598 = smul.addr %s1595, 32
        %s1599 = sadd.s32 %s1597, %s1598
        %s1600 = smul.addr %s1599, 4
        %s1601 = scalar_lea.vmem %s3, %s1600
      $region56: #{pointgen_forward.4} parent=51 // pred_fallthru
        _
      // Predicated region
      $region57: #{pointgen_forward.4} parent=51 // pred_check
        %p1602 = pneg %p164
      $region58: #{pointgen_forward.4} parent=51 // pred_check_branch
        %1604 = sbr.rel (%p1602) target = $region60
      $region59: #{pointgen_forward.4} parent=51 // pred_region
        %s1605 = sadd.s32 %s25, %s26
        %p1606 = scmp.lt.s32.totalorder %s1605, 1
        %s1607 = scalar_select %p1606, %s1605, 1
        %s1608 = smul.addr %s1607, 32
        %s1609 = smul.addr %s1608, 8
        %s1610 = scalar_lea.vmem %s4, %s1609
      $region60: #{pointgen_forward.4} parent=51 // pred_fallthru
        _
      // Predicated region
      $region61: #{pointgen_forward.4} parent=51 // pred_check
        %p1611 = pneg %p192
      $region62: #{pointgen_forward.4} parent=51 // pred_check_branch
        %1613 = sbr.rel (%p1611) target = $region64
      $region63: #{pointgen_forward.4} parent=51 // pred_region
        %s1614 = sadd.s32 %s25, %s26
        %p1615 = scmp.lt.s32.totalorder %s1614, 1
        %s1616 = scalar_select %p1615, %s1614, 1
        %s1617 = smul.addr %s1616, 32
        %s1618 = smul.addr %s1617, 8
        %s1619 = scalar_lea.vmem %s5, %s1618
      $region64: #{pointgen_forward.4} parent=51 // pred_fallthru
        _
    $region52: #{pointgen_forward.4} parent=5 // pred_fallthru
      _
  $region6: #{pointgen_forward.4} parent=0 // loop_footer
    %s16 = sadd.s32 1, %s12
  $region7: #{pointgen_forward.4} parent=0 // loop_footer_branch
    %11 = sbr.rel target = $region3
  $region8: #{pointgen_forward.4} parent=0 // loop_exit
    _

// kernel: pointgen_forward.6
$region0: #{pointgen_forward.6}
  #allocation0 [shape = 'u32[]', space=smem, size = 0x4, offset = 0x4, fixed_abs, tag = 'smem constant byte address 0x4 - core index']
  #allocation1 [shape = 'u32[144,128]{1,0:T(1,128)}', space=vmem, size = 0x12000, scoped, tag = 'internal scratch']
  %s0 = inlined_call_operand.vmem [shape: bf16[2,128,16], index: 0, kind: input, shape index: {}]
  %s1 = inlined_call_operand.vmem [shape: f32[128,1], index: 1, kind: input, shape index: {}]
  %s2 = inlined_call_operand.vmem [shape: f32[128,1], index: 2, kind: input, shape index: {}]
  %s3 = inlined_call_operand.vmem [shape: bf16[64,128], index: 3, kind: input, shape index: {}]
  %s4 = inlined_call_operand.vmem [shape: f32[64,1], index: 4, kind: input, shape index: {}]
  %s5 = inlined_call_operand.vmem [shape: bf16[2,64,16], index: 5, kind: output, shape index: {0}]
  %s6 = inlined_call_operand.vmem [shape: f32[2,64,1], index: 6, kind: output, shape index: {1}]
  %s7 = inlined_call_operand.vmem [shape: f32[2,64,1], index: 7, kind: output, shape index: {2}]
  %8 = xla_tuple %s5, %s6, %s7
  %s9 = sld [smem:[#allocation0]]
  $region73: #{pointgen_forward.6} parent=0
    _
  %s11 = ssub.s32 1, %s9
  %s12 = scalar_select 0, %s11, %s9
  loop: start=0, step=1, limit=4
  $region2: #{pointgen_forward.6} parent=0 // loop_pre_header
    _
  $region3: #{pointgen_forward.6} parent=0 // loop_header
    %s14 = sphi 0, %s18
    %p15 = scmp.ge.s32.totalorder %s14, 4
    %s21 = sphi 0, %s40
    %s22 = sphi 0, %s36
    %s23 = sphi 0, %s32
    %s24 = sphi 0, %s21
    %s25 = sphi 0, %s22
    %s26 = sphi 0, %s23
    %s27 = sphi 0, %s24
    %s28 = sphi 0, %s25
    %s29 = sphi 0, %s26
    %s47 = sphi 0, %s49
    %s50 = sphi 0, %s47
    %s51 = sphi 0, %s50
    %s67 = sphi 0, %s51
    %s71 = sphi 0, %s71
    %s73 = sphi 0, %s71
    %s74 = sphi 0, %s73
    %s88 = sphi 0, %s74
    %s92 = sphi 0, %s92
    %s94 = sphi 0, %s92
    %s95 = sphi 0, %s94
    %s109 = sphi 0, %s95
    %s113 = sphi 0, %s113
    %s115 = sphi 0, %s113
    %s116 = sphi 0, %s115
    %s130 = sphi 0, %s116
    %s134 = sphi 0, %s134
    %s136 = sphi 0, %s134
    %s137 = sphi 0, %s136
    %s151 = sphi 0, %s137
    %s161 = sphi 0, %s163
    %s164 = sphi 0, %s161
    %s165 = sphi 0, %s164
    %s181 = sphi 0, %s165
    %s189 = sphi 0, %s191
    %s192 = sphi 0, %s189
    %s193 = sphi 0, %s192
    %s209 = sphi 0, %s193
    %s217 = sphi 0, %s219
    %s220 = sphi 0, %s217
    %s221 = sphi 0, %s220
    %s237 = sphi 0, %s221
  $region4: #{pointgen_forward.6} parent=0 // loop_header_branch
    %17 = sbr.rel (%p15) target = $region8
  $region5: #{pointgen_forward.6} parent=0 // loop_body
    %s19 = ssub.s32 %s14, 1
    %s20 = ssub.s32 %s14, 2
    %s30 = sadd.s32 1, %s23
    %p31 = scmp.ge.s32.totalorder %s30, 1
    %s32 = scalar_select %p31, 0, %s30
    %s33 = sadd.s32 1, %s22
    %s34 = scalar_select %p31, %s33, %s22
    %p35 = scmp.ge.s32.totalorder %s34, 1
    %s36 = scalar_select %p35, 0, %s34
    %s37 = sadd.s32 1, %s21
    %s38 = scalar_select %p35, %s37, %s21
    %p39 = scmp.ge.s32.totalorder %s38, 2
    %s40 = scalar_select %p39, 0, %s38
    %s41 = sadd.s32 %s22, %s23
    %s42 = sadd.s32 %s36, %s32
    %s43 = ssub.s32 %s21, %s40
    %s44 = ssub.s32 %s41, %s42
    %s45 = sor.u32 %s43, %s44
    %p46 = scmp.eq.s32.totalorder %s45, 0
    %s48 = sadd.s32 %s47, 1
    %s49 = scalar_select %p46, %s47, %s48
    %p52 = pneg %p46
    %p53 = scmp.eq.s32.totalorder %s14, 1
    %p54 = por %p52, %p53
    %p55 = scmp.ne.s32.totalorder %s47, %s50
    %p56 = scmp.eq.s32.totalorder %s14, 0
    %p57 = por %p55, %p56
    %p58 = scmp.ne.s32.totalorder %s47, %s50
    %p59 = scmp.eq.s32.totalorder %s19, 1
    %p60 = por %p58, %p59
    %p61 = scmp.ne.s32.totalorder %s50, %s51
    %p62 = scmp.eq.s32.totalorder %s19, 0
    %p63 = por %p61, %p62
    %p64 = scmp.ne.s32.totalorder %s50, %s51
    %p65 = scmp.eq.s32.totalorder %s20, 1
    %p66 = por %p64, %p65
    %p68 = scmp.ne.s32.totalorder %s51, %s67
    %p69 = scmp.eq.s32.totalorder %s20, 0
    %p70 = por %p68, %p69
    %s72 = sadd.s32 %s71, 1
    %p75 = scmp.eq.s32.totalorder %s14, 1
    %p76 = scmp.ne.s32.totalorder %s71, %s73
    %p77 = scmp.eq.s32.totalorder %s14, 0
    %p78 = por %p76, %p77
    %p79 = scmp.ne.s32.totalorder %s71, %s73
    %p80 = scmp.eq.s32.totalorder %s19, 1
    %p81 = por %p79, %p80
    %p82 = scmp.ne.s32.totalorder %s73, %s74
    %p83 = scmp.eq.s32.totalorder %s19, 0
    %p84 = por %p82, %p83
    %p85 = scmp.ne.s32.totalorder %s73, %s74
    %p86 = scmp.eq.s32.totalorder %s20, 1
    %p87 = por %p85, %p86
    %p89 = scmp.ne.s32.totalorder %s74, %s88
    %p90 = scmp.eq.s32.totalorder %s20, 0
    %p91 = por %p89, %p90
    %s93 = sadd.s32 %s92, 1
    %p96 = scmp.eq.s32.totalorder %s14, 1
    %p97 = scmp.ne.s32.totalorder %s92, %s94
    %p98 = scmp.eq.s32.totalorder %s14, 0
    %p99 = por %p97, %p98
    %p100 = scmp.ne.s32.totalorder %s92, %s94
    %p101 = scmp.eq.s32.totalorder %s19, 1
    %p102 = por %p100, %p101
    %p103 = scmp.ne.s32.totalorder %s94, %s95
    %p104 = scmp.eq.s32.totalorder %s19, 0
    %p105 = por %p103, %p104
    %p106 = scmp.ne.s32.totalorder %s94, %s95
    %p107 = scmp.eq.s32.totalorder %s20, 1
    %p108 = por %p106, %p107
    %p110 = scmp.ne.s32.totalorder %s95, %s109
    %p111 = scmp.eq.s32.totalorder %s20, 0
    %p112 = por %p110, %p111
    %s114 = sadd.s32 %s113, 1
    %p117 = scmp.eq.s32.totalorder %s14, 1
    %p118 = scmp.ne.s32.totalorder %s113, %s115
    %p119 = scmp.eq.s32.totalorder %s14, 0
    %p120 = por %p118, %p119
    %p121 = scmp.ne.s32.totalorder %s113, %s115
    %p122 = scmp.eq.s32.totalorder %s19, 1
    %p123 = por %p121, %p122
    %p124 = scmp.ne.s32.totalorder %s115, %s116
    %p125 = scmp.eq.s32.totalorder %s19, 0
    %p126 = por %p124, %p125
    %p127 = scmp.ne.s32.totalorder %s115, %s116
    %p128 = scmp.eq.s32.totalorder %s20, 1
    %p129 = por %p127, %p128
    %p131 = scmp.ne.s32.totalorder %s116, %s130
    %p132 = scmp.eq.s32.totalorder %s20, 0
    %p133 = por %p131, %p132
    %s135 = sadd.s32 %s134, 1
    %p138 = scmp.eq.s32.totalorder %s14, 1
    %p139 = scmp.ne.s32.totalorder %s134, %s136
    %p140 = scmp.eq.s32.totalorder %s14, 0
    %p141 = por %p139, %p140
    %p142 = scmp.ne.s32.totalorder %s134, %s136
    %p143 = scmp.eq.s32.totalorder %s19, 1
    %p144 = por %p142, %p143
    %p145 = scmp.ne.s32.totalorder %s136, %s137
    %p146 = scmp.eq.s32.totalorder %s19, 0
    %p147 = por %p145, %p146
    %p148 = scmp.ne.s32.totalorder %s136, %s137
    %p149 = scmp.eq.s32.totalorder %s20, 1
    %p150 = por %p148, %p149
    %p152 = scmp.ne.s32.totalorder %s137, %s151
    %p153 = scmp.eq.s32.totalorder %s20, 0
    %p154 = por %p152, %p153
    %s155 = sadd.s32 %s22, %s23
    %s156 = sadd.s32 %s36, %s32
    %s157 = ssub.s32 %s21, %s40
    %s158 = ssub.s32 %s155, %s156
    %s159 = sor.u32 %s157, %s158
    %p160 = scmp.eq.s32.totalorder %s159, 0
    %s162 = sadd.s32 %s161, 1
    %s163 = scalar_select %p160, %s161, %s162
    %p166 = pneg %p160
    %p167 = scmp.eq.s32.totalorder %s14, 1
    %p168 = por %p166, %p167
    %p169 = scmp.ne.s32.totalorder %s161, %s164
    %p170 = scmp.eq.s32.totalorder %s14, 0
    %p171 = por %p169, %p170
    %p172 = scmp.ne.s32.totalorder %s161, %s164
    %p173 = scmp.eq.s32.totalorder %s19, 1
    %p174 = por %p172, %p173
    %p175 = scmp.ne.s32.totalorder %s164, %s165
    %p176 = scmp.eq.s32.totalorder %s19, 0
    %p177 = por %p175, %p176
    %p178 = scmp.ne.s32.totalorder %s164, %s165
    %p179 = scmp.eq.s32.totalorder %s20, 1
    %p180 = por %p178, %p179
    %p182 = scmp.ne.s32.totalorder %s165, %s181
    %p183 = scmp.eq.s32.totalorder %s20, 0
    %p184 = por %p182, %p183
    %s185 = sadd.s32 %s21, %s22
    %s186 = sadd.s32 %s40, %s36
    %s187 = ssub.s32 %s185, %s186
    %p188 = scmp.eq.s32.totalorder %s187, 0
    %s190 = sadd.s32 %s189, 1
    %s191 = scalar_select %p188, %s189, %s190
    %p194 = pneg %p188
    %p195 = scmp.eq.s32.totalorder %s14, 1
    %p196 = por %p194, %p195
    %p197 = scmp.ne.s32.totalorder %s189, %s192
    %p198 = scmp.eq.s32.totalorder %s14, 0
    %p199 = por %p197, %p198
    %p200 = scmp.ne.s32.totalorder %s189, %s192
    %p201 = scmp.eq.s32.totalorder %s19, 1
    %p202 = por %p200, %p201
    %p203 = scmp.ne.s32.totalorder %s192, %s193
    %p204 = scmp.eq.s32.totalorder %s19, 0
    %p205 = por %p203, %p204
    %p206 = scmp.ne.s32.totalorder %s192, %s193
    %p207 = scmp.eq.s32.totalorder %s20, 1
    %p208 = por %p206, %p207
    %p210 = scmp.ne.s32.totalorder %s193, %s209
    %p211 = scmp.eq.s32.totalorder %s20, 0
    %p212 = por %p210, %p211
    %s213 = sadd.s32 %s21, %s22
    %s214 = sadd.s32 %s40, %s36
    %s215 = ssub.s32 %s213, %s214
    %p216 = scmp.eq.s32.totalorder %s215, 0
    %s218 = sadd.s32 %s217, 1
    %s219 = scalar_select %p216, %s217, %s218
    %p222 = pneg %p216
    %p223 = scmp.eq.s32.totalorder %s14, 1
    %p224 = por %p222, %p223
    %p225 = scmp.ne.s32.totalorder %s217, %s220
    %p226 = scmp.eq.s32.totalorder %s14, 0
    %p227 = por %p225, %p226
    %p228 = scmp.ne.s32.totalorder %s217, %s220
    %p229 = scmp.eq.s32.totalorder %s19, 1
    %p230 = por %p228, %p229
    %p231 = scmp.ne.s32.totalorder %s220, %s221
    %p232 = scmp.eq.s32.totalorder %s19, 0
    %p233 = por %p231, %p232
    %p234 = scmp.ne.s32.totalorder %s220, %s221
    %p235 = scmp.eq.s32.totalorder %s20, 1
    %p236 = por %p234, %p235
    %p238 = scmp.ne.s32.totalorder %s221, %s237
    %p239 = scmp.eq.s32.totalorder %s20, 0
    %p240 = por %p238, %p239
    %p241 = scmp.le.s32.totalorder 1, %s14
    %p242 = scmp.lt.s32.totalorder %s14, 3
    %p243 = pnand %p241, %p242
    %p244 = pneg %p243
    // Predicated region
    $region9: #{pointgen_forward.6} parent=5 // pred_check
      _
    $region10: #{pointgen_forward.6} parent=5 // pred_check_branch
      %246 = sbr.rel (%p243) target = $region12
    $region11: #{pointgen_forward.6} parent=5 // pred_region
      %s247 = ssub.s32 %s14, 1
      // Predicated region
      $region13: #{pointgen_forward.6} parent=11 // pred_check
        %p248 = pneg %p84
      $region14: #{pointgen_forward.6} parent=11 // pred_check_branch
        %250 = sbr.rel (%p248) target = $region16
      $region15: #{pointgen_forward.6} parent=11 // pred_region
        _
      $region16: #{pointgen_forward.6} parent=11 // pred_fallthru
        _
      // Predicated region
      $region17: #{pointgen_forward.6} parent=11 // pred_check
        %p251 = pneg %p105
      $region18: #{pointgen_forward.6} parent=11 // pred_check_branch
        %253 = sbr.rel (%p251) target = $region20
      $region19: #{pointgen_forward.6} parent=11 // pred_region
        _
      $region20: #{pointgen_forward.6} parent=11 // pred_fallthru
        _
      // Predicated region
      $region21: #{pointgen_forward.6} parent=11 // pred_check
        %p254 = pneg %p126
      $region22: #{pointgen_forward.6} parent=11 // pred_check_branch
        %256 = sbr.rel (%p254) target = $region24
      $region23: #{pointgen_forward.6} parent=11 // pred_region
        _
      $region24: #{pointgen_forward.6} parent=11 // pred_fallthru
        _
      // Predicated region
      $region25: #{pointgen_forward.6} parent=11 // pred_check
        %p257 = pneg %p147
      $region26: #{pointgen_forward.6} parent=11 // pred_check_branch
        %259 = sbr.rel (%p257) target = $region28
      $region27: #{pointgen_forward.6} parent=11 // pred_region
        _
      $region28: #{pointgen_forward.6} parent=11 // pred_fallthru
        _
    $region12: #{pointgen_forward.6} parent=5 // pred_fallthru
      _
    %p260 = scmp.lt.s32.totalorder %s14, 2
    // Predicated region
    $region29: #{pointgen_forward.6} parent=5 // pred_check
      %p261 = pneg %p260
    $region30: #{pointgen_forward.6} parent=5 // pred_check_branch
      %263 = sbr.rel (%p261) target = $region32
    $region31: #{pointgen_forward.6} parent=5 // pred_region
      // Predicated region
      $region33: #{pointgen_forward.6} parent=31 // pred_check
        %p264 = pneg %p57
      $region34: #{pointgen_forward.6} parent=31 // pred_check_branch
        %266 = sbr.rel (%p264) target = $region36
      $region35: #{pointgen_forward.6} parent=31 // pred_region
        %s267 = sadd.s32 %s22, %s23
        %p268 = scmp.lt.s32.totalorder %s21, 1
        %s269 = scalar_select %p268, %s21, 1
        %p270 = scmp.lt.s32.totalorder %s267, 0
        %s271 = scalar_select %p270, %s267, 0
        %s272 = smul.addr %s269, 16
        %s273 = sadd.s32 %s271, %s272
        %s274 = smul.addr %s273, 4
        %s275 = scalar_lea.vmem %s0, %s274
        %s276 = sadd.s32 %s22, %s23
      $region36: #{pointgen_forward.6} parent=31 // pred_fallthru
        _
    $region32: #{pointgen_forward.6} parent=5 // pred_fallthru
      _
    %p277 = scmp.le.s32.totalorder 1, %s14
    %p278 = scmp.lt.s32.totalorder %s14, 3
    %p279 = pnand %p277, %p278
    %p280 = pneg %p279
    // Predicated region
    $region37: #{pointgen_forward.6} parent=5 // pred_check
      _
    $region38: #{pointgen_forward.6} parent=5 // pred_check_branch
      %282 = sbr.rel (%p279) target = $region40
    $region39: #{pointgen_forward.6} parent=5 // pred_region
      %s283 = ssub.s32 %s14, 1
      %s284 = sadd.s32 %s25, %s26
      %p285 = scmp.lt.s32.totalorder %s24, 1
      %s286 = scalar_select %p285, %s24, 1
      %p287 = scmp.lt.s32.totalorder %s284, 0
      %s288 = scalar_select %p287, %s284, 0
      %s289 = smul.addr %s286, 16
      %s290 = sadd.s32 %s288, %s289
      %s291 = smul.addr %s290, 4
      %s292 = scalar_lea.vmem %s0, %s291
      %p293 = pneg %p63
      %p294 = pneg %p60
      %p295 = pneg %p84
      %p296 = pneg %p81
      %p297 = pneg %p105
      %p298 = pneg %p102
      %p299 = pneg %p126
      %p300 = pneg %p123
      %p301 = pneg %p147
      %p302 = pneg %p144
      %p303 = pneg %p177
      %p304 = pneg %p174
      %s305 = sadd.s32 %s25, %s26
      %p306 = scmp.lt.s32.totalorder %s24, 1
      %s307 = scalar_select %p306, %s24, 1
      %p308 = scmp.lt.s32.totalorder %s305, 0
      %s309 = scalar_select %p308, %s305, 0
      %s310 = smul.addr %s307, 8
      %s311 = sadd.s32 %s309, %s310
      %s312 = smul.addr %s311, 4
      %s313 = scalar_lea.vmem %s5, %s312
      %p314 = pneg %p205
      %p315 = pneg %p202
      %s316 = sadd.s32 %s24, %s25
      %p317 = scmp.lt.s32.totalorder %s316, 1
      %s318 = scalar_select %p317, %s316, 1
      %s319 = smul.addr %s318, 8
      %s320 = smul.addr %s319, 8
      %s321 = scalar_lea.vmem %s6, %s320
      %p322 = pneg %p233
      %p323 = pneg %p230
      %s324 = sadd.s32 %s24, %s25
      %p325 = scmp.lt.s32.totalorder %s324, 1
      %s326 = scalar_select %p325, %s324, 1
      %s327 = smul.addr %s326, 8
      %s328 = smul.addr %s327, 8
      %s329 = scalar_lea.vmem %s7, %s328
      %s330 = sadd.s32 %s25, %s26
      %p331 = scmp.lt.s32.totalorder %s24, 1
      %s332 = scalar_select %p331, %s24, 1
      %p333 = scmp.lt.s32.totalorder %s330, 0
      %s334 = scalar_select %p333, %s330, 0
      %s335 = smul.addr %s332, 16
      %s336 = sadd.s32 %s334, %s335
      %s337 = smul.addr %s336, 4
      %s338 = scalar_lea.vmem %s0, %s337
      %s339 = sadd.s32 %s25, %s26
      %s340 = sadd.s32 %s25, %s26
      %p341 = scmp.lt.s32.totalorder %s24, 1
      %s342 = scalar_select %p341, %s24, 1
      %p343 = scmp.lt.s32.totalorder %s340, 0
      %s344 = scalar_select %p343, %s340, 0
      %s345 = smul.addr %s342, 8
      %s346 = sadd.s32 %s344, %s345
      %s347 = smul.addr %s346, 4
      %s348 = scalar_lea.vmem %s5, %s347
      %s349 = sadd.s32 %s25, %s26
      %s350 = sadd.s32 %s24, %s25
      %p351 = scmp.lt.s32.totalorder %s350, 1
      %s352 = scalar_select %p351, %s350, 1
      %s353 = smul.addr %s352, 8
      %s354 = smul.addr %s353, 8
      %s355 = scalar_lea.vmem %s6, %s354
      %s356 = sadd.s32 %s24, %s25
      %s357 = sadd.s32 %s24, %s25
      %p358 = scmp.lt.s32.totalorder %s357, 1
      %s359 = scalar_select %p358, %s357, 1
      %s360 = smul.addr %s359, 8
      %s361 = smul.addr %s360, 8
      %s362 = scalar_lea.vmem %s7, %s361
      %s363 = sadd.s32 %s24, %s25
      %v365 = vld [vmem:[%s338] sm:$0xf]
      %v366 = vld [vmem:[%s338 + $0x4] sm:$0xf]
      %v367 = vld [vmem:[%s338 + $0x8] sm:$0xf]
      %v368 = vld [vmem:[%s338 + $0xc] sm:$0xf]
      %v369 = vld [vmem:[%s338 + $0x10] sm:$0xf]
      %v370 = vld [vmem:[%s338 + $0x14] sm:$0xf]
      %v371 = vld [vmem:[%s338 + $0x18] sm:$0xf]
      %v372 = vld [vmem:[%s338 + $0x1c] sm:$0xf]
      %v373 = vld [vmem:[%s338 + $0x20] sm:$0xf]
      %v374 = vld [vmem:[%s338 + $0x24] sm:$0xf]
      %v375 = vld [vmem:[%s338 + $0x28] sm:$0xf]
      %v376 = vld [vmem:[%s338 + $0x2c] sm:$0xf]
      %v377 = vld [vmem:[%s338 + $0x30] sm:$0xf]
      %v378 = vld [vmem:[%s338 + $0x34] sm:$0xf]
      %v379 = vld [vmem:[%s338 + $0x38] sm:$0xf]
      %v380 = vld [vmem:[%s338 + $0x3c] sm:$0xf]
      %v381 = vunpack.c.l.bf16 %v365
      %v382 = vunpack.c.l.bf16 %v366
      %v383 = vunpack.c.l.bf16 %v367
      %v384 = vunpack.c.l.bf16 %v368
      %v385 = vunpack.c.l.bf16 %v369
      %v386 = vunpack.c.l.bf16 %v370
      %v387 = vunpack.c.l.bf16 %v371
      %v388 = vunpack.c.l.bf16 %v372
      %v389 = vunpack.c.l.bf16 %v373
      %v390 = vunpack.c.l.bf16 %v374
      %v391 = vunpack.c.l.bf16 %v375
      %v392 = vunpack.c.l.bf16 %v376
      %v393 = vunpack.c.l.bf16 %v377
      %v394 = vunpack.c.l.bf16 %v378
      %v395 = vunpack.c.l.bf16 %v379
      %v396 = vunpack.c.l.bf16 %v380
      %v397 = vld [vmem:[%s1] sm:$0xff]
      %v398 = vld [vmem:[%s1 + $0x8] sm:$0xff]
      %v399 = vld [vmem:[%s1 + $0x10] sm:$0xff]
      %v400 = vld [vmem:[%s1 + $0x18] sm:$0xff]
      %v401 = vld [vmem:[%s1 + $0x20] sm:$0xff]
      %v402 = vld [vmem:[%s1 + $0x28] sm:$0xff]
      %v403 = vld [vmem:[%s1 + $0x30] sm:$0xff]
      %v404 = vld [vmem:[%s1 + $0x38] sm:$0xff]
      %v405 = vld [vmem:[%s1 + $0x40] sm:$0xff]
      %v406 = vld [vmem:[%s1 + $0x48] sm:$0xff]
      %v407 = vld [vmem:[%s1 + $0x50] sm:$0xff]
      %v408 = vld [vmem:[%s1 + $0x58] sm:$0xff]
      %v409 = vld [vmem:[%s1 + $0x60] sm:$0xff]
      %v410 = vld [vmem:[%s1 + $0x68] sm:$0xff]
      %v411 = vld [vmem:[%s1 + $0x70] sm:$0xff]
      %v412 = vld [vmem:[%s1 + $0x78] sm:$0xff]
      %414 = vset.pattern.permute.xlu0 0
      %415 = vperm.xlu0 %414, %v397
      %v416 = vpop.permute.xlu0 %415
      %419 = vset.pattern.permute.xlu0 0
      %420 = vperm.xlu0 %419, %v398
      %v421 = vpop.permute.xlu0 %420
      %424 = vset.pattern.permute.xlu0 0
      %425 = vperm.xlu0 %424, %v399
      %v426 = vpop.permute.xlu0 %425
      %429 = vset.pattern.permute.xlu0 0
      %430 = vperm.xlu0 %429, %v400
      %v431 = vpop.permute.xlu0 %430
      %434 = vset.pattern.permute.xlu0 0
      %435 = vperm.xlu0 %434, %v401
      %v436 = vpop.permute.xlu0 %435
      %439 = vset.pattern.permute.xlu0 0
      %440 = vperm.xlu0 %439, %v402
      %v441 = vpop.permute.xlu0 %440
      %444 = vset.pattern.permute.xlu0 0
      %445 = vperm.xlu0 %444, %v403
      %v446 = vpop.permute.xlu0 %445
      %449 = vset.pattern.permute.xlu0 0
      %450 = vperm.xlu0 %449, %v404
      %v451 = vpop.permute.xlu0 %450
      %454 = vset.pattern.permute.xlu0 0
      %455 = vperm.xlu0 %454, %v405
      %v456 = vpop.permute.xlu0 %455
      %459 = vset.pattern.permute.xlu0 0
      %460 = vperm.xlu0 %459, %v406
      %v461 = vpop.permute.xlu0 %460
      %464 = vset.pattern.permute.xlu0 0
      %465 = vperm.xlu0 %464, %v407
      %v466 = vpop.permute.xlu0 %465
      %469 = vset.pattern.permute.xlu0 0
      %470 = vperm.xlu0 %469, %v408
      %v471 = vpop.permute.xlu0 %470
      %474 = vset.pattern.permute.xlu0 0
      %475 = vperm.xlu0 %474, %v409
      %v476 = vpop.permute.xlu0 %475
      %479 = vset.pattern.permute.xlu0 0
      %480 = vperm.xlu0 %479, %v410
      %v481 = vpop.permute.xlu0 %480
      %484 = vset.pattern.permute.xlu0 0
      %485 = vperm.xlu0 %484, %v411
      %v486 = vpop.permute.xlu0 %485
      %489 = vset.pattern.permute.xlu0 0
      %490 = vperm.xlu0 %489, %v412
      %v491 = vpop.permute.xlu0 %490
      %v493 = vmul.f32 %v381, %v416
      %v494 = vmul.f32 %v382, %v421
      %v495 = vmul.f32 %v383, %v426
      %v496 = vmul.f32 %v384, %v431
      %v497 = vmul.f32 %v385, %v436
      %v498 = vmul.f32 %v386, %v441
      %v499 = vmul.f32 %v387, %v446
      %v500 = vmul.f32 %v388, %v451
      %v501 = vmul.f32 %v389, %v456
      %v502 = vmul.f32 %v390, %v461
      %v503 = vmul.f32 %v391, %v466
      %v504 = vmul.f32 %v392, %v471
      %v505 = vmul.f32 %v393, %v476
      %v506 = vmul.f32 %v394, %v481
      %v507 = vmul.f32 %v395, %v486
      %v508 = vmul.f32 %v396, %v491
      %v509 = vld [vmem:[%s2] sm:$0xff]
      %v510 = vld [vmem:[%s2 + $0x8] sm:$0xff]
      %v511 = vld [vmem:[%s2 + $0x10] sm:$0xff]
      %v512 = vld [vmem:[%s2 + $0x18] sm:$0xff]
      %v513 = vld [vmem:[%s2 + $0x20] sm:$0xff]
      %v514 = vld [vmem:[%s2 + $0x28] sm:$0xff]
      %v515 = vld [vmem:[%s2 + $0x30] sm:$0xff]
      %v516 = vld [vmem:[%s2 + $0x38] sm:$0xff]
      %v517 = vld [vmem:[%s2 + $0x40] sm:$0xff]
      %v518 = vld [vmem:[%s2 + $0x48] sm:$0xff]
      %v519 = vld [vmem:[%s2 + $0x50] sm:$0xff]
      %v520 = vld [vmem:[%s2 + $0x58] sm:$0xff]
      %v521 = vld [vmem:[%s2 + $0x60] sm:$0xff]
      %v522 = vld [vmem:[%s2 + $0x68] sm:$0xff]
      %v523 = vld [vmem:[%s2 + $0x70] sm:$0xff]
      %v524 = vld [vmem:[%s2 + $0x78] sm:$0xff]
      %526 = vset.pattern.permute.xlu0 0
      %527 = vperm.xlu0 %526, %v509
      %v528 = vpop.permute.xlu0 %527
      %531 = vset.pattern.permute.xlu0 0
      %532 = vperm.xlu0 %531, %v510
      %v533 = vpop.permute.xlu0 %532
      %536 = vset.pattern.permute.xlu0 0
      %537 = vperm.xlu0 %536, %v511
      %v538 = vpop.permute.xlu0 %537
      %541 = vset.pattern.permute.xlu0 0
      %542 = vperm.xlu0 %541, %v512
      %v543 = vpop.permute.xlu0 %542
      %546 = vset.pattern.permute.xlu0 0
      %547 = vperm.xlu0 %546, %v513
      %v548 = vpop.permute.xlu0 %547
      %551 = vset.pattern.permute.xlu0 0
      %552 = vperm.xlu0 %551, %v514
      %v553 = vpop.permute.xlu0 %552
      %556 = vset.pattern.permute.xlu0 0
      %557 = vperm.xlu0 %556, %v515
      %v558 = vpop.permute.xlu0 %557
      %561 = vset.pattern.permute.xlu0 0
      %562 = vperm.xlu0 %561, %v516
      %v563 = vpop.permute.xlu0 %562
      %566 = vset.pattern.permute.xlu0 0
      %567 = vperm.xlu0 %566, %v517
      %v568 = vpop.permute.xlu0 %567
      %571 = vset.pattern.permute.xlu0 0
      %572 = vperm.xlu0 %571, %v518
      %v573 = vpop.permute.xlu0 %572
      %576 = vset.pattern.permute.xlu0 0
      %577 = vperm.xlu0 %576, %v519
      %v578 = vpop.permute.xlu0 %577
      %581 = vset.pattern.permute.xlu0 0
      %582 = vperm.xlu0 %581, %v520
      %v583 = vpop.permute.xlu0 %582
      %586 = vset.pattern.permute.xlu0 0
      %587 = vperm.xlu0 %586, %v521
      %v588 = vpop.permute.xlu0 %587
      %591 = vset.pattern.permute.xlu0 0
      %592 = vperm.xlu0 %591, %v522
      %v593 = vpop.permute.xlu0 %592
      %596 = vset.pattern.permute.xlu0 0
      %597 = vperm.xlu0 %596, %v523
      %v598 = vpop.permute.xlu0 %597
      %601 = vset.pattern.permute.xlu0 0
      %602 = vperm.xlu0 %601, %v524
      %v603 = vpop.permute.xlu0 %602
      %v605 = vadd.f32 %v493, %v528
      %v606 = vadd.f32 %v494, %v533
      %v607 = vadd.f32 %v495, %v538
      %v608 = vadd.f32 %v496, %v543
      %v609 = vadd.f32 %v497, %v548
      %v610 = vadd.f32 %v498, %v553
      %v611 = vadd.f32 %v499, %v558
      %v612 = vadd.f32 %v500, %v563
      %v613 = vadd.f32 %v501, %v568
      %v614 = vadd.f32 %v502, %v573
      %v615 = vadd.f32 %v503, %v578
      %v616 = vadd.f32 %v504, %v583
      %v617 = vadd.f32 %v505, %v588
      %v618 = vadd.f32 %v506, %v593
      %v619 = vadd.f32 %v507, %v598
      %v620 = vadd.f32 %v508, %v603
      %v621 = vmax.f32 %v605, 0.0
      %v622 = vmax.f32 %v606, 0.0
      %v623 = vmax.f32 %v607, 0.0
      %v624 = vmax.f32 %v608, 0.0
      %v625 = vmax.f32 %v609, 0.0
      %v626 = vmax.f32 %v610, 0.0
      %v627 = vmax.f32 %v611, 0.0
      %v628 = vmax.f32 %v612, 0.0
      %v629 = vmax.f32 %v613, 0.0
      %v630 = vmax.f32 %v614, 0.0
      %v631 = vmax.f32 %v615, 0.0
      %v632 = vmax.f32 %v616, 0.0
      %v633 = vmax.f32 %v617, 0.0
      %v634 = vmax.f32 %v618, 0.0
      %v635 = vmax.f32 %v619, 0.0
      %v636 = vmax.f32 %v620, 0.0
      %v637 = vld [vmem:[%s3] sm:$0xf]
      %v638 = vld [vmem:[%s3 + $0x4] sm:$0xf]
      %v639 = vld [vmem:[%s3 + $0x8] sm:$0xf]
      %v640 = vld [vmem:[%s3 + $0xc] sm:$0xf]
      %v641 = vld [vmem:[%s3 + $0x10] sm:$0xf]
      %v642 = vld [vmem:[%s3 + $0x14] sm:$0xf]
      %v643 = vld [vmem:[%s3 + $0x18] sm:$0xf]
      %v644 = vld [vmem:[%s3 + $0x1c] sm:$0xf]
      %v645 = vpack.c.bf16 %v622, %v621
      %v646 = vpack.c.bf16 %v624, %v623
      %v647 = vpack.c.bf16 %v626, %v625
      %v648 = vpack.c.bf16 %v628, %v627
      %v649 = vpack.c.bf16 %v630, %v629
      %v650 = vpack.c.bf16 %v632, %v631
      %v651 = vpack.c.bf16 %v634, %v633
      %v652 = vpack.c.bf16 %v636, %v635
      %v653 = vld [vmem:[%s4] sm:$0xff]
      %v654 = vld [vmem:[%s4 + $0x8] sm:$0xff]
      %v655 = vld [vmem:[%s4 + $0x10] sm:$0xff]
      %v656 = vld [vmem:[%s4 + $0x18] sm:$0xff]
      %v657 = vld [vmem:[%s4 + $0x20] sm:$0xff]
      %v658 = vld [vmem:[%s4 + $0x28] sm:$0xff]
      %v659 = vld [vmem:[%s4 + $0x30] sm:$0xff]
      %v660 = vld [vmem:[%s4 + $0x38] sm:$0xff]
      %662 = vset.pattern.permute.xlu0 0
      %663 = vperm.xlu0 %662, %v653
      %v664 = vpop.permute.xlu0 %663
      %667 = vset.pattern.permute.xlu0 0
      %668 = vperm.xlu0 %667, %v654
      %v669 = vpop.permute.xlu0 %668
      %672 = vset.pattern.permute.xlu0 0
      %673 = vperm.xlu0 %672, %v655
      %v674 = vpop.permute.xlu0 %673
      %677 = vset.pattern.permute.xlu0 0
      %678 = vperm.xlu0 %677, %v656
      %v679 = vpop.permute.xlu0 %678
      %682 = vset.pattern.permute.xlu0 0
      %683 = vperm.xlu0 %682, %v657
      %v684 = vpop.permute.xlu0 %683
      %687 = vset.pattern.permute.xlu0 0
      %688 = vperm.xlu0 %687, %v658
      %v689 = vpop.permute.xlu0 %688
      %692 = vset.pattern.permute.xlu0 0
      %693 = vperm.xlu0 %692, %v659
      %v694 = vpop.permute.xlu0 %693
      %697 = vset.pattern.permute.xlu0 0
      %698 = vperm.xlu0 %697, %v660
      %v699 = vpop.permute.xlu0 %698
      %v709 = vunpack.c.l.b16 %v637
      %v710 = vunpack.c.l.b16 %v638
      %v711 = vunpack.c.l.b16 %v639
      %v712 = vunpack.c.l.b16 %v640
      %v713 = vunpack.c.l.b16 %v641
      %v714 = vunpack.c.l.b16 %v642
      %v715 = vunpack.c.l.b16 %v643
      %v716 = vunpack.c.l.b16 %v644
      %v717 = vpack.c.b16 %v710, %v709
      %v718 = vpack.c.b16 %v712, %v711
      %v719 = vpack.c.b16 %v714, %v713
      %v720 = vpack.c.b16 %v716, %v715
      %725 = vmatprep.subr.bf16.mxu0 0
      %726 = vmatpush1.bf16.msra.mxu0 %v652
      %727 = vmatprep.subr.bf16.mxu0 0
      %728 = vmatpush1.bf16.msra.mxu0 %v651
      %729 = vmatprep.subr.bf16.mxu0 0
      %730 = vmatpush1.bf16.msra.mxu0 %v650
      %731 = vmatprep.subr.bf16.mxu0 0
      %732 = vmatpush1.bf16.msra.mxu0 %v649
      %733 = vmatprep.subr.bf16.mxu0 0
      %734 = vmatpush1.bf16.msra.mxu0 %v648
      %735 = vmatprep.subr.bf16.mxu0 0
      %736 = vmatpush1.bf16.msra.mxu0 %v647
      %737 = vmatprep.subr.bf16.mxu0 0
      %738 = vmatpush1.bf16.msra.mxu0 %v646
      %739 = vmatprep.subr.bf16.mxu0 0
      %740 = vmatpush1.bf16.msra.mxu0 %v645
      %741 = vmatprep.subr.bf16.mxu0 0
      %742 = vmatpush2.bf16.msra.mxu0 0
      %743 = vmatprep.subr.bf16.mxu0 0
      %744 = vmatpush2.bf16.msra.mxu0 0
      %745 = vmatprep.subr.bf16.mxu0 0
      %746 = vmatpush2.bf16.msra.mxu0 0
      %747 = vmatprep.subr.bf16.mxu0 0
      %748 = vmatpush2.bf16.msra.mxu0 0
      %749 = vmatprep.subr.bf16.mxu0 0
      %750 = vmatpush2.bf16.msra.mxu0 0
      %751 = vmatprep.subr.bf16.mxu0 0
      %752 = vmatpush2.bf16.msra.mxu0 0
      %753 = vmatprep.subr.bf16.mxu0 0
      %754 = vmatpush2.bf16.msra.mxu0 0
      %755 = vmatprep.subr.bf16.mxu0 0
      %756 = vmatpush2.bf16.msra.mxu0 0
      %757 = vmatprep.mubr.bf16.mxu0 0
      %758 = vmatmul.mubr.bf16.gmra.mxu0 %v717
      %v759 = vpop.f32.mrf.mxu0
      %v760 = vadd.f32 %v664, %v759
      %v761 = vpop.f32.mrf.mxu0
      %v762 = vpop.f32.mrf.mxu0
      %v763 = vadd.f32 %v669, %v762
      %v764 = vpop.f32.mrf.mxu0
      %765 = vmatprep.mubr.bf16.mxu0 0
      %766 = vmatmul.mubr.bf16.gmra.mxu0 %v718
      %v767 = vpop.f32.mrf.mxu0
      %v768 = vadd.f32 %v674, %v767
      %v769 = vpop.f32.mrf.mxu0
      %v770 = vpop.f32.mrf.mxu0
      %v771 = vadd.f32 %v679, %v770
      %v772 = vpop.f32.mrf.mxu0
      %773 = vmatprep.mubr.bf16.mxu0 0
      %774 = vmatmul.mubr.bf16.gmra.mxu0 %v719
      %v775 = vpop.f32.mrf.mxu0
      %v776 = vadd.f32 %v684, %v775
      %v777 = vpop.f32.mrf.mxu0
      %v778 = vpop.f32.mrf.mxu0
      %v779 = vadd.f32 %v689, %v778
      %v780 = vpop.f32.mrf.mxu0
      %781 = vmatprep.mubr.bf16.mxu0 0
      %782 = vmatmul.mubr.bf16.gmra.mxu0 %v720
      %v783 = vpop.f32.mrf.mxu0
      %v784 = vadd.f32 %v694, %v783
      %v785 = vpop.f32.mrf.mxu0
      %v786 = vpop.f32.mrf.mxu0
      %v787 = vadd.f32 %v699, %v786
      %v788 = vpop.f32.mrf.mxu0
      %789 = vdwg.mxu0
      %p790 = scmp.eq.s32.totalorder %s26, 0
      // Predicated region
      $region41: #{pointgen_forward.6} parent=39 // pred_check
        %p791 = pneg %p790
      $region42: #{pointgen_forward.6} parent=39 // pred_check_branch
        %793 = sbr.rel (%p791) target = $region44
      $region43: #{pointgen_forward.6} parent=39 // pred_region
        %vm794 = vcmask 7168
        %795 = vst.msk [vmem:[%s355] sm:$0xff] %vm794, 0.0
        %796 = vst.msk [vmem:[%s355 + $0x8] sm:$0xff] %vm794, 0.0
        %797 = vst.msk [vmem:[%s355 + $0x10] sm:$0xff] %vm794, 0.0
        %798 = vst.msk [vmem:[%s355 + $0x18] sm:$0xff] %vm794, 0.0
        %799 = vst.msk [vmem:[%s355 + $0x20] sm:$0xff] %vm794, 0.0
        %800 = vst.msk [vmem:[%s355 + $0x28] sm:$0xff] %vm794, 0.0
        %801 = vst.msk [vmem:[%s355 + $0x30] sm:$0xff] %vm794, 0.0
        %802 = vst.msk [vmem:[%s355 + $0x38] sm:$0xff] %vm794, 0.0
        %803 = vst.msk [vmem:[%s362] sm:$0xff] %vm794, 0.0
        %804 = vst.msk [vmem:[%s362 + $0x8] sm:$0xff] %vm794, 0.0
        %805 = vst.msk [vmem:[%s362 + $0x10] sm:$0xff] %vm794, 0.0
        %806 = vst.msk [vmem:[%s362 + $0x18] sm:$0xff] %vm794, 0.0
        %807 = vst.msk [vmem:[%s362 + $0x20] sm:$0xff] %vm794, 0.0
        %808 = vst.msk [vmem:[%s362 + $0x28] sm:$0xff] %vm794, 0.0
        %809 = vst.msk [vmem:[%s362 + $0x30] sm:$0xff] %vm794, 0.0
        %810 = vst.msk [vmem:[%s362 + $0x38] sm:$0xff] %vm794, 0.0
      $region44: #{pointgen_forward.6} parent=39 // pred_fallthru
        _
      %v811 = vld [vmem:[%s355] sm:$0xff]
      %v812 = vld [vmem:[%s355 + $0x8] sm:$0xff]
      %v813 = vld [vmem:[%s355 + $0x10] sm:$0xff]
      %v814 = vld [vmem:[%s355 + $0x18] sm:$0xff]
      %v815 = vld [vmem:[%s355 + $0x20] sm:$0xff]
      %v816 = vld [vmem:[%s355 + $0x28] sm:$0xff]
      %v817 = vld [vmem:[%s355 + $0x30] sm:$0xff]
      %v818 = vld [vmem:[%s355 + $0x38] sm:$0xff]
      %vm819 = vcmask 130048
      %v820 = vsel %vm819, %v760, 0.0
      %821 = vadd.xlane.f32.xlu0 %v820
      %v822 = vpop.xlane.xlu0 %821
      %v823 = vsel %vm819, %v763, 0.0
      %824 = vadd.xlane.f32.xlu0 %v823
      %v825 = vpop.xlane.xlu0 %824
      %v826 = vsel %vm819, %v768, 0.0
      %827 = vadd.xlane.f32.xlu0 %v826
      %v828 = vpop.xlane.xlu0 %827
      %v829 = vsel %vm819, %v771, 0.0
      %830 = vadd.xlane.f32.xlu0 %v829
      %v831 = vpop.xlane.xlu0 %830
      %v832 = vsel %vm819, %v776, 0.0
      %833 = vadd.xlane.f32.xlu0 %v832
      %v834 = vpop.xlane.xlu0 %833
      %v835 = vsel %vm819, %v779, 0.0
      %836 = vadd.xlane.f32.xlu0 %v835
      %v837 = vpop.xlane.xlu0 %836
      %v838 = vsel %vm819, %v784, 0.0
      %839 = vadd.xlane.f32.xlu0 %v838
      %v840 = vpop.xlane.xlu0 %839
      %v841 = vsel %vm819, %v787, 0.0
      %842 = vadd.xlane.f32.xlu0 %v841
      %v843 = vpop.xlane.xlu0 %842
      %v844 = vadd.f32 %v811, %v822
      %v845 = vadd.f32 %v812, %v825
      %v846 = vadd.f32 %v813, %v828
      %v847 = vadd.f32 %v814, %v831
      %v848 = vadd.f32 %v815, %v834
      %v849 = vadd.f32 %v816, %v837
      %v850 = vadd.f32 %v817, %v840
      %v851 = vadd.f32 %v818, %v843
      %vm852 = vcmask 7168
      %853 = vst.msk [vmem:[%s355] sm:$0xff] %vm852, %v844
      %854 = vst.msk [vmem:[%s355 + $0x8] sm:$0xff] %vm852, %v845
      %855 = vst.msk [vmem:[%s355 + $0x10] sm:$0xff] %vm852, %v846
      %856 = vst.msk [vmem:[%s355 + $0x18] sm:$0xff] %vm852, %v847
      %857 = vst.msk [vmem:[%s355 + $0x20] sm:$0xff] %vm852, %v848
      %858 = vst.msk [vmem:[%s355 + $0x28] sm:$0xff] %vm852, %v849
      %859 = vst.msk [vmem:[%s355 + $0x30] sm:$0xff] %vm852, %v850
      %860 = vst.msk [vmem:[%s355 + $0x38] sm:$0xff] %vm852, %v851
      %v861 = vld [vmem:[%s362] sm:$0xff]
      %v862 = vld [vmem:[%s362 + $0x8] sm:$0xff]
      %v863 = vld [vmem:[%s362 + $0x10] sm:$0xff]
      %v864 = vld [vmem:[%s362 + $0x18] sm:$0xff]
      %v865 = vld [vmem:[%s362 + $0x20] sm:$0xff]
      %v866 = vld [vmem:[%s362 + $0x28] sm:$0xff]
      %v867 = vld [vmem:[%s362 + $0x30] sm:$0xff]
      %v868 = vld [vmem:[%s362 + $0x38] sm:$0xff]
      %v869 = vmul.f32 %v760, %v760
      %v870 = vmul.f32 %v763, %v763
      %v871 = vmul.f32 %v768, %v768
      %v872 = vmul.f32 %v771, %v771
      %v873 = vmul.f32 %v776, %v776
      %v874 = vmul.f32 %v779, %v779
      %v875 = vmul.f32 %v784, %v784
      %v876 = vmul.f32 %v787, %v787
      %v877 = vsel %vm819, %v869, 0.0
      %878 = vadd.xlane.f32.xlu0 %v877
      %v879 = vpop.xlane.xlu0 %878
      %v880 = vsel %vm819, %v870, 0.0
      %881 = vadd.xlane.f32.xlu0 %v880
      %v882 = vpop.xlane.xlu0 %881
      %v883 = vsel %vm819, %v871, 0.0
      %884 = vadd.xlane.f32.xlu0 %v883
      %v885 = vpop.xlane.xlu0 %884
      %v886 = vsel %vm819, %v872, 0.0
      %887 = vadd.xlane.f32.xlu0 %v886
      %v888 = vpop.xlane.xlu0 %887
      %v889 = vsel %vm819, %v873, 0.0
      %890 = vadd.xlane.f32.xlu0 %v889
      %v891 = vpop.xlane.xlu0 %890
      %v892 = vsel %vm819, %v874, 0.0
      %893 = vadd.xlane.f32.xlu0 %v892
      %v894 = vpop.xlane.xlu0 %893
      %v895 = vsel %vm819, %v875, 0.0
      %896 = vadd.xlane.f32.xlu0 %v895
      %v897 = vpop.xlane.xlu0 %896
      %v898 = vsel %vm819, %v876, 0.0
      %899 = vadd.xlane.f32.xlu0 %v898
      %v900 = vpop.xlane.xlu0 %899
      %v901 = vadd.f32 %v861, %v879
      %v902 = vadd.f32 %v862, %v882
      %v903 = vadd.f32 %v863, %v885
      %v904 = vadd.f32 %v864, %v888
      %v905 = vadd.f32 %v865, %v891
      %v906 = vadd.f32 %v866, %v894
      %v907 = vadd.f32 %v867, %v897
      %v908 = vadd.f32 %v868, %v900
      %909 = vst.msk [vmem:[%s362] sm:$0xff] %vm852, %v901
      %910 = vst.msk [vmem:[%s362 + $0x8] sm:$0xff] %vm852, %v902
      %911 = vst.msk [vmem:[%s362 + $0x10] sm:$0xff] %vm852, %v903
      %912 = vst.msk [vmem:[%s362 + $0x18] sm:$0xff] %vm852, %v904
      %913 = vst.msk [vmem:[%s362 + $0x20] sm:$0xff] %vm852, %v905
      %914 = vst.msk [vmem:[%s362 + $0x28] sm:$0xff] %vm852, %v906
      %915 = vst.msk [vmem:[%s362 + $0x30] sm:$0xff] %vm852, %v907
      %916 = vst.msk [vmem:[%s362 + $0x38] sm:$0xff] %vm852, %v908
      %v917 = vpack.c.bf16 %v763, %v760
      %v918 = vpack.c.bf16 %v771, %v768
      %v919 = vpack.c.bf16 %v779, %v776
      %v920 = vpack.c.bf16 %v787, %v784
      %v925 = vunpack.c.l.b16 %v917
      %v926 = vunpack.c.h.b16 %v917
      %v927 = vunpack.c.l.b16 %v918
      %v928 = vunpack.c.h.b16 %v918
      %v929 = vunpack.c.l.b16 %v919
      %v930 = vunpack.c.h.b16 %v919
      %v931 = vunpack.c.l.b16 %v920
      %v932 = vunpack.c.h.b16 %v920
      %v933 = vpack.c.b16 %v925, %v925
      %v934 = vpack.c.b16 %v926, %v926
      %v935 = vpack.c.b16 %v927, %v927
      %v936 = vpack.c.b16 %v928, %v928
      %v937 = vpack.c.b16 %v929, %v929
      %v938 = vpack.c.b16 %v930, %v930
      %v939 = vpack.c.b16 %v931, %v931
      %v940 = vpack.c.b16 %v932, %v932
      %vm949 = vcmask 125952
      %950 = vst.msk [vmem:[%s348] sm:$0xf] %vm949, %v933
      %951 = vst.msk [vmem:[%s348 + $0x4] sm:$0xf] %vm949, %v934
      %952 = vst.msk [vmem:[%s348 + $0x8] sm:$0xf] %vm949, %v935
      %953 = vst.msk [vmem:[%s348 + $0xc] sm:$0xf] %vm949, %v936
      %954 = vst.msk [vmem:[%s348 + $0x10] sm:$0xf] %vm949, %v937
      %955 = vst.msk [vmem:[%s348 + $0x14] sm:$0xf] %vm949, %v938
      %956 = vst.msk [vmem:[%s348 + $0x18] sm:$0xf] %vm949, %v939
      %957 = vst.msk [vmem:[%s348 + $0x1c] sm:$0xf] %vm949, %v940
      %s958 = sadd.s32 %s25, %s26
      %p959 = scmp.lt.s32.totalorder %s24, 1
      %s960 = scalar_select %p959, %s24, 1
      %p961 = scmp.lt.s32.totalorder %s958, 0
      %s962 = scalar_select %p961, %s958, 0
      %s963 = smul.addr %s960, 8
      %s964 = sadd.s32 %s962, %s963
      %s965 = smul.addr %s964, 4
      %s966 = scalar_lea.vmem %s5, %s965
      %s967 = sadd.s32 %s24, %s25
      %p968 = scmp.lt.s32.totalorder %s967, 1
      %s969 = scalar_select %p968, %s967, 1
      %s970 = smul.addr %s969, 8
      %s971 = smul.addr %s970, 8
      %s972 = scalar_lea.vmem %s6, %s971
      %s973 = sadd.s32 %s24, %s25
      %p974 = scmp.lt.s32.totalorder %s973, 1
      %s975 = scalar_select %p974, %s973, 1
      %s976 = smul.addr %s975, 8
      %s977 = smul.addr %s976, 8
      %s978 = scalar_lea.vmem %s7, %s977
      // Predicated region
      $region45: #{pointgen_forward.6} parent=39 // pred_check
        %p979 = pneg %p174
      $region46: #{pointgen_forward.6} parent=39 // pred_check_branch
        %981 = sbr.rel (%p979) target = $region48
      $region47: #{pointgen_forward.6} parent=39 // pred_region
        %s982 = sadd.s32 %s25, %s26
      $region48: #{pointgen_forward.6} parent=39 // pred_fallthru
        _
      // Predicated region
      $region49: #{pointgen_forward.6} parent=39 // pred_check
        %p983 = pneg %p202
      $region50: #{pointgen_forward.6} parent=39 // pred_check_branch
        %985 = sbr.rel (%p983) target = $region52
      $region51: #{pointgen_forward.6} parent=39 // pred_region
        %s986 = sadd.s32 %s24, %s25
      $region52: #{pointgen_forward.6} parent=39 // pred_fallthru
        _
      // Predicated region
      $region53: #{pointgen_forward.6} parent=39 // pred_check
        %p987 = pneg %p230
      $region54: #{pointgen_forward.6} parent=39 // pred_check_branch
        %989 = sbr.rel (%p987) target = $region56
      $region55: #{pointgen_forward.6} parent=39 // pred_region
        %s990 = sadd.s32 %s24, %s25
      $region56: #{pointgen_forward.6} parent=39 // pred_fallthru
        _
    $region40: #{pointgen_forward.6} parent=5 // pred_fallthru
      _
    %p991 = scmp.le.s32.totalorder 2, %s14
    // Predicated region
    $region57: #{pointgen_forward.6} parent=5 // pred_check
      %p992 = pneg %p991
    $region58: #{pointgen_forward.6} parent=5 // pred_check_branch
      %994 = sbr.rel (%p992) target = $region60
    $region59: #{pointgen_forward.6} parent=5 // pred_region
      %s995 = ssub.s32 %s14, 2
      // Predicated region
      $region61: #{pointgen_forward.6} parent=59 // pred_check
        %p996 = pneg %p180
      $region62: #{pointgen_forward.6} parent=59 // pred_check_branch
        %998 = sbr.rel (%p996) target = $region64
      $region63: #{pointgen_forward.6} parent=59 // pred_region
        %s999 = sadd.s32 %s28, %s29
        %p1000 = scmp.lt.s32.totalorder %s27, 1
        %s1001 = scalar_select %p1000, %s27, 1
        %p1002 = scmp.lt.s32.totalorder %s999, 0
        %s1003 = scalar_select %p1002, %s999, 0
        %s1004 = smul.addr %s1001, 8
        %s1005 = sadd.s32 %s1003, %s1004
        %s1006 = smul.addr %s1005, 4
        %s1007 = scalar_lea.vmem %s5, %s1006
      $region64: #{pointgen_forward.6} parent=59 // pred_fallthru
        _
      // Predicated region
      $region65: #{pointgen_forward.6} parent=59 // pred_check
        %p1008 = pneg %p208
      $region66: #{pointgen_forward.6} parent=59 // pred_check_branch
        %1010 = sbr.rel (%p1008) target = $region68
      $region67: #{pointgen_forward.6} parent=59 // pred_region
        %s1011 = sadd.s32 %s27, %s28
        %p1012 = scmp.lt.s32.totalorder %s1011, 1
        %s1013 = scalar_select %p1012, %s1011, 1
        %s1014 = smul.addr %s1013, 8
        %s1015 = smul.addr %s1014, 8
        %s1016 = scalar_lea.vmem %s6, %s1015
      $region68: #{pointgen_forward.6} parent=59 // pred_fallthru
        _
      // Predicated region
      $region69: #{pointgen_forward.6} parent=59 // pred_check
        %p1017 = pneg %p236
      $region70: #{pointgen_forward.6} parent=59 // pred_check_branch
        %1019 = sbr.rel (%p1017) target = $region72
      $region71: #{pointgen_forward.6} parent=59 // pred_region
        %s1020 = sadd.s32 %s27, %s28
        %p1021 = scmp.lt.s32.totalorder %s1020, 1
        %s1022 = scalar_select %p1021, %s1020, 1
        %s1023 = smul.addr %s1022, 8
        %s1024 = smul.addr %s1023, 8
        %s1025 = scalar_lea.vmem %s7, %s1024
      $region72: #{pointgen_forward.6} parent=59 // pred_fallthru
        _
    $region60: #{pointgen_forward.6} parent=5 // pred_fallthru
      _
  $region6: #{pointgen_forward.6} parent=0 // loop_footer
    %s18 = sadd.s32 1, %s14
  $region7: #{pointgen_forward.6} parent=0 // loop_footer_branch
    %13 = sbr.rel target = $region3
  $region8: #{pointgen_forward.6} parent=0 // loop_exit
    _

// kernel: pointgen_forward.5
$region0: #{pointgen_forward.5}
  #allocation0 [shape = 'u32[]', space=smem, size = 0x4, offset = 0x4, fixed_abs, tag = 'smem constant byte address 0x4 - core index']
  #allocation1 [shape = 'u32[144,128]{1,0:T(1,128)}', space=vmem, size = 0x12000, scoped, tag = 'internal scratch']
  %s0 = inlined_call_operand.vmem [shape: bf16[2,256,16], index: 0, kind: input, shape index: {}]
  %s1 = inlined_call_operand.vmem [shape: f32[256,1], index: 1, kind: input, shape index: {}]
  %s2 = inlined_call_operand.vmem [shape: f32[256,1], index: 2, kind: input, shape index: {}]
  %s3 = inlined_call_operand.vmem [shape: bf16[128,256], index: 3, kind: input, shape index: {}]
  %s4 = inlined_call_operand.vmem [shape: f32[128,1], index: 4, kind: input, shape index: {}]
  %s5 = inlined_call_operand.vmem [shape: bf16[2,128,16], index: 5, kind: output, shape index: {0}]
  %s6 = inlined_call_operand.vmem [shape: f32[2,128,1], index: 6, kind: output, shape index: {1}]
  %s7 = inlined_call_operand.vmem [shape: f32[2,128,1], index: 7, kind: output, shape index: {2}]
  %8 = xla_tuple %s5, %s6, %s7
  %s9 = sld [smem:[#allocation0]]
  $region73: #{pointgen_forward.5} parent=0
    _
  %s11 = ssub.s32 1, %s9
  %s12 = scalar_select 0, %s11, %s9
  loop: start=0, step=1, limit=4
  $region2: #{pointgen_forward.5} parent=0 // loop_pre_header
    _
  $region3: #{pointgen_forward.5} parent=0 // loop_header
    %s14 = sphi 0, %s18
    %p15 = scmp.ge.s32.totalorder %s14, 4
    %s21 = sphi 0, %s40
    %s22 = sphi 0, %s36
    %s23 = sphi 0, %s32
    %s24 = sphi 0, %s21
    %s25 = sphi 0, %s22
    %s26 = sphi 0, %s23
    %s27 = sphi 0, %s24
    %s28 = sphi 0, %s25
    %s29 = sphi 0, %s26
    %s47 = sphi 0, %s49
    %s50 = sphi 0, %s47
    %s51 = sphi 0, %s50
    %s67 = sphi 0, %s51
    %s71 = sphi 0, %s71
    %s73 = sphi 0, %s71
    %s74 = sphi 0, %s73
    %s88 = sphi 0, %s74
    %s92 = sphi 0, %s92
    %s94 = sphi 0, %s92
    %s95 = sphi 0, %s94
    %s109 = sphi 0, %s95
    %s113 = sphi 0, %s113
    %s115 = sphi 0, %s113
    %s116 = sphi 0, %s115
    %s130 = sphi 0, %s116
    %s134 = sphi 0, %s134
    %s136 = sphi 0, %s134
    %s137 = sphi 0, %s136
    %s151 = sphi 0, %s137
    %s161 = sphi 0, %s163
    %s164 = sphi 0, %s161
    %s165 = sphi 0, %s164
    %s181 = sphi 0, %s165
    %s189 = sphi 0, %s191
    %s192 = sphi 0, %s189
    %s193 = sphi 0, %s192
    %s209 = sphi 0, %s193
    %s217 = sphi 0, %s219
    %s220 = sphi 0, %s217
    %s221 = sphi 0, %s220
    %s237 = sphi 0, %s221
  $region4: #{pointgen_forward.5} parent=0 // loop_header_branch
    %17 = sbr.rel (%p15) target = $region8
  $region5: #{pointgen_forward.5} parent=0 // loop_body
    %s19 = ssub.s32 %s14, 1
    %s20 = ssub.s32 %s14, 2
    %s30 = sadd.s32 1, %s23
    %p31 = scmp.ge.s32.totalorder %s30, 1
    %s32 = scalar_select %p31, 0, %s30
    %s33 = sadd.s32 1, %s22
    %s34 = scalar_select %p31, %s33, %s22
    %p35 = scmp.ge.s32.totalorder %s34, 1
    %s36 = scalar_select %p35, 0, %s34
    %s37 = sadd.s32 1, %s21
    %s38 = scalar_select %p35, %s37, %s21
    %p39 = scmp.ge.s32.totalorder %s38, 2
    %s40 = scalar_select %p39, 0, %s38
    %s41 = sadd.s32 %s22, %s23
    %s42 = sadd.s32 %s36, %s32
    %s43 = ssub.s32 %s21, %s40
    %s44 = ssub.s32 %s41, %s42
    %s45 = sor.u32 %s43, %s44
    %p46 = scmp.eq.s32.totalorder %s45, 0
    %s48 = sadd.s32 %s47, 1
    %s49 = scalar_select %p46, %s47, %s48
    %p52 = pneg %p46
    %p53 = scmp.eq.s32.totalorder %s14, 1
    %p54 = por %p52, %p53
    %p55 = scmp.ne.s32.totalorder %s47, %s50
    %p56 = scmp.eq.s32.totalorder %s14, 0
    %p57 = por %p55, %p56
    %p58 = scmp.ne.s32.totalorder %s47, %s50
    %p59 = scmp.eq.s32.totalorder %s19, 1
    %p60 = por %p58, %p59
    %p61 = scmp.ne.s32.totalorder %s50, %s51
    %p62 = scmp.eq.s32.totalorder %s19, 0
    %p63 = por %p61, %p62
    %p64 = scmp.ne.s32.totalorder %s50, %s51
    %p65 = scmp.eq.s32.totalorder %s20, 1
    %p66 = por %p64, %p65
    %p68 = scmp.ne.s32.totalorder %s51, %s67
    %p69 = scmp.eq.s32.totalorder %s20, 0
    %p70 = por %p68, %p69
    %s72 = sadd.s32 %s71, 1
    %p75 = scmp.eq.s32.totalorder %s14, 1
    %p76 = scmp.ne.s32.totalorder %s71, %s73
    %p77 = scmp.eq.s32.totalorder %s14, 0
    %p78 = por %p76, %p77
    %p79 = scmp.ne.s32.totalorder %s71, %s73
    %p80 = scmp.eq.s32.totalorder %s19, 1
    %p81 = por %p79, %p80
    %p82 = scmp.ne.s32.totalorder %s73, %s74
    %p83 = scmp.eq.s32.totalorder %s19, 0
    %p84 = por %p82, %p83
    %p85 = scmp.ne.s32.totalorder %s73, %s74
    %p86 = scmp.eq.s32.totalorder %s20, 1
    %p87 = por %p85, %p86
    %p89 = scmp.ne.s32.totalorder %s74, %s88
    %p90 = scmp.eq.s32.totalorder %s20, 0
    %p91 = por %p89, %p90
    %s93 = sadd.s32 %s92, 1
    %p96 = scmp.eq.s32.totalorder %s14, 1
    %p97 = scmp.ne.s32.totalorder %s92, %s94
    %p98 = scmp.eq.s32.totalorder %s14, 0
    %p99 = por %p97, %p98
    %p100 = scmp.ne.s32.totalorder %s92, %s94
    %p101 = scmp.eq.s32.totalorder %s19, 1
    %p102 = por %p100, %p101
    %p103 = scmp.ne.s32.totalorder %s94, %s95
    %p104 = scmp.eq.s32.totalorder %s19, 0
    %p105 = por %p103, %p104
    %p106 = scmp.ne.s32.totalorder %s94, %s95
    %p107 = scmp.eq.s32.totalorder %s20, 1
    %p108 = por %p106, %p107
    %p110 = scmp.ne.s32.totalorder %s95, %s109
    %p111 = scmp.eq.s32.totalorder %s20, 0
    %p112 = por %p110, %p111
    %s114 = sadd.s32 %s113, 1
    %p117 = scmp.eq.s32.totalorder %s14, 1
    %p118 = scmp.ne.s32.totalorder %s113, %s115
    %p119 = scmp.eq.s32.totalorder %s14, 0
    %p120 = por %p118, %p119
    %p121 = scmp.ne.s32.totalorder %s113, %s115
    %p122 = scmp.eq.s32.totalorder %s19, 1
    %p123 = por %p121, %p122
    %p124 = scmp.ne.s32.totalorder %s115, %s116
    %p125 = scmp.eq.s32.totalorder %s19, 0
    %p126 = por %p124, %p125
    %p127 = scmp.ne.s32.totalorder %s115, %s116
    %p128 = scmp.eq.s32.totalorder %s20, 1
    %p129 = por %p127, %p128
    %p131 = scmp.ne.s32.totalorder %s116, %s130
    %p132 = scmp.eq.s32.totalorder %s20, 0
    %p133 = por %p131, %p132
    %s135 = sadd.s32 %s134, 1
    %p138 = scmp.eq.s32.totalorder %s14, 1
    %p139 = scmp.ne.s32.totalorder %s134, %s136
    %p140 = scmp.eq.s32.totalorder %s14, 0
    %p141 = por %p139, %p140
    %p142 = scmp.ne.s32.totalorder %s134, %s136
    %p143 = scmp.eq.s32.totalorder %s19, 1
    %p144 = por %p142, %p143
    %p145 = scmp.ne.s32.totalorder %s136, %s137
    %p146 = scmp.eq.s32.totalorder %s19, 0
    %p147 = por %p145, %p146
    %p148 = scmp.ne.s32.totalorder %s136, %s137
    %p149 = scmp.eq.s32.totalorder %s20, 1
    %p150 = por %p148, %p149
    %p152 = scmp.ne.s32.totalorder %s137, %s151
    %p153 = scmp.eq.s32.totalorder %s20, 0
    %p154 = por %p152, %p153
    %s155 = sadd.s32 %s22, %s23
    %s156 = sadd.s32 %s36, %s32
    %s157 = ssub.s32 %s21, %s40
    %s158 = ssub.s32 %s155, %s156
    %s159 = sor.u32 %s157, %s158
    %p160 = scmp.eq.s32.totalorder %s159, 0
    %s162 = sadd.s32 %s161, 1
    %s163 = scalar_select %p160, %s161, %s162
    %p166 = pneg %p160
    %p167 = scmp.eq.s32.totalorder %s14, 1
    %p168 = por %p166, %p167
    %p169 = scmp.ne.s32.totalorder %s161, %s164
    %p170 = scmp.eq.s32.totalorder %s14, 0
    %p171 = por %p169, %p170
    %p172 = scmp.ne.s32.totalorder %s161, %s164
    %p173 = scmp.eq.s32.totalorder %s19, 1
    %p174 = por %p172, %p173
    %p175 = scmp.ne.s32.totalorder %s164, %s165
    %p176 = scmp.eq.s32.totalorder %s19, 0
    %p177 = por %p175, %p176
    %p178 = scmp.ne.s32.totalorder %s164, %s165
    %p179 = scmp.eq.s32.totalorder %s20, 1
    %p180 = por %p178, %p179
    %p182 = scmp.ne.s32.totalorder %s165, %s181
    %p183 = scmp.eq.s32.totalorder %s20, 0
    %p184 = por %p182, %p183
    %s185 = sadd.s32 %s21, %s22
    %s186 = sadd.s32 %s40, %s36
    %s187 = ssub.s32 %s185, %s186
    %p188 = scmp.eq.s32.totalorder %s187, 0
    %s190 = sadd.s32 %s189, 1
    %s191 = scalar_select %p188, %s189, %s190
    %p194 = pneg %p188
    %p195 = scmp.eq.s32.totalorder %s14, 1
    %p196 = por %p194, %p195
    %p197 = scmp.ne.s32.totalorder %s189, %s192
    %p198 = scmp.eq.s32.totalorder %s14, 0
    %p199 = por %p197, %p198
    %p200 = scmp.ne.s32.totalorder %s189, %s192
    %p201 = scmp.eq.s32.totalorder %s19, 1
    %p202 = por %p200, %p201
    %p203 = scmp.ne.s32.totalorder %s192, %s193
    %p204 = scmp.eq.s32.totalorder %s19, 0
    %p205 = por %p203, %p204
    %p206 = scmp.ne.s32.totalorder %s192, %s193
    %p207 = scmp.eq.s32.totalorder %s20, 1
    %p208 = por %p206, %p207
    %p210 = scmp.ne.s32.totalorder %s193, %s209
    %p211 = scmp.eq.s32.totalorder %s20, 0
    %p212 = por %p210, %p211
    %s213 = sadd.s32 %s21, %s22
    %s214 = sadd.s32 %s40, %s36
    %s215 = ssub.s32 %s213, %s214
    %p216 = scmp.eq.s32.totalorder %s215, 0
    %s218 = sadd.s32 %s217, 1
    %s219 = scalar_select %p216, %s217, %s218
    %p222 = pneg %p216
    %p223 = scmp.eq.s32.totalorder %s14, 1
    %p224 = por %p222, %p223
    %p225 = scmp.ne.s32.totalorder %s217, %s220
    %p226 = scmp.eq.s32.totalorder %s14, 0
    %p227 = por %p225, %p226
    %p228 = scmp.ne.s32.totalorder %s217, %s220
    %p229 = scmp.eq.s32.totalorder %s19, 1
    %p230 = por %p228, %p229
    %p231 = scmp.ne.s32.totalorder %s220, %s221
    %p232 = scmp.eq.s32.totalorder %s19, 0
    %p233 = por %p231, %p232
    %p234 = scmp.ne.s32.totalorder %s220, %s221
    %p235 = scmp.eq.s32.totalorder %s20, 1
    %p236 = por %p234, %p235
    %p238 = scmp.ne.s32.totalorder %s221, %s237
    %p239 = scmp.eq.s32.totalorder %s20, 0
    %p240 = por %p238, %p239
    %p241 = scmp.le.s32.totalorder 1, %s14
    %p242 = scmp.lt.s32.totalorder %s14, 3
    %p243 = pnand %p241, %p242
    %p244 = pneg %p243
    // Predicated region
    $region9: #{pointgen_forward.5} parent=5 // pred_check
      _
    $region10: #{pointgen_forward.5} parent=5 // pred_check_branch
      %246 = sbr.rel (%p243) target = $region12
    $region11: #{pointgen_forward.5} parent=5 // pred_region
      %s247 = ssub.s32 %s14, 1
      // Predicated region
      $region13: #{pointgen_forward.5} parent=11 // pred_check
        %p248 = pneg %p84
      $region14: #{pointgen_forward.5} parent=11 // pred_check_branch
        %250 = sbr.rel (%p248) target = $region16
      $region15: #{pointgen_forward.5} parent=11 // pred_region
        _
      $region16: #{pointgen_forward.5} parent=11 // pred_fallthru
        _
      // Predicated region
      $region17: #{pointgen_forward.5} parent=11 // pred_check
        %p251 = pneg %p105
      $region18: #{pointgen_forward.5} parent=11 // pred_check_branch
        %253 = sbr.rel (%p251) target = $region20
      $region19: #{pointgen_forward.5} parent=11 // pred_region
        _
      $region20: #{pointgen_forward.5} parent=11 // pred_fallthru
        _
      // Predicated region
      $region21: #{pointgen_forward.5} parent=11 // pred_check
        %p254 = pneg %p126
      $region22: #{pointgen_forward.5} parent=11 // pred_check_branch
        %256 = sbr.rel (%p254) target = $region24
      $region23: #{pointgen_forward.5} parent=11 // pred_region
        _
      $region24: #{pointgen_forward.5} parent=11 // pred_fallthru
        _
      // Predicated region
      $region25: #{pointgen_forward.5} parent=11 // pred_check
        %p257 = pneg %p147
      $region26: #{pointgen_forward.5} parent=11 // pred_check_branch
        %259 = sbr.rel (%p257) target = $region28
      $region27: #{pointgen_forward.5} parent=11 // pred_region
        _
      $region28: #{pointgen_forward.5} parent=11 // pred_fallthru
        _
    $region12: #{pointgen_forward.5} parent=5 // pred_fallthru
      _
    %p260 = scmp.lt.s32.totalorder %s14, 2
    // Predicated region
    $region29: #{pointgen_forward.5} parent=5 // pred_check
      %p261 = pneg %p260
    $region30: #{pointgen_forward.5} parent=5 // pred_check_branch
      %263 = sbr.rel (%p261) target = $region32
    $region31: #{pointgen_forward.5} parent=5 // pred_region
      // Predicated region
      $region33: #{pointgen_forward.5} parent=31 // pred_check
        %p264 = pneg %p57
      $region34: #{pointgen_forward.5} parent=31 // pred_check_branch
        %266 = sbr.rel (%p264) target = $region36
      $region35: #{pointgen_forward.5} parent=31 // pred_region
        %s267 = sadd.s32 %s22, %s23
        %p268 = scmp.lt.s32.totalorder %s21, 1
        %s269 = scalar_select %p268, %s21, 1
        %p270 = scmp.lt.s32.totalorder %s267, 0
        %s271 = scalar_select %p270, %s267, 0
        %s272 = smul.addr %s269, 32
        %s273 = sadd.s32 %s271, %s272
        %s274 = smul.addr %s273, 4
        %s275 = scalar_lea.vmem %s0, %s274
        %s276 = sadd.s32 %s22, %s23
      $region36: #{pointgen_forward.5} parent=31 // pred_fallthru
        _
    $region32: #{pointgen_forward.5} parent=5 // pred_fallthru
      _
    %p277 = scmp.le.s32.totalorder 1, %s14
    %p278 = scmp.lt.s32.totalorder %s14, 3
    %p279 = pnand %p277, %p278
    %p280 = pneg %p279
    // Predicated region
    $region37: #{pointgen_forward.5} parent=5 // pred_check
      _
    $region38: #{pointgen_forward.5} parent=5 // pred_check_branch
      %282 = sbr.rel (%p279) target = $region40
    $region39: #{pointgen_forward.5} parent=5 // pred_region
      %s283 = ssub.s32 %s14, 1
      %s284 = sadd.s32 %s25, %s26
      %p285 = scmp.lt.s32.totalorder %s24, 1
      %s286 = scalar_select %p285, %s24, 1
      %p287 = scmp.lt.s32.totalorder %s284, 0
      %s288 = scalar_select %p287, %s284, 0
      %s289 = smul.addr %s286, 32
      %s290 = sadd.s32 %s288, %s289
      %s291 = smul.addr %s290, 4
      %s292 = scalar_lea.vmem %s0, %s291
      %p293 = pneg %p63
      %p294 = pneg %p60
      %p295 = pneg %p84
      %p296 = pneg %p81
      %p297 = pneg %p105
      %p298 = pneg %p102
      %p299 = pneg %p126
      %p300 = pneg %p123
      %p301 = pneg %p147
      %p302 = pneg %p144
      %p303 = pneg %p177
      %p304 = pneg %p174
      %s305 = sadd.s32 %s25, %s26
      %p306 = scmp.lt.s32.totalorder %s24, 1
      %s307 = scalar_select %p306, %s24, 1
      %p308 = scmp.lt.s32.totalorder %s305, 0
      %s309 = scalar_select %p308, %s305, 0
      %s310 = smul.addr %s307, 16
      %s311 = sadd.s32 %s309, %s310
      %s312 = smul.addr %s311, 4
      %s313 = scalar_lea.vmem %s5, %s312
      %p314 = pneg %p205
      %p315 = pneg %p202
      %s316 = sadd.s32 %s24, %s25
      %p317 = scmp.lt.s32.totalorder %s316, 1
      %s318 = scalar_select %p317, %s316, 1
      %s319 = smul.addr %s318, 16
      %s320 = smul.addr %s319, 8
      %s321 = scalar_lea.vmem %s6, %s320
      %p322 = pneg %p233
      %p323 = pneg %p230
      %s324 = sadd.s32 %s24, %s25
      %p325 = scmp.lt.s32.totalorder %s324, 1
      %s326 = scalar_select %p325, %s324, 1
      %s327 = smul.addr %s326, 16
      %s328 = smul.addr %s327, 8
      %s329 = scalar_lea.vmem %s7, %s328
      %s330 = sadd.s32 %s25, %s26
      %p331 = scmp.lt.s32.totalorder %s24, 1
      %s332 = scalar_select %p331, %s24, 1
      %p333 = scmp.lt.s32.totalorder %s330, 0
      %s334 = scalar_select %p333, %s330, 0
      %s335 = smul.addr %s332, 32
      %s336 = sadd.s32 %s334, %s335
      %s337 = smul.addr %s336, 4
      %s338 = scalar_lea.vmem %s0, %s337
      %s339 = sadd.s32 %s25, %s26
      %s340 = sadd.s32 %s25, %s26
      %p341 = scmp.lt.s32.totalorder %s24, 1
      %s342 = scalar_select %p341, %s24, 1
      %p343 = scmp.lt.s32.totalorder %s340, 0
      %s344 = scalar_select %p343, %s340, 0
      %s345 = smul.addr %s342, 16
      %s346 = sadd.s32 %s344, %s345
      %s347 = smul.addr %s346, 4
      %s348 = scalar_lea.vmem %s5, %s347
      %s349 = sadd.s32 %s25, %s26
      %s350 = sadd.s32 %s24, %s25
      %p351 = scmp.lt.s32.totalorder %s350, 1
      %s352 = scalar_select %p351, %s350, 1
      %s353 = smul.addr %s352, 16
      %s354 = smul.addr %s353, 8
      %s355 = scalar_lea.vmem %s6, %s354
      %s356 = sadd.s32 %s24, %s25
      %s357 = sadd.s32 %s24, %s25
      %p358 = scmp.lt.s32.totalorder %s357, 1
      %s359 = scalar_select %p358, %s357, 1
      %s360 = smul.addr %s359, 16
      %s361 = smul.addr %s360, 8
      %s362 = scalar_lea.vmem %s7, %s361
      %s363 = sadd.s32 %s24, %s25
      %v365 = vld [vmem:[%s338] sm:$0xf]
      %v366 = vld [vmem:[%s338 + $0x4] sm:$0xf]
      %v367 = vld [vmem:[%s338 + $0x8] sm:$0xf]
      %v368 = vld [vmem:[%s338 + $0xc] sm:$0xf]
      %v369 = vld [vmem:[%s338 + $0x10] sm:$0xf]
      %v370 = vld [vmem:[%s338 + $0x14] sm:$0xf]
      %v371 = vld [vmem:[%s338 + $0x18] sm:$0xf]
      %v372 = vld [vmem:[%s338 + $0x1c] sm:$0xf]
      %v373 = vld [vmem:[%s338 + $0x20] sm:$0xf]
      %v374 = vld [vmem:[%s338 + $0x24] sm:$0xf]
      %v375 = vld [vmem:[%s338 + $0x28] sm:$0xf]
      %v376 = vld [vmem:[%s338 + $0x2c] sm:$0xf]
      %v377 = vld [vmem:[%s338 + $0x30] sm:$0xf]
      %v378 = vld [vmem:[%s338 + $0x34] sm:$0xf]
      %v379 = vld [vmem:[%s338 + $0x38] sm:$0xf]
      %v380 = vld [vmem:[%s338 + $0x3c] sm:$0xf]
      %v381 = vld [vmem:[%s338 + $0x40] sm:$0xf]
      %v382 = vld [vmem:[%s338 + $0x44] sm:$0xf]
      %v383 = vld [vmem:[%s338 + $0x48] sm:$0xf]
      %v384 = vld [vmem:[%s338 + $0x4c] sm:$0xf]
      %v385 = vld [vmem:[%s338 + $0x50] sm:$0xf]
      %v386 = vld [vmem:[%s338 + $0x54] sm:$0xf]
      %v387 = vld [vmem:[%s338 + $0x58] sm:$0xf]
      %v388 = vld [vmem:[%s338 + $0x5c] sm:$0xf]
      %v389 = vld [vmem:[%s338 + $0x60] sm:$0xf]
      %v390 = vld [vmem:[%s338 + $0x64] sm:$0xf]
      %v391 = vld [vmem:[%s338 + $0x68] sm:$0xf]
      %v392 = vld [vmem:[%s338 + $0x6c] sm:$0xf]
      %v393 = vld [vmem:[%s338 + $0x70] sm:$0xf]
      %v394 = vld [vmem:[%s338 + $0x74] sm:$0xf]
      %v395 = vld [vmem:[%s338 + $0x78] sm:$0xf]
      %v396 = vld [vmem:[%s338 + $0x7c] sm:$0xf]
      %v397 = vunpack.c.l.bf16 %v365
      %v398 = vunpack.c.l.bf16 %v366
      %v399 = vunpack.c.l.bf16 %v367
      %v400 = vunpack.c.l.bf16 %v368
      %v401 = vunpack.c.l.bf16 %v369
      %v402 = vunpack.c.l.bf16 %v370
      %v403 = vunpack.c.l.bf16 %v371
      %v404 = vunpack.c.l.bf16 %v372
      %v405 = vunpack.c.l.bf16 %v373
      %v406 = vunpack.c.l.bf16 %v374
      %v407 = vunpack.c.l.bf16 %v375
      %v408 = vunpack.c.l.bf16 %v376
      %v409 = vunpack.c.l.bf16 %v377
      %v410 = vunpack.c.l.bf16 %v378
      %v411 = vunpack.c.l.bf16 %v379
      %v412 = vunpack.c.l.bf16 %v380
      %v413 = vunpack.c.l.bf16 %v381
      %v414 = vunpack.c.l.bf16 %v382
      %v415 = vunpack.c.l.bf16 %v383
      %v416 = vunpack.c.l.bf16 %v384
      %v417 = vunpack.c.l.bf16 %v385
      %v418 = vunpack.c.l.bf16 %v386
      %v419 = vunpack.c.l.bf16 %v387
      %v420 = vunpack.c.l.bf16 %v388
      %v421 = vunpack.c.l.bf16 %v389
      %v422 = vunpack.c.l.bf16 %v390
      %v423 = vunpack.c.l.bf16 %v391
      %v424 = vunpack.c.l.bf16 %v392
      %v425 = vunpack.c.l.bf16 %v393
      %v426 = vunpack.c.l.bf16 %v394
      %v427 = vunpack.c.l.bf16 %v395
      %v428 = vunpack.c.l.bf16 %v396
      %v429 = vld [vmem:[%s1] sm:$0xff]
      %v430 = vld [vmem:[%s1 + $0x8] sm:$0xff]
      %v431 = vld [vmem:[%s1 + $0x10] sm:$0xff]
      %v432 = vld [vmem:[%s1 + $0x18] sm:$0xff]
      %v433 = vld [vmem:[%s1 + $0x20] sm:$0xff]
      %v434 = vld [vmem:[%s1 + $0x28] sm:$0xff]
      %v435 = vld [vmem:[%s1 + $0x30] sm:$0xff]
      %v436 = vld [vmem:[%s1 + $0x38] sm:$0xff]
      %v437 = vld [vmem:[%s1 + $0x40] sm:$0xff]
      %v438 = vld [vmem:[%s1 + $0x48] sm:$0xff]
      %v439 = vld [vmem:[%s1 + $0x50] sm:$0xff]
      %v440 = vld [vmem:[%s1 + $0x58] sm:$0xff]
      %v441 = vld [vmem:[%s1 + $0x60] sm:$0xff]
      %v442 = vld [vmem:[%s1 + $0x68] sm:$0xff]
      %v443 = vld [vmem:[%s1 + $0x70] sm:$0xff]
      %v444 = vld [vmem:[%s1 + $0x78] sm:$0xff]
      %v445 = vld [vmem:[%s1 + $0x80] sm:$0xff]
      %v446 = vld [vmem:[%s1 + $0x88] sm:$0xff]
      %v447 = vld [vmem:[%s1 + $0x90] sm:$0xff]
      %v448 = vld [vmem:[%s1 + $0x98] sm:$0xff]
      %v449 = vld [vmem:[%s1 + $0xa0] sm:$0xff]
      %v450 = vld [vmem:[%s1 + $0xa8] sm:$0xff]
      %v451 = vld [vmem:[%s1 + $0xb0] sm:$0xff]
      %v452 = vld [vmem:[%s1 + $0xb8] sm:$0xff]
      %v453 = vld [vmem:[%s1 + $0xc0] sm:$0xff]
      %v454 = vld [vmem:[%s1 + $0xc8] sm:$0xff]
      %v455 = vld [vmem:[%s1 + $0xd0] sm:$0xff]
      %v456 = vld [vmem:[%s1 + $0xd8] sm:$0xff]
      %v457 = vld [vmem:[%s1 + $0xe0] sm:$0xff]
      %v458 = vld [vmem:[%s1 + $0xe8] sm:$0xff]
      %v459 = vld [vmem:[%s1 + $0xf0] sm:$0xff]
      %v460 = vld [vmem:[%s1 + $0xf8] sm:$0xff]
      %462 = vset.pattern.permute.xlu0 0
      %463 = vperm.xlu0 %462, %v429
      %v464 = vpop.permute.xlu0 %463
      %467 = vset.pattern.permute.xlu0 0
      %468 = vperm.xlu0 %467, %v430
      %v469 = vpop.permute.xlu0 %468
      %472 = vset.pattern.permute.xlu0 0
      %473 = vperm.xlu0 %472, %v431
      %v474 = vpop.permute.xlu0 %473
      %477 = vset.pattern.permute.xlu0 0
      %478 = vperm.xlu0 %477, %v432
      %v479 = vpop.permute.xlu0 %478
      %482 = vset.pattern.permute.xlu0 0
      %483 = vperm.xlu0 %482, %v433
      %v484 = vpop.permute.xlu0 %483
      %487 = vset.pattern.permute.xlu0 0
      %488 = vperm.xlu0 %487, %v434
      %v489 = vpop.permute.xlu0 %488
      %492 = vset.pattern.permute.xlu0 0
      %493 = vperm.xlu0 %492, %v435
      %v494 = vpop.permute.xlu0 %493
      %497 = vset.pattern.permute.xlu0 0
      %498 = vperm.xlu0 %497, %v436
      %v499 = vpop.permute.xlu0 %498
      %502 = vset.pattern.permute.xlu0 0
      %503 = vperm.xlu0 %502, %v437
      %v504 = vpop.permute.xlu0 %503
      %507 = vset.pattern.permute.xlu0 0
      %508 = vperm.xlu0 %507, %v438
      %v509 = vpop.permute.xlu0 %508
      %512 = vset.pattern.permute.xlu0 0
      %513 = vperm.xlu0 %512, %v439
      %v514 = vpop.permute.xlu0 %513
      %517 = vset.pattern.permute.xlu0 0
      %518 = vperm.xlu0 %517, %v440
      %v519 = vpop.permute.xlu0 %518
      %522 = vset.pattern.permute.xlu0 0
      %523 = vperm.xlu0 %522, %v441
      %v524 = vpop.permute.xlu0 %523
      %527 = vset.pattern.permute.xlu0 0
      %528 = vperm.xlu0 %527, %v442
      %v529 = vpop.permute.xlu0 %528
      %532 = vset.pattern.permute.xlu0 0
      %533 = vperm.xlu0 %532, %v443
      %v534 = vpop.permute.xlu0 %533
      %537 = vset.pattern.permute.xlu0 0
      %538 = vperm.xlu0 %537, %v444
      %v539 = vpop.permute.xlu0 %538
      %542 = vset.pattern.permute.xlu0 0
      %543 = vperm.xlu0 %542, %v445
      %v544 = vpop.permute.xlu0 %543
      %547 = vset.pattern.permute.xlu0 0
      %548 = vperm.xlu0 %547, %v446
      %v549 = vpop.permute.xlu0 %548
      %552 = vset.pattern.permute.xlu0 0
      %553 = vperm.xlu0 %552, %v447
      %v554 = vpop.permute.xlu0 %553
      %557 = vset.pattern.permute.xlu0 0
      %558 = vperm.xlu0 %557, %v448
      %v559 = vpop.permute.xlu0 %558
      %562 = vset.pattern.permute.xlu0 0
      %563 = vperm.xlu0 %562, %v449
      %v564 = vpop.permute.xlu0 %563
      %567 = vset.pattern.permute.xlu0 0
      %568 = vperm.xlu0 %567, %v450
      %v569 = vpop.permute.xlu0 %568
      %572 = vset.pattern.permute.xlu0 0
      %573 = vperm.xlu0 %572, %v451
      %v574 = vpop.permute.xlu0 %573
      %577 = vset.pattern.permute.xlu0 0
      %578 = vperm.xlu0 %577, %v452
      %v579 = vpop.permute.xlu0 %578
      %582 = vset.pattern.permute.xlu0 0
      %583 = vperm.xlu0 %582, %v453
      %v584 = vpop.permute.xlu0 %583
      %587 = vset.pattern.permute.xlu0 0
      %588 = vperm.xlu0 %587, %v454
      %v589 = vpop.permute.xlu0 %588
      %592 = vset.pattern.permute.xlu0 0
      %593 = vperm.xlu0 %592, %v455
      %v594 = vpop.permute.xlu0 %593
      %597 = vset.pattern.permute.xlu0 0
      %598 = vperm.xlu0 %597, %v456
      %v599 = vpop.permute.xlu0 %598
      %602 = vset.pattern.permute.xlu0 0
      %603 = vperm.xlu0 %602, %v457
      %v604 = vpop.permute.xlu0 %603
      %607 = vset.pattern.permute.xlu0 0
      %608 = vperm.xlu0 %607, %v458
      %v609 = vpop.permute.xlu0 %608
      %612 = vset.pattern.permute.xlu0 0
      %613 = vperm.xlu0 %612, %v459
      %v614 = vpop.permute.xlu0 %613
      %617 = vset.pattern.permute.xlu0 0
      %618 = vperm.xlu0 %617, %v460
      %v619 = vpop.permute.xlu0 %618
      %v621 = vmul.f32 %v397, %v464
      %v622 = vmul.f32 %v398, %v469
      %v623 = vmul.f32 %v399, %v474
      %v624 = vmul.f32 %v400, %v479
      %v625 = vmul.f32 %v401, %v484
      %v626 = vmul.f32 %v402, %v489
      %v627 = vmul.f32 %v403, %v494
      %v628 = vmul.f32 %v404, %v499
      %v629 = vmul.f32 %v405, %v504
      %v630 = vmul.f32 %v406, %v509
      %v631 = vmul.f32 %v407, %v514
      %v632 = vmul.f32 %v408, %v519
      %v633 = vmul.f32 %v409, %v524
      %v634 = vmul.f32 %v410, %v529
      %v635 = vmul.f32 %v411, %v534
      %v636 = vmul.f32 %v412, %v539
      %v637 = vmul.f32 %v413, %v544
      %v638 = vmul.f32 %v414, %v549
      %v639 = vmul.f32 %v415, %v554
      %v640 = vmul.f32 %v416, %v559
      %v641 = vmul.f32 %v417, %v564
      %v642 = vmul.f32 %v418, %v569
      %v643 = vmul.f32 %v419, %v574
      %v644 = vmul.f32 %v420, %v579
      %v645 = vmul.f32 %v421, %v584
      %v646 = vmul.f32 %v422, %v589
      %v647 = vmul.f32 %v423, %v594
      %v648 = vmul.f32 %v424, %v599
      %v649 = vmul.f32 %v425, %v604
      %v650 = vmul.f32 %v426, %v609
      %v651 = vmul.f32 %v427, %v614
      %v652 = vmul.f32 %v428, %v619
      %v653 = vld [vmem:[%s2] sm:$0xff]
      %v654 = vld [vmem:[%s2 + $0x8] sm:$0xff]
      %v655 = vld [vmem:[%s2 + $0x10] sm:$0xff]
      %v656 = vld [vmem:[%s2 + $0x18] sm:$0xff]
      %v657 = vld [vmem:[%s2 + $0x20] sm:$0xff]
      %v658 = vld [vmem:[%s2 + $0x28] sm:$0xff]
      %v659 = vld [vmem:[%s2 + $0x30] sm:$0xff]
      %v660 = vld [vmem:[%s2 + $0x38] sm:$0xff]
      %v661 = vld [vmem:[%s2 + $0x40] sm:$0xff]
      %v662 = vld [vmem:[%s2 + $0x48] sm:$0xff]
      %v663 = vld [vmem:[%s2 + $0x50] sm:$0xff]
      %v664 = vld [vmem:[%s2 + $0x58] sm:$0xff]
      %v665 = vld [vmem:[%s2 + $0x60] sm:$0xff]
      %v666 = vld [vmem:[%s2 + $0x68] sm:$0xff]
      %v667 = vld [vmem:[%s2 + $0x70] sm:$0xff]
      %v668 = vld [vmem:[%s2 + $0x78] sm:$0xff]
      %v669 = vld [vmem:[%s2 + $0x80] sm:$0xff]
      %v670 = vld [vmem:[%s2 + $0x88] sm:$0xff]
      %v671 = vld [vmem:[%s2 + $0x90] sm:$0xff]
      %v672 = vld [vmem:[%s2 + $0x98] sm:$0xff]
      %v673 = vld [vmem:[%s2 + $0xa0] sm:$0xff]
      %v674 = vld [vmem:[%s2 + $0xa8] sm:$0xff]
      %v675 = vld [vmem:[%s2 + $0xb0] sm:$0xff]
      %v676 = vld [vmem:[%s2 + $0xb8] sm:$0xff]
      %v677 = vld [vmem:[%s2 + $0xc0] sm:$0xff]
      %v678 = vld [vmem:[%s2 + $0xc8] sm:$0xff]
      %v679 = vld [vmem:[%s2 + $0xd0] sm:$0xff]
      %v680 = vld [vmem:[%s2 + $0xd8] sm:$0xff]
      %v681 = vld [vmem:[%s2 + $0xe0] sm:$0xff]
      %v682 = vld [vmem:[%s2 + $0xe8] sm:$0xff]
      %v683 = vld [vmem:[%s2 + $0xf0] sm:$0xff]
      %v684 = vld [vmem:[%s2 + $0xf8] sm:$0xff]
      %686 = vset.pattern.permute.xlu0 0
      %687 = vperm.xlu0 %686, %v653
      %v688 = vpop.permute.xlu0 %687
      %691 = vset.pattern.permute.xlu0 0
      %692 = vperm.xlu0 %691, %v654
      %v693 = vpop.permute.xlu0 %692
      %696 = vset.pattern.permute.xlu0 0
      %697 = vperm.xlu0 %696, %v655
      %v698 = vpop.permute.xlu0 %697
      %701 = vset.pattern.permute.xlu0 0
      %702 = vperm.xlu0 %701, %v656
      %v703 = vpop.permute.xlu0 %702
      %706 = vset.pattern.permute.xlu0 0
      %707 = vperm.xlu0 %706, %v657
      %v708 = vpop.permute.xlu0 %707
      %711 = vset.pattern.permute.xlu0 0
      %712 = vperm.xlu0 %711, %v658
      %v713 = vpop.permute.xlu0 %712
      %716 = vset.pattern.permute.xlu0 0
      %717 = vperm.xlu0 %716, %v659
      %v718 = vpop.permute.xlu0 %717
      %721 = vset.pattern.permute.xlu0 0
      %722 = vperm.xlu0 %721, %v660
      %v723 = vpop.permute.xlu0 %722
      %726 = vset.pattern.permute.xlu0 0
      %727 = vperm.xlu0 %726, %v661
      %v728 = vpop.permute.xlu0 %727
      %731 = vset.pattern.permute.xlu0 0
      %732 = vperm.xlu0 %731, %v662
      %v733 = vpop.permute.xlu0 %732
      %736 = vset.pattern.permute.xlu0 0
      %737 = vperm.xlu0 %736, %v663
      %v738 = vpop.permute.xlu0 %737
      %741 = vset.pattern.permute.xlu0 0
      %742 = vperm.xlu0 %741, %v664
      %v743 = vpop.permute.xlu0 %742
      %746 = vset.pattern.permute.xlu0 0
      %747 = vperm.xlu0 %746, %v665
      %v748 = vpop.permute.xlu0 %747
      %751 = vset.pattern.permute.xlu0 0
      %752 = vperm.xlu0 %751, %v666
      %v753 = vpop.permute.xlu0 %752
      %756 = vset.pattern.permute.xlu0 0
      %757 = vperm.xlu0 %756, %v667
      %v758 = vpop.permute.xlu0 %757
      %761 = vset.pattern.permute.xlu0 0
      %762 = vperm.xlu0 %761, %v668
      %v763 = vpop.permute.xlu0 %762
      %766 = vset.pattern.permute.xlu0 0
      %767 = vperm.xlu0 %766, %v669
      %v768 = vpop.permute.xlu0 %767
      %771 = vset.pattern.permute.xlu0 0
      %772 = vperm.xlu0 %771, %v670
      %v773 = vpop.permute.xlu0 %772
      %776 = vset.pattern.permute.xlu0 0
      %777 = vperm.xlu0 %776, %v671
      %v778 = vpop.permute.xlu0 %777
      %781 = vset.pattern.permute.xlu0 0
      %782 = vperm.xlu0 %781, %v672
      %v783 = vpop.permute.xlu0 %782
      %786 = vset.pattern.permute.xlu0 0
      %787 = vperm.xlu0 %786, %v673
      %v788 = vpop.permute.xlu0 %787
      %791 = vset.pattern.permute.xlu0 0
      %792 = vperm.xlu0 %791, %v674
      %v793 = vpop.permute.xlu0 %792
      %796 = vset.pattern.permute.xlu0 0
      %797 = vperm.xlu0 %796, %v675
      %v798 = vpop.permute.xlu0 %797
      %801 = vset.pattern.permute.xlu0 0
      %802 = vperm.xlu0 %801, %v676
      %v803 = vpop.permute.xlu0 %802
      %806 = vset.pattern.permute.xlu0 0
      %807 = vperm.xlu0 %806, %v677
      %v808 = vpop.permute.xlu0 %807
      %811 = vset.pattern.permute.xlu0 0
      %812 = vperm.xlu0 %811, %v678
      %v813 = vpop.permute.xlu0 %812
      %816 = vset.pattern.permute.xlu0 0
      %817 = vperm.xlu0 %816, %v679
      %v818 = vpop.permute.xlu0 %817
      %821 = vset.pattern.permute.xlu0 0
      %822 = vperm.xlu0 %821, %v680
      %v823 = vpop.permute.xlu0 %822
      %826 = vset.pattern.permute.xlu0 0
      %827 = vperm.xlu0 %826, %v681
      %v828 = vpop.permute.xlu0 %827
      %831 = vset.pattern.permute.xlu0 0
      %832 = vperm.xlu0 %831, %v682
      %v833 = vpop.permute.xlu0 %832
      %836 = vset.pattern.permute.xlu0 0
      %837 = vperm.xlu0 %836, %v683
      %v838 = vpop.permute.xlu0 %837
      %841 = vset.pattern.permute.xlu0 0
      %842 = vperm.xlu0 %841, %v684
      %v843 = vpop.permute.xlu0 %842
      %v845 = vadd.f32 %v621, %v688
      %v846 = vadd.f32 %v622, %v693
      %v847 = vadd.f32 %v623, %v698
      %v848 = vadd.f32 %v624, %v703
      %v849 = vadd.f32 %v625, %v708
      %v850 = vadd.f32 %v626, %v713
      %v851 = vadd.f32 %v627, %v718
      %v852 = vadd.f32 %v628, %v723
      %v853 = vadd.f32 %v629, %v728
      %v854 = vadd.f32 %v630, %v733
      %v855 = vadd.f32 %v631, %v738
      %v856 = vadd.f32 %v632, %v743
      %v857 = vadd.f32 %v633, %v748
      %v858 = vadd.f32 %v634, %v753
      %v859 = vadd.f32 %v635, %v758
      %v860 = vadd.f32 %v636, %v763
      %v861 = vadd.f32 %v637, %v768
      %v862 = vadd.f32 %v638, %v773
      %v863 = vadd.f32 %v639, %v778
      %v864 = vadd.f32 %v640, %v783
      %v865 = vadd.f32 %v641, %v788
      %v866 = vadd.f32 %v642, %v793
      %v867 = vadd.f32 %v643, %v798
      %v868 = vadd.f32 %v644, %v803
      %v869 = vadd.f32 %v645, %v808
      %v870 = vadd.f32 %v646, %v813
      %v871 = vadd.f32 %v647, %v818
      %v872 = vadd.f32 %v648, %v823
      %v873 = vadd.f32 %v649, %v828
      %v874 = vadd.f32 %v650, %v833
      %v875 = vadd.f32 %v651, %v838
      %v876 = vadd.f32 %v652, %v843
      %v877 = vmax.f32 %v845, 0.0
      %v878 = vmax.f32 %v846, 0.0
      %v879 = vmax.f32 %v847, 0.0
      %v880 = vmax.f32 %v848, 0.0
      %v881 = vmax.f32 %v849, 0.0
      %v882 = vmax.f32 %v850, 0.0
      %v883 = vmax.f32 %v851, 0.0
      %v884 = vmax.f32 %v852, 0.0
      %v885 = vmax.f32 %v853, 0.0
      %v886 = vmax.f32 %v854, 0.0
      %v887 = vmax.f32 %v855, 0.0
      %v888 = vmax.f32 %v856, 0.0
      %v889 = vmax.f32 %v857, 0.0
      %v890 = vmax.f32 %v858, 0.0
      %v891 = vmax.f32 %v859, 0.0
      %v892 = vmax.f32 %v860, 0.0
      %v893 = vmax.f32 %v861, 0.0
      %v894 = vmax.f32 %v862, 0.0
      %v895 = vmax.f32 %v863, 0.0
      %v896 = vmax.f32 %v864, 0.0
      %v897 = vmax.f32 %v865, 0.0
      %v898 = vmax.f32 %v866, 0.0
      %v899 = vmax.f32 %v867, 0.0
      %v900 = vmax.f32 %v868, 0.0
      %v901 = vmax.f32 %v869, 0.0
      %v902 = vmax.f32 %v870, 0.0
      %v903 = vmax.f32 %v871, 0.0
      %v904 = vmax.f32 %v872, 0.0
      %v905 = vmax.f32 %v873, 0.0
      %v906 = vmax.f32 %v874, 0.0
      %v907 = vmax.f32 %v875, 0.0
      %v908 = vmax.f32 %v876, 0.0
      %v909 = vld [vmem:[%s3] sm:$0xff]
      %v910 = vld [vmem:[%s3 + $0x8] sm:$0xff]
      %v911 = vld [vmem:[%s3 + $0x10] sm:$0xff]
      %v912 = vld [vmem:[%s3 + $0x18] sm:$0xff]
      %v913 = vld [vmem:[%s3 + $0x20] sm:$0xff]
      %v914 = vld [vmem:[%s3 + $0x28] sm:$0xff]
      %v915 = vld [vmem:[%s3 + $0x30] sm:$0xff]
      %v916 = vld [vmem:[%s3 + $0x38] sm:$0xff]
      %v917 = vld [vmem:[%s3 + $0x40] sm:$0xff]
      %v918 = vld [vmem:[%s3 + $0x48] sm:$0xff]
      %v919 = vld [vmem:[%s3 + $0x50] sm:$0xff]
      %v920 = vld [vmem:[%s3 + $0x58] sm:$0xff]
      %v921 = vld [vmem:[%s3 + $0x60] sm:$0xff]
      %v922 = vld [vmem:[%s3 + $0x68] sm:$0xff]
      %v923 = vld [vmem:[%s3 + $0x70] sm:$0xff]
      %v924 = vld [vmem:[%s3 + $0x78] sm:$0xff]
      %v925 = vpack.c.bf16 %v878, %v877
      %v926 = vpack.c.bf16 %v880, %v879
      %v927 = vpack.c.bf16 %v882, %v881
      %v928 = vpack.c.bf16 %v884, %v883
      %v929 = vpack.c.bf16 %v886, %v885
      %v930 = vpack.c.bf16 %v888, %v887
      %v931 = vpack.c.bf16 %v890, %v889
      %v932 = vpack.c.bf16 %v892, %v891
      %v933 = vpack.c.bf16 %v894, %v893
      %v934 = vpack.c.bf16 %v896, %v895
      %v935 = vpack.c.bf16 %v898, %v897
      %v936 = vpack.c.bf16 %v900, %v899
      %v937 = vpack.c.bf16 %v902, %v901
      %v938 = vpack.c.bf16 %v904, %v903
      %v939 = vpack.c.bf16 %v906, %v905
      %v940 = vpack.c.bf16 %v908, %v907
      %v941 = vld [vmem:[%s4] sm:$0xff]
      %v942 = vld [vmem:[%s4 + $0x8] sm:$0xff]
      %v943 = vld [vmem:[%s4 + $0x10] sm:$0xff]
      %v944 = vld [vmem:[%s4 + $0x18] sm:$0xff]
      %v945 = vld [vmem:[%s4 + $0x20] sm:$0xff]
      %v946 = vld [vmem:[%s4 + $0x28] sm:$0xff]
      %v947 = vld [vmem:[%s4 + $0x30] sm:$0xff]
      %v948 = vld [vmem:[%s4 + $0x38] sm:$0xff]
      %v949 = vld [vmem:[%s4 + $0x40] sm:$0xff]
      %v950 = vld [vmem:[%s4 + $0x48] sm:$0xff]
      %v951 = vld [vmem:[%s4 + $0x50] sm:$0xff]
      %v952 = vld [vmem:[%s4 + $0x58] sm:$0xff]
      %v953 = vld [vmem:[%s4 + $0x60] sm:$0xff]
      %v954 = vld [vmem:[%s4 + $0x68] sm:$0xff]
      %v955 = vld [vmem:[%s4 + $0x70] sm:$0xff]
      %v956 = vld [vmem:[%s4 + $0x78] sm:$0xff]
      %958 = vset.pattern.permute.xlu0 0
      %959 = vperm.xlu0 %958, %v941
      %v960 = vpop.permute.xlu0 %959
      %963 = vset.pattern.permute.xlu0 0
      %964 = vperm.xlu0 %963, %v942
      %v965 = vpop.permute.xlu0 %964
      %968 = vset.pattern.permute.xlu0 0
      %969 = vperm.xlu0 %968, %v943
      %v970 = vpop.permute.xlu0 %969
      %973 = vset.pattern.permute.xlu0 0
      %974 = vperm.xlu0 %973, %v944
      %v975 = vpop.permute.xlu0 %974
      %978 = vset.pattern.permute.xlu0 0
      %979 = vperm.xlu0 %978, %v945
      %v980 = vpop.permute.xlu0 %979
      %983 = vset.pattern.permute.xlu0 0
      %984 = vperm.xlu0 %983, %v946
      %v985 = vpop.permute.xlu0 %984
      %988 = vset.pattern.permute.xlu0 0
      %989 = vperm.xlu0 %988, %v947
      %v990 = vpop.permute.xlu0 %989
      %993 = vset.pattern.permute.xlu0 0
      %994 = vperm.xlu0 %993, %v948
      %v995 = vpop.permute.xlu0 %994
      %998 = vset.pattern.permute.xlu0 0
      %999 = vperm.xlu0 %998, %v949
      %v1000 = vpop.permute.xlu0 %999
      %1003 = vset.pattern.permute.xlu0 0
      %1004 = vperm.xlu0 %1003, %v950
      %v1005 = vpop.permute.xlu0 %1004
      %1008 = vset.pattern.permute.xlu0 0
      %1009 = vperm.xlu0 %1008, %v951
      %v1010 = vpop.permute.xlu0 %1009
      %1013 = vset.pattern.permute.xlu0 0
      %1014 = vperm.xlu0 %1013, %v952
      %v1015 = vpop.permute.xlu0 %1014
      %1018 = vset.pattern.permute.xlu0 0
      %1019 = vperm.xlu0 %1018, %v953
      %v1020 = vpop.permute.xlu0 %1019
      %1023 = vset.pattern.permute.xlu0 0
      %1024 = vperm.xlu0 %1023, %v954
      %v1025 = vpop.permute.xlu0 %1024
      %1028 = vset.pattern.permute.xlu0 0
      %1029 = vperm.xlu0 %1028, %v955
      %v1030 = vpop.permute.xlu0 %1029
      %1033 = vset.pattern.permute.xlu0 0
      %1034 = vperm.xlu0 %1033, %v956
      %v1035 = vpop.permute.xlu0 %1034
      %v1053 = vunpack.c.l.b16 %v909
      %v1054 = vunpack.c.h.b16 %v909
      %v1055 = vunpack.c.l.b16 %v910
      %v1056 = vunpack.c.h.b16 %v910
      %v1057 = vunpack.c.l.b16 %v911
      %v1058 = vunpack.c.h.b16 %v911
      %v1059 = vunpack.c.l.b16 %v912
      %v1060 = vunpack.c.h.b16 %v912
      %v1061 = vunpack.c.l.b16 %v913
      %v1062 = vunpack.c.h.b16 %v913
      %v1063 = vunpack.c.l.b16 %v914
      %v1064 = vunpack.c.h.b16 %v914
      %v1065 = vunpack.c.l.b16 %v915
      %v1066 = vunpack.c.h.b16 %v915
      %v1067 = vunpack.c.l.b16 %v916
      %v1068 = vunpack.c.h.b16 %v916
      %v1069 = vunpack.c.l.b16 %v917
      %v1070 = vunpack.c.h.b16 %v917
      %v1071 = vunpack.c.l.b16 %v918
      %v1072 = vunpack.c.h.b16 %v918
      %v1073 = vunpack.c.l.b16 %v919
      %v1074 = vunpack.c.h.b16 %v919
      %v1075 = vunpack.c.l.b16 %v920
      %v1076 = vunpack.c.h.b16 %v920
      %v1077 = vunpack.c.l.b16 %v921
      %v1078 = vunpack.c.h.b16 %v921
      %v1079 = vunpack.c.l.b16 %v922
      %v1080 = vunpack.c.h.b16 %v922
      %v1081 = vunpack.c.l.b16 %v923
      %v1082 = vunpack.c.h.b16 %v923
      %v1083 = vunpack.c.l.b16 %v924
      %v1084 = vunpack.c.h.b16 %v924
      %v1085 = vpack.c.b16 %v1055, %v1053
      %v1086 = vpack.c.b16 %v1056, %v1054
      %v1087 = vpack.c.b16 %v1059, %v1057
      %v1088 = vpack.c.b16 %v1060, %v1058
      %v1089 = vpack.c.b16 %v1063, %v1061
      %v1090 = vpack.c.b16 %v1064, %v1062
      %v1091 = vpack.c.b16 %v1067, %v1065
      %v1092 = vpack.c.b16 %v1068, %v1066
      %v1093 = vpack.c.b16 %v1071, %v1069
      %v1094 = vpack.c.b16 %v1072, %v1070
      %v1095 = vpack.c.b16 %v1075, %v1073
      %v1096 = vpack.c.b16 %v1076, %v1074
      %v1097 = vpack.c.b16 %v1079, %v1077
      %v1098 = vpack.c.b16 %v1080, %v1078
      %v1099 = vpack.c.b16 %v1083, %v1081
      %v1100 = vpack.c.b16 %v1084, %v1082
      %1117 = vmatprep.subr.bf16.mxu0 0
      %1118 = vmatpush1.bf16.msra.mxu0 %v932
      %1119 = vmatprep.subr.bf16.mxu0 0
      %1120 = vmatpush1.bf16.msra.mxu0 %v931
      %1121 = vmatprep.subr.bf16.mxu0 0
      %1122 = vmatpush1.bf16.msra.mxu0 %v930
      %1123 = vmatprep.subr.bf16.mxu0 0
      %1124 = vmatpush1.bf16.msra.mxu0 %v929
      %1125 = vmatprep.subr.bf16.mxu0 0
      %1126 = vmatpush1.bf16.msra.mxu0 %v928
      %1127 = vmatprep.subr.bf16.mxu0 0
      %1128 = vmatpush1.bf16.msra.mxu0 %v927
      %1129 = vmatprep.subr.bf16.mxu0 0
      %1130 = vmatpush1.bf16.msra.mxu0 %v926
      %1131 = vmatprep.subr.bf16.mxu0 0
      %1132 = vmatpush1.bf16.msra.mxu0 %v925
      %1133 = vmatprep.subr.bf16.mxu0 0
      %1134 = vmatpush2.bf16.msra.mxu0 %v940
      %1135 = vmatprep.subr.bf16.mxu0 0
      %1136 = vmatpush2.bf16.msra.mxu0 %v939
      %1137 = vmatprep.subr.bf16.mxu0 0
      %1138 = vmatpush2.bf16.msra.mxu0 %v938
      %1139 = vmatprep.subr.bf16.mxu0 0
      %1140 = vmatpush2.bf16.msra.mxu0 %v937
      %1141 = vmatprep.subr.bf16.mxu0 0
      %1142 = vmatpush2.bf16.msra.mxu0 %v936
      %1143 = vmatprep.subr.bf16.mxu0 0
      %1144 = vmatpush2.bf16.msra.mxu0 %v935
      %1145 = vmatprep.subr.bf16.mxu0 0
      %1146 = vmatpush2.bf16.msra.mxu0 %v934
      %1147 = vmatprep.subr.bf16.mxu0 0
      %1148 = vmatpush2.bf16.msra.mxu0 %v933
      %1149 = vmatprep.mubr.bf16.mxu0 %v1086
      %1150 = vmatmul.mubr.bf16.gmra.mxu0 %v1085
      %v1151 = vpop.f32.mrf.mxu0
      %v1152 = vadd.f32 %v960, %v1151
      %v1153 = vpop.f32.mrf.mxu0
      %v1154 = vpop.f32.mrf.mxu0
      %v1155 = vadd.f32 %v965, %v1154
      %v1156 = vpop.f32.mrf.mxu0
      %1157 = vmatprep.mubr.bf16.mxu0 %v1088
      %1158 = vmatmul.mubr.bf16.gmra.mxu0 %v1087
      %v1159 = vpop.f32.mrf.mxu0
      %v1160 = vadd.f32 %v970, %v1159
      %v1161 = vpop.f32.mrf.mxu0
      %v1162 = vpop.f32.mrf.mxu0
      %v1163 = vadd.f32 %v975, %v1162
      %v1164 = vpop.f32.mrf.mxu0
      %1165 = vmatprep.mubr.bf16.mxu0 %v1090
      %1166 = vmatmul.mubr.bf16.gmra.mxu0 %v1089
      %v1167 = vpop.f32.mrf.mxu0
      %v1168 = vadd.f32 %v980, %v1167
      %v1169 = vpop.f32.mrf.mxu0
      %v1170 = vpop.f32.mrf.mxu0
      %v1171 = vadd.f32 %v985, %v1170
      %v1172 = vpop.f32.mrf.mxu0
      %1173 = vmatprep.mubr.bf16.mxu0 %v1092
      %1174 = vmatmul.mubr.bf16.gmra.mxu0 %v1091
      %v1175 = vpop.f32.mrf.mxu0
      %v1176 = vadd.f32 %v990, %v1175
      %v1177 = vpop.f32.mrf.mxu0
      %v1178 = vpop.f32.mrf.mxu0
      %v1179 = vadd.f32 %v995, %v1178
      %v1180 = vpop.f32.mrf.mxu0
      %1181 = vmatprep.mubr.bf16.mxu0 %v1094
      %1182 = vmatmul.mubr.bf16.gmra.mxu0 %v1093
      %v1183 = vpop.f32.mrf.mxu0
      %v1184 = vadd.f32 %v1000, %v1183
      %v1185 = vpop.f32.mrf.mxu0
      %v1186 = vpop.f32.mrf.mxu0
      %v1187 = vadd.f32 %v1005, %v1186
      %v1188 = vpop.f32.mrf.mxu0
      %1189 = vmatprep.mubr.bf16.mxu0 %v1096
      %1190 = vmatmul.mubr.bf16.gmra.mxu0 %v1095
      %v1191 = vpop.f32.mrf.mxu0
      %v1192 = vadd.f32 %v1010, %v1191
      %v1193 = vpop.f32.mrf.mxu0
      %v1194 = vpop.f32.mrf.mxu0
      %v1195 = vadd.f32 %v1015, %v1194
      %v1196 = vpop.f32.mrf.mxu0
      %1197 = vmatprep.mubr.bf16.mxu0 %v1098
      %1198 = vmatmul.mubr.bf16.gmra.mxu0 %v1097
      %v1199 = vpop.f32.mrf.mxu0
      %v1200 = vadd.f32 %v1020, %v1199
      %v1201 = vpop.f32.mrf.mxu0
      %v1202 = vpop.f32.mrf.mxu0
      %v1203 = vadd.f32 %v1025, %v1202
      %v1204 = vpop.f32.mrf.mxu0
      %1205 = vmatprep.mubr.bf16.mxu0 %v1100
      %1206 = vmatmul.mubr.bf16.gmra.mxu0 %v1099
      %v1207 = vpop.f32.mrf.mxu0
      %v1208 = vadd.f32 %v1030, %v1207
      %v1209 = vpop.f32.mrf.mxu0
      %v1210 = vpop.f32.mrf.mxu0
      %v1211 = vadd.f32 %v1035, %v1210
      %v1212 = vpop.f32.mrf.mxu0
      %1213 = vdwg.mxu0
      %p1214 = scmp.eq.s32.totalorder %s26, 0
      // Predicated region
      $region41: #{pointgen_forward.5} parent=39 // pred_check
        %p1215 = pneg %p1214
      $region42: #{pointgen_forward.5} parent=39 // pred_check_branch
        %1217 = sbr.rel (%p1215) target = $region44
      $region43: #{pointgen_forward.5} parent=39 // pred_region
        %vm1218 = vcmask 7168
        %1219 = vst.msk [vmem:[%s355] sm:$0xff] %vm1218, 0.0
        %1220 = vst.msk [vmem:[%s355 + $0x8] sm:$0xff] %vm1218, 0.0
        %1221 = vst.msk [vmem:[%s355 + $0x10] sm:$0xff] %vm1218, 0.0
        %1222 = vst.msk [vmem:[%s355 + $0x18] sm:$0xff] %vm1218, 0.0
        %1223 = vst.msk [vmem:[%s355 + $0x20] sm:$0xff] %vm1218, 0.0
        %1224 = vst.msk [vmem:[%s355 + $0x28] sm:$0xff] %vm1218, 0.0
        %1225 = vst.msk [vmem:[%s355 + $0x30] sm:$0xff] %vm1218, 0.0
        %1226 = vst.msk [vmem:[%s355 + $0x38] sm:$0xff] %vm1218, 0.0
        %1227 = vst.msk [vmem:[%s355 + $0x40] sm:$0xff] %vm1218, 0.0
        %1228 = vst.msk [vmem:[%s355 + $0x48] sm:$0xff] %vm1218, 0.0
        %1229 = vst.msk [vmem:[%s355 + $0x50] sm:$0xff] %vm1218, 0.0
        %1230 = vst.msk [vmem:[%s355 + $0x58] sm:$0xff] %vm1218, 0.0
        %1231 = vst.msk [vmem:[%s355 + $0x60] sm:$0xff] %vm1218, 0.0
        %1232 = vst.msk [vmem:[%s355 + $0x68] sm:$0xff] %vm1218, 0.0
        %1233 = vst.msk [vmem:[%s355 + $0x70] sm:$0xff] %vm1218, 0.0
        %1234 = vst.msk [vmem:[%s355 + $0x78] sm:$0xff] %vm1218, 0.0
        %1235 = vst.msk [vmem:[%s362] sm:$0xff] %vm1218, 0.0
        %1236 = vst.msk [vmem:[%s362 + $0x8] sm:$0xff] %vm1218, 0.0
        %1237 = vst.msk [vmem:[%s362 + $0x10] sm:$0xff] %vm1218, 0.0
        %1238 = vst.msk [vmem:[%s362 + $0x18] sm:$0xff] %vm1218, 0.0
        %1239 = vst.msk [vmem:[%s362 + $0x20] sm:$0xff] %vm1218, 0.0
        %1240 = vst.msk [vmem:[%s362 + $0x28] sm:$0xff] %vm1218, 0.0
        %1241 = vst.msk [vmem:[%s362 + $0x30] sm:$0xff] %vm1218, 0.0
        %1242 = vst.msk [vmem:[%s362 + $0x38] sm:$0xff] %vm1218, 0.0
        %1243 = vst.msk [vmem:[%s362 + $0x40] sm:$0xff] %vm1218, 0.0
        %1244 = vst.msk [vmem:[%s362 + $0x48] sm:$0xff] %vm1218, 0.0
        %1245 = vst.msk [vmem:[%s362 + $0x50] sm:$0xff] %vm1218, 0.0
        %1246 = vst.msk [vmem:[%s362 + $0x58] sm:$0xff] %vm1218, 0.0
        %1247 = vst.msk [vmem:[%s362 + $0x60] sm:$0xff] %vm1218, 0.0
        %1248 = vst.msk [vmem:[%s362 + $0x68] sm:$0xff] %vm1218, 0.0
        %1249 = vst.msk [vmem:[%s362 + $0x70] sm:$0xff] %vm1218, 0.0
        %1250 = vst.msk [vmem:[%s362 + $0x78] sm:$0xff] %vm1218, 0.0
      $region44: #{pointgen_forward.5} parent=39 // pred_fallthru
        _
      %v1251 = vld [vmem:[%s355] sm:$0xff]
      %v1252 = vld [vmem:[%s355 + $0x8] sm:$0xff]
      %v1253 = vld [vmem:[%s355 + $0x10] sm:$0xff]
      %v1254 = vld [vmem:[%s355 + $0x18] sm:$0xff]
      %v1255 = vld [vmem:[%s355 + $0x20] sm:$0xff]
      %v1256 = vld [vmem:[%s355 + $0x28] sm:$0xff]
      %v1257 = vld [vmem:[%s355 + $0x30] sm:$0xff]
      %v1258 = vld [vmem:[%s355 + $0x38] sm:$0xff]
      %v1259 = vld [vmem:[%s355 + $0x40] sm:$0xff]
      %v1260 = vld [vmem:[%s355 + $0x48] sm:$0xff]
      %v1261 = vld [vmem:[%s355 + $0x50] sm:$0xff]
      %v1262 = vld [vmem:[%s355 + $0x58] sm:$0xff]
      %v1263 = vld [vmem:[%s355 + $0x60] sm:$0xff]
      %v1264 = vld [vmem:[%s355 + $0x68] sm:$0xff]
      %v1265 = vld [vmem:[%s355 + $0x70] sm:$0xff]
      %v1266 = vld [vmem:[%s355 + $0x78] sm:$0xff]
      %vm1267 = vcmask 130048
      %v1268 = vsel %vm1267, %v1152, 0.0
      %1269 = vadd.xlane.f32.xlu0 %v1268
      %v1270 = vpop.xlane.xlu0 %1269
      %v1271 = vsel %vm1267, %v1155, 0.0
      %1272 = vadd.xlane.f32.xlu0 %v1271
      %v1273 = vpop.xlane.xlu0 %1272
      %v1274 = vsel %vm1267, %v1160, 0.0
      %1275 = vadd.xlane.f32.xlu0 %v1274
      %v1276 = vpop.xlane.xlu0 %1275
      %v1277 = vsel %vm1267, %v1163, 0.0
      %1278 = vadd.xlane.f32.xlu0 %v1277
      %v1279 = vpop.xlane.xlu0 %1278
      %v1280 = vsel %vm1267, %v1168, 0.0
      %1281 = vadd.xlane.f32.xlu0 %v1280
      %v1282 = vpop.xlane.xlu0 %1281
      %v1283 = vsel %vm1267, %v1171, 0.0
      %1284 = vadd.xlane.f32.xlu0 %v1283
      %v1285 = vpop.xlane.xlu0 %1284
      %v1286 = vsel %vm1267, %v1176, 0.0
      %1287 = vadd.xlane.f32.xlu0 %v1286
      %v1288 = vpop.xlane.xlu0 %1287
      %v1289 = vsel %vm1267, %v1179, 0.0
      %1290 = vadd.xlane.f32.xlu0 %v1289
      %v1291 = vpop.xlane.xlu0 %1290
      %v1292 = vsel %vm1267, %v1184, 0.0
      %1293 = vadd.xlane.f32.xlu0 %v1292
      %v1294 = vpop.xlane.xlu0 %1293
      %v1295 = vsel %vm1267, %v1187, 0.0
      %1296 = vadd.xlane.f32.xlu0 %v1295
      %v1297 = vpop.xlane.xlu0 %1296
      %v1298 = vsel %vm1267, %v1192, 0.0
      %1299 = vadd.xlane.f32.xlu0 %v1298
      %v1300 = vpop.xlane.xlu0 %1299
      %v1301 = vsel %vm1267, %v1195, 0.0
      %1302 = vadd.xlane.f32.xlu0 %v1301
      %v1303 = vpop.xlane.xlu0 %1302
      %v1304 = vsel %vm1267, %v1200, 0.0
      %1305 = vadd.xlane.f32.xlu0 %v1304
      %v1306 = vpop.xlane.xlu0 %1305
      %v1307 = vsel %vm1267, %v1203, 0.0
      %1308 = vadd.xlane.f32.xlu0 %v1307
      %v1309 = vpop.xlane.xlu0 %1308
      %v1310 = vsel %vm1267, %v1208, 0.0
      %1311 = vadd.xlane.f32.xlu0 %v1310
      %v1312 = vpop.xlane.xlu0 %1311
      %v1313 = vsel %vm1267, %v1211, 0.0
      %1314 = vadd.xlane.f32.xlu0 %v1313
      %v1315 = vpop.xlane.xlu0 %1314
      %v1316 = vadd.f32 %v1251, %v1270
      %v1317 = vadd.f32 %v1252, %v1273
      %v1318 = vadd.f32 %v1253, %v1276
      %v1319 = vadd.f32 %v1254, %v1279
      %v1320 = vadd.f32 %v1255, %v1282
      %v1321 = vadd.f32 %v1256, %v1285
      %v1322 = vadd.f32 %v1257, %v1288
      %v1323 = vadd.f32 %v1258, %v1291
      %v1324 = vadd.f32 %v1259, %v1294
      %v1325 = vadd.f32 %v1260, %v1297
      %v1326 = vadd.f32 %v1261, %v1300
      %v1327 = vadd.f32 %v1262, %v1303
      %v1328 = vadd.f32 %v1263, %v1306
      %v1329 = vadd.f32 %v1264, %v1309
      %v1330 = vadd.f32 %v1265, %v1312
      %v1331 = vadd.f32 %v1266, %v1315
      %vm1332 = vcmask 7168
      %1333 = vst.msk [vmem:[%s355] sm:$0xff] %vm1332, %v1316
      %1334 = vst.msk [vmem:[%s355 + $0x8] sm:$0xff] %vm1332, %v1317
      %1335 = vst.msk [vmem:[%s355 + $0x10] sm:$0xff] %vm1332, %v1318
      %1336 = vst.msk [vmem:[%s355 + $0x18] sm:$0xff] %vm1332, %v1319
      %1337 = vst.msk [vmem:[%s355 + $0x20] sm:$0xff] %vm1332, %v1320
      %1338 = vst.msk [vmem:[%s355 + $0x28] sm:$0xff] %vm1332, %v1321
      %1339 = vst.msk [vmem:[%s355 + $0x30] sm:$0xff] %vm1332, %v1322
      %1340 = vst.msk [vmem:[%s355 + $0x38] sm:$0xff] %vm1332, %v1323
      %1341 = vst.msk [vmem:[%s355 + $0x40] sm:$0xff] %vm1332, %v1324
      %1342 = vst.msk [vmem:[%s355 + $0x48] sm:$0xff] %vm1332, %v1325
      %1343 = vst.msk [vmem:[%s355 + $0x50] sm:$0xff] %vm1332, %v1326
      %1344 = vst.msk [vmem:[%s355 + $0x58] sm:$0xff] %vm1332, %v1327
      %1345 = vst.msk [vmem:[%s355 + $0x60] sm:$0xff] %vm1332, %v1328
      %1346 = vst.msk [vmem:[%s355 + $0x68] sm:$0xff] %vm1332, %v1329
      %1347 = vst.msk [vmem:[%s355 + $0x70] sm:$0xff] %vm1332, %v1330
      %1348 = vst.msk [vmem:[%s355 + $0x78] sm:$0xff] %vm1332, %v1331
      %v1349 = vld [vmem:[%s362] sm:$0xff]
      %v1350 = vld [vmem:[%s362 + $0x8] sm:$0xff]
      %v1351 = vld [vmem:[%s362 + $0x10] sm:$0xff]
      %v1352 = vld [vmem:[%s362 + $0x18] sm:$0xff]
      %v1353 = vld [vmem:[%s362 + $0x20] sm:$0xff]
      %v1354 = vld [vmem:[%s362 + $0x28] sm:$0xff]
      %v1355 = vld [vmem:[%s362 + $0x30] sm:$0xff]
      %v1356 = vld [vmem:[%s362 + $0x38] sm:$0xff]
      %v1357 = vld [vmem:[%s362 + $0x40] sm:$0xff]
      %v1358 = vld [vmem:[%s362 + $0x48] sm:$0xff]
      %v1359 = vld [vmem:[%s362 + $0x50] sm:$0xff]
      %v1360 = vld [vmem:[%s362 + $0x58] sm:$0xff]
      %v1361 = vld [vmem:[%s362 + $0x60] sm:$0xff]
      %v1362 = vld [vmem:[%s362 + $0x68] sm:$0xff]
      %v1363 = vld [vmem:[%s362 + $0x70] sm:$0xff]
      %v1364 = vld [vmem:[%s362 + $0x78] sm:$0xff]
      %v1365 = vmul.f32 %v1152, %v1152
      %v1366 = vmul.f32 %v1155, %v1155
      %v1367 = vmul.f32 %v1160, %v1160
      %v1368 = vmul.f32 %v1163, %v1163
      %v1369 = vmul.f32 %v1168, %v1168
      %v1370 = vmul.f32 %v1171, %v1171
      %v1371 = vmul.f32 %v1176, %v1176
      %v1372 = vmul.f32 %v1179, %v1179
      %v1373 = vmul.f32 %v1184, %v1184
      %v1374 = vmul.f32 %v1187, %v1187
      %v1375 = vmul.f32 %v1192, %v1192
      %v1376 = vmul.f32 %v1195, %v1195
      %v1377 = vmul.f32 %v1200, %v1200
      %v1378 = vmul.f32 %v1203, %v1203
      %v1379 = vmul.f32 %v1208, %v1208
      %v1380 = vmul.f32 %v1211, %v1211
      %v1381 = vsel %vm1267, %v1365, 0.0
      %1382 = vadd.xlane.f32.xlu0 %v1381
      %v1383 = vpop.xlane.xlu0 %1382
      %v1384 = vsel %vm1267, %v1366, 0.0
      %1385 = vadd.xlane.f32.xlu0 %v1384
      %v1386 = vpop.xlane.xlu0 %1385
      %v1387 = vsel %vm1267, %v1367, 0.0
      %1388 = vadd.xlane.f32.xlu0 %v1387
      %v1389 = vpop.xlane.xlu0 %1388
      %v1390 = vsel %vm1267, %v1368, 0.0
      %1391 = vadd.xlane.f32.xlu0 %v1390
      %v1392 = vpop.xlane.xlu0 %1391
      %v1393 = vsel %vm1267, %v1369, 0.0
      %1394 = vadd.xlane.f32.xlu0 %v1393
      %v1395 = vpop.xlane.xlu0 %1394
      %v1396 = vsel %vm1267, %v1370, 0.0
      %1397 = vadd.xlane.f32.xlu0 %v1396
      %v1398 = vpop.xlane.xlu0 %1397
      %v1399 = vsel %vm1267, %v1371, 0.0
      %1400 = vadd.xlane.f32.xlu0 %v1399
      %v1401 = vpop.xlane.xlu0 %1400
      %v1402 = vsel %vm1267, %v1372, 0.0
      %1403 = vadd.xlane.f32.xlu0 %v1402
      %v1404 = vpop.xlane.xlu0 %1403
      %v1405 = vsel %vm1267, %v1373, 0.0
      %1406 = vadd.xlane.f32.xlu0 %v1405
      %v1407 = vpop.xlane.xlu0 %1406
      %v1408 = vsel %vm1267, %v1374, 0.0
      %1409 = vadd.xlane.f32.xlu0 %v1408
      %v1410 = vpop.xlane.xlu0 %1409
      %v1411 = vsel %vm1267, %v1375, 0.0
      %1412 = vadd.xlane.f32.xlu0 %v1411
      %v1413 = vpop.xlane.xlu0 %1412
      %v1414 = vsel %vm1267, %v1376, 0.0
      %1415 = vadd.xlane.f32.xlu0 %v1414
      %v1416 = vpop.xlane.xlu0 %1415
      %v1417 = vsel %vm1267, %v1377, 0.0
      %1418 = vadd.xlane.f32.xlu0 %v1417
      %v1419 = vpop.xlane.xlu0 %1418
      %v1420 = vsel %vm1267, %v1378, 0.0
      %1421 = vadd.xlane.f32.xlu0 %v1420
      %v1422 = vpop.xlane.xlu0 %1421
      %v1423 = vsel %vm1267, %v1379, 0.0
      %1424 = vadd.xlane.f32.xlu0 %v1423
      %v1425 = vpop.xlane.xlu0 %1424
      %v1426 = vsel %vm1267, %v1380, 0.0
      %1427 = vadd.xlane.f32.xlu0 %v1426
      %v1428 = vpop.xlane.xlu0 %1427
      %v1429 = vadd.f32 %v1349, %v1383
      %v1430 = vadd.f32 %v1350, %v1386
      %v1431 = vadd.f32 %v1351, %v1389
      %v1432 = vadd.f32 %v1352, %v1392
      %v1433 = vadd.f32 %v1353, %v1395
      %v1434 = vadd.f32 %v1354, %v1398
      %v1435 = vadd.f32 %v1355, %v1401
      %v1436 = vadd.f32 %v1356, %v1404
      %v1437 = vadd.f32 %v1357, %v1407
      %v1438 = vadd.f32 %v1358, %v1410
      %v1439 = vadd.f32 %v1359, %v1413
      %v1440 = vadd.f32 %v1360, %v1416
      %v1441 = vadd.f32 %v1361, %v1419
      %v1442 = vadd.f32 %v1362, %v1422
      %v1443 = vadd.f32 %v1363, %v1425
      %v1444 = vadd.f32 %v1364, %v1428
      %1445 = vst.msk [vmem:[%s362] sm:$0xff] %vm1332, %v1429
      %1446 = vst.msk [vmem:[%s362 + $0x8] sm:$0xff] %vm1332, %v1430
      %1447 = vst.msk [vmem:[%s362 + $0x10] sm:$0xff] %vm1332, %v1431
      %1448 = vst.msk [vmem:[%s362 + $0x18] sm:$0xff] %vm1332, %v1432
      %1449 = vst.msk [vmem:[%s362 + $0x20] sm:$0xff] %vm1332, %v1433
      %1450 = vst.msk [vmem:[%s362 + $0x28] sm:$0xff] %vm1332, %v1434
      %1451 = vst.msk [vmem:[%s362 + $0x30] sm:$0xff] %vm1332, %v1435
      %1452 = vst.msk [vmem:[%s362 + $0x38] sm:$0xff] %vm1332, %v1436
      %1453 = vst.msk [vmem:[%s362 + $0x40] sm:$0xff] %vm1332, %v1437
      %1454 = vst.msk [vmem:[%s362 + $0x48] sm:$0xff] %vm1332, %v1438
      %1455 = vst.msk [vmem:[%s362 + $0x50] sm:$0xff] %vm1332, %v1439
      %1456 = vst.msk [vmem:[%s362 + $0x58] sm:$0xff] %vm1332, %v1440
      %1457 = vst.msk [vmem:[%s362 + $0x60] sm:$0xff] %vm1332, %v1441
      %1458 = vst.msk [vmem:[%s362 + $0x68] sm:$0xff] %vm1332, %v1442
      %1459 = vst.msk [vmem:[%s362 + $0x70] sm:$0xff] %vm1332, %v1443
      %1460 = vst.msk [vmem:[%s362 + $0x78] sm:$0xff] %vm1332, %v1444
      %v1461 = vpack.c.bf16 %v1155, %v1152
      %v1462 = vpack.c.bf16 %v1163, %v1160
      %v1463 = vpack.c.bf16 %v1171, %v1168
      %v1464 = vpack.c.bf16 %v1179, %v1176
      %v1465 = vpack.c.bf16 %v1187, %v1184
      %v1466 = vpack.c.bf16 %v1195, %v1192
      %v1467 = vpack.c.bf16 %v1203, %v1200
      %v1468 = vpack.c.bf16 %v1211, %v1208
      %v1477 = vunpack.c.l.b16 %v1461
      %v1478 = vunpack.c.h.b16 %v1461
      %v1479 = vunpack.c.l.b16 %v1462
      %v1480 = vunpack.c.h.b16 %v1462
      %v1481 = vunpack.c.l.b16 %v1463
      %v1482 = vunpack.c.h.b16 %v1463
      %v1483 = vunpack.c.l.b16 %v1464
      %v1484 = vunpack.c.h.b16 %v1464
      %v1485 = vunpack.c.l.b16 %v1465
      %v1486 = vunpack.c.h.b16 %v1465
      %v1487 = vunpack.c.l.b16 %v1466
      %v1488 = vunpack.c.h.b16 %v1466
      %v1489 = vunpack.c.l.b16 %v1467
      %v1490 = vunpack.c.h.b16 %v1467
      %v1491 = vunpack.c.l.b16 %v1468
      %v1492 = vunpack.c.h.b16 %v1468
      %v1493 = vpack.c.b16 %v1477, %v1477
      %v1494 = vpack.c.b16 %v1478, %v1478
      %v1495 = vpack.c.b16 %v1479, %v1479
      %v1496 = vpack.c.b16 %v1480, %v1480
      %v1497 = vpack.c.b16 %v1481, %v1481
      %v1498 = vpack.c.b16 %v1482, %v1482
      %v1499 = vpack.c.b16 %v1483, %v1483
      %v1500 = vpack.c.b16 %v1484, %v1484
      %v1501 = vpack.c.b16 %v1485, %v1485
      %v1502 = vpack.c.b16 %v1486, %v1486
      %v1503 = vpack.c.b16 %v1487, %v1487
      %v1504 = vpack.c.b16 %v1488, %v1488
      %v1505 = vpack.c.b16 %v1489, %v1489
      %v1506 = vpack.c.b16 %v1490, %v1490
      %v1507 = vpack.c.b16 %v1491, %v1491
      %v1508 = vpack.c.b16 %v1492, %v1492
      %vm1525 = vcmask 125952
      %1526 = vst.msk [vmem:[%s348] sm:$0xf] %vm1525, %v1493
      %1527 = vst.msk [vmem:[%s348 + $0x4] sm:$0xf] %vm1525, %v1494
      %1528 = vst.msk [vmem:[%s348 + $0x8] sm:$0xf] %vm1525, %v1495
      %1529 = vst.msk [vmem:[%s348 + $0xc] sm:$0xf] %vm1525, %v1496
      %1530 = vst.msk [vmem:[%s348 + $0x10] sm:$0xf] %vm1525, %v1497
      %1531 = vst.msk [vmem:[%s348 + $0x14] sm:$0xf] %vm1525, %v1498
      %1532 = vst.msk [vmem:[%s348 + $0x18] sm:$0xf] %vm1525, %v1499
      %1533 = vst.msk [vmem:[%s348 + $0x1c] sm:$0xf] %vm1525, %v1500
      %1534 = vst.msk [vmem:[%s348 + $0x20] sm:$0xf] %vm1525, %v1501
      %1535 = vst.msk [vmem:[%s348 + $0x24] sm:$0xf] %vm1525, %v1502
      %1536 = vst.msk [vmem:[%s348 + $0x28] sm:$0xf] %vm1525, %v1503
      %1537 = vst.msk [vmem:[%s348 + $0x2c] sm:$0xf] %vm1525, %v1504
      %1538 = vst.msk [vmem:[%s348 + $0x30] sm:$0xf] %vm1525, %v1505
      %1539 = vst.msk [vmem:[%s348 + $0x34] sm:$0xf] %vm1525, %v1506
      %1540 = vst.msk [vmem:[%s348 + $0x38] sm:$0xf] %vm1525, %v1507
      %1541 = vst.msk [vmem:[%s348 + $0x3c] sm:$0xf] %vm1525, %v1508
      %s1542 = sadd.s32 %s25, %s26
      %p1543 = scmp.lt.s32.totalorder %s24, 1
      %s1544 = scalar_select %p1543, %s24, 1
      %p1545 = scmp.lt.s32.totalorder %s1542, 0
      %s1546 = scalar_select %p1545, %s1542, 0
      %s1547 = smul.addr %s1544, 16
      %s1548 = sadd.s32 %s1546, %s1547
      %s1549 = smul.addr %s1548, 4
      %s1550 = scalar_lea.vmem %s5, %s1549
      %s1551 = sadd.s32 %s24, %s25
      %p1552 = scmp.lt.s32.totalorder %s1551, 1
      %s1553 = scalar_select %p1552, %s1551, 1
      %s1554 = smul.addr %s1553, 16
      %s1555 = smul.addr %s1554, 8
      %s1556 = scalar_lea.vmem %s6, %s1555
      %s1557 = sadd.s32 %s24, %s25
      %p1558 = scmp.lt.s32.totalorder %s1557, 1
      %s1559 = scalar_select %p1558, %s1557, 1
      %s1560 = smul.addr %s1559, 16
      %s1561 = smul.addr %s1560, 8
      %s1562 = scalar_lea.vmem %s7, %s1561
      // Predicated region
      $region45: #{pointgen_forward.5} parent=39 // pred_check
        %p1563 = pneg %p174
      $region46: #{pointgen_forward.5} parent=39 // pred_check_branch
        %1565 = sbr.rel (%p1563) target = $region48
      $region47: #{pointgen_forward.5} parent=39 // pred_region
        %s1566 = sadd.s32 %s25, %s26
      $region48: #{pointgen_forward.5} parent=39 // pred_fallthru
        _
      // Predicated region
      $region49: #{pointgen_forward.5} parent=39 // pred_check
        %p1567 = pneg %p202
      $region50: #{pointgen_forward.5} parent=39 // pred_check_branch
        %1569 = sbr.rel (%p1567) target = $region52
      $region51: #{pointgen_forward.5} parent=39 // pred_region
        %s1570 = sadd.s32 %s24, %s25
      $region52: #{pointgen_forward.5} parent=39 // pred_fallthru
        _
      // Predicated region
      $region53: #{pointgen_forward.5} parent=39 // pred_check
        %p1571 = pneg %p230
      $region54: #{pointgen_forward.5} parent=39 // pred_check_branch
        %1573 = sbr.rel (%p1571) target = $region56
      $region55: #{pointgen_forward.5} parent=39 // pred_region
        %s1574 = sadd.s32 %s24, %s25
      $region56: #{pointgen_forward.5} parent=39 // pred_fallthru
        _
    $region40: #{pointgen_forward.5} parent=5 // pred_fallthru
      _
    %p1575 = scmp.le.s32.totalorder 2, %s14
    // Predicated region
    $region57: #{pointgen_forward.5} parent=5 // pred_check
      %p1576 = pneg %p1575
    $region58: #{pointgen_forward.5} parent=5 // pred_check_branch
      %1578 = sbr.rel (%p1576) target = $region60
    $region59: #{pointgen_forward.5} parent=5 // pred_region
      %s1579 = ssub.s32 %s14, 2
      // Predicated region
      $region61: #{pointgen_forward.5} parent=59 // pred_check
        %p1580 = pneg %p180
      $region62: #{pointgen_forward.5} parent=59 // pred_check_branch
        %1582 = sbr.rel (%p1580) target = $region64
      $region63: #{pointgen_forward.5} parent=59 // pred_region
        %s1583 = sadd.s32 %s28, %s29
        %p1584 = scmp.lt.s32.totalorder %s27, 1
        %s1585 = scalar_select %p1584, %s27, 1
        %p1586 = scmp.lt.s32.totalorder %s1583, 0
        %s1587 = scalar_select %p1586, %s1583, 0
        %s1588 = smul.addr %s1585, 16
        %s1589 = sadd.s32 %s1587, %s1588
        %s1590 = smul.addr %s1589, 4
        %s1591 = scalar_lea.vmem %s5, %s1590
      $region64: #{pointgen_forward.5} parent=59 // pred_fallthru
        _
      // Predicated region
      $region65: #{pointgen_forward.5} parent=59 // pred_check
        %p1592 = pneg %p208
      $region66: #{pointgen_forward.5} parent=59 // pred_check_branch
        %1594 = sbr.rel (%p1592) target = $region68
      $region67: #{pointgen_forward.5} parent=59 // pred_region
        %s1595 = sadd.s32 %s27, %s28
        %p1596 = scmp.lt.s32.totalorder %s1595, 1
        %s1597 = scalar_select %p1596, %s1595, 1
        %s1598 = smul.addr %s1597, 16
        %s1599 = smul.addr %s1598, 8
        %s1600 = scalar_lea.vmem %s6, %s1599
      $region68: #{pointgen_forward.5} parent=59 // pred_fallthru
        _
      // Predicated region
      $region69: #{pointgen_forward.5} parent=59 // pred_check
        %p1601 = pneg %p236
      $region70: #{pointgen_forward.5} parent=59 // pred_check_branch
        %1603 = sbr.rel (%p1601) target = $region72
      $region71: #{pointgen_forward.5} parent=59 // pred_region
        %s1604 = sadd.s32 %s27, %s28
        %p1605 = scmp.lt.s32.totalorder %s1604, 1
        %s1606 = scalar_select %p1605, %s1604, 1
        %s1607 = smul.addr %s1606, 16
        %s1608 = smul.addr %s1607, 8
        %s1609 = scalar_lea.vmem %s7, %s1608
      $region72: #{pointgen_forward.5} parent=59 // pred_fallthru
        _
    $region60: #{pointgen_forward.5} parent=5 // pred_fallthru
      _
  $region6: #{pointgen_forward.5} parent=0 // loop_footer
    %s18 = sadd.s32 1, %s14
  $region7: #{pointgen_forward.5} parent=0 // loop_footer_branch
    %13 = sbr.rel target = $region3
  $region8: #{pointgen_forward.5} parent=0 // loop_exit
    _

</llo_original>
